<compile_context>
chip_gen: v7x
topology: tpu7x:2x2x1
jax: 0.10.0
libtpu: 0.0.40
codegen_flags: <defaults>
</compile_context>

<pallas_src>
import functools

import jax
import jax.numpy as jnp
from jax import lax
from jax.experimental import pallas as pl
from jax.experimental.pallas import tpu as pltpu


# --------------------------- shared conv helper (lane-dense) ---------------------------
def _conv_taps(a, w_ref, col, *, W, K, HW):
    """KxK SAME conv as K*K accumulated shifted matmuls in (C, H*W) layout.

    a      : (Cin, HW)  activation, MXU dtype, H*W flattened on the lane axis.
    w_ref  : (K*K, Cout, Cin) weight ref, MXU dtype.
    col    : (1, HW) int32, col[0, q] = q % W (precomputed in the wrapper).
    returns: (Cout, HW) float32 accumulator.

    Tap (dy, dx) contributes w[dy,dx] @ shift(a, (dy-p)*W + (dx-p)).  The flat lane
    shift with zero fill handles the row halo exactly (out-of-image rows fall outside
    the [0, HW) window); column wrap-around is killed with a lane mask.
    """
    p = K // 2
    Cin = a.shape[0]
    Cout = w_ref.shape[1]

    # Column-halo masks, one per horizontal offset (hoisted out of the tap loop).
    masks = {}
    for dx in range(K):
        d = dx - p
        if d != 0:
            masks[d] = (col + d >= 0) & (col + d < W)          # (1, HW) bool

    acc = jnp.zeros((Cout, HW), jnp.float32)
    for dy in range(K):
        for dx in range(K):
            s = (dy - p) * W + (dx - p)
            if s == 0:
                shifted = a
            elif s > 0:
                shifted = jnp.concatenate(
                    [a[:, s:], jnp.zeros((Cin, s), a.dtype)], axis=1)
            else:
                shifted = jnp.concatenate(
                    [jnp.zeros((Cin, -s), a.dtype), a[:, :s]], axis=1)
            d = dx - p
            if d != 0:
                shifted = jnp.where(masks[d], shifted, jnp.zeros_like(shifted))
            acc = acc + jnp.dot(w_ref[dy * K + dx], shifted,
                                preferred_element_type=jnp.float32)
    return acc


# ----------------------- kernel 1: conv1 -> per-image BN partials ----------------------
def _conv1_stats_kernel(col_ref, x_ref, w1_ref, stats_ref, *, W, K, HW):
    # conv1 WITHOUT its bias (training-mode BN's mean subtraction cancels it exactly).
    a = x_ref[0].astype(w1_ref.dtype)                       # (C, HW)
    acc = _conv_taps(a, w1_ref, col_ref[...], W=W, K=K, HW=HW)
    # Per-image BN partial statistics straight from the f32 accumulator (no concat).
    stats_ref[0, :, 0:1] = jnp.sum(acc, axis=1, keepdims=True)         # sum
    stats_ref[0, :, 1:2] = jnp.sum(acc * acc, axis=1, keepdims=True)   # sum of squares


# --------- kernel 2: conv1 (recomputed) -> BN -> ReLU -> conv2 -> +bias -> +x ----------
def _fused_resblock_kernel(col_ref, x_ref, w1_ref, scale_ref, shift_ref,
                           w2_ref, b2_ref, o_ref, *, W, K, HW):
    col = col_ref[...]
    xv = x_ref[0]                                            # (C, HW), read once
    a = xv.astype(w1_ref.dtype)
    # Recompute conv1 instead of a y1 HBM round trip (clear win in the mem-bound regime).
    acc1 = _conv_taps(a, w1_ref, col, W=W, K=K, HW=HW)       # (C, HW) f32
    # BN (precomputed scale/shift) + ReLU: f32 elementwise, lane-dense.
    z = jnp.maximum(acc1 * scale_ref[...] + shift_ref[...], 0.0)
    acc2 = _conv_taps(z.astype(w2_ref.dtype), w2_ref, col, W=W, K=K, HW=HW)
    # Fused bias + residual epilogue, single lane-dense store.
    o_ref[0] = (acc2 + b2_ref[...] + xv.astype(jnp.float32)).astype(o_ref.dtype)


# ------------------------------------- ResBlock ----------------------------------------
def res_block(x, params, eps=1e-5, mxu_dtype=jnp.bfloat16):
    """x: (N, C, H, W) NCHW (same as the torch module). Training-mode BatchNorm."""
    w1, gamma, beta, w2, b2 = (params[k] for k in ("w1", "gamma", "beta", "w2", "b2"))
    # params["b1"] is unused on purpose: BatchNorm's batch-mean subtraction cancels it.
    N, C, H, W = x.shape
    HW = H * W
    K = w1.shape[0]                                          # weights are HWIO
    KKC = K * K * C

    # Channel-major, spatially-flattened activations: H*W on the lane axis.
    xf = x.reshape(N, C, HW)

    # Weights as (K*K, Cout, Cin) so each tap is a (Cout,Cin) @ (Cin,HW) matmul.
    w1t = jnp.transpose(w1, (0, 1, 3, 2)).reshape(K * K, C, C).astype(mxu_dtype)
    w2t = jnp.transpose(w2, (0, 1, 3, 2)).reshape(K * K, C, C).astype(mxu_dtype)

    # Column index per flattened pixel (kernels only do int add/compare for halo masks).
    col_ids = (jnp.arange(HW, dtype=jnp.int32) % W).reshape(1, HW)

    itm = x.dtype.itemsize
    conv_flops = 2 * N * HW * KKC * C
    act_bytes = N * HW * C * itm
    w_bytes = KKC * C * jnp.dtype(mxu_dtype).itemsize

    # ---- kernel 1: conv1 -> per-image BN sum / sum-of-squares (y1 never hits HBM) ----
    part = pl.pallas_call(
        functools.partial(_conv1_stats_kernel, W=W, K=K, HW=HW),
        out_shape=jax.ShapeDtypeStruct((N, C, 2), jnp.float32),
        grid_spec=pltpu.PrefetchScalarGridSpec(
            num_scalar_prefetch=0,
            grid=(N,),
            in_specs=[pl.BlockSpec((1, HW), lambda n: (0, 0)),            # col ids
                      pl.BlockSpec((1, C, HW), lambda n: (n, 0, 0)),      # x
                      pl.BlockSpec((K * K, C, C), lambda n: (0, 0, 0))],  # w1
            out_specs=pl.BlockSpec((1, C, 2), lambda n: (n, 0, 0))),
        compiler_params=pltpu.CompilerParams(dimension_semantics=("parallel",)),
        cost_estimate=pl.CostEstimate(flops=conv_flops, transcendentals=0,
                                      bytes_accessed=act_bytes + w_bytes + N * C * 8),
    )(col_ids, xf, w1t)

    # Tiny cross-image reduction + BN scale/shift precompute (plain XLA).
    # NOTE: E[x^2]-E[x]^2 from f32 partials; fine at this scale, use shifted/Welford
    # partials for production N*H*W.
    stats = jnp.sum(part, axis=0)                            # (C, 2)
    cnt = jnp.float32(N * HW)
    mean = stats[:, 0] / cnt
    var = stats[:, 1] / cnt - mean * mean                    # biased var (BN training)
    scale = (gamma / jnp.sqrt(var + eps)).astype(jnp.float32).reshape(C, 1)
    shift = beta.astype(jnp.float32).reshape(C, 1) - mean.reshape(C, 1) * scale

    # ---- kernel 2: conv1 (recompute) + BN + ReLU + conv2 + bias + residual ----
    out = pl.pallas_call(
        functools.partial(_fused_resblock_kernel, W=W, K=K, HW=HW),
        out_shape=jax.ShapeDtypeStruct((N, C, HW), x.dtype),
        grid_spec=pltpu.PrefetchScalarGridSpec(
            num_scalar_prefetch=0,
            grid=(N,),
            in_specs=[pl.BlockSpec((1, HW), lambda n: (0, 0)),            # col ids
                      pl.BlockSpec((1, C, HW), lambda n: (n, 0, 0)),      # x
                      pl.BlockSpec((K * K, C, C), lambda n: (0, 0, 0)),   # w1
                      pl.BlockSpec((C, 1), lambda n: (0, 0)),             # BN scale
                      pl.BlockSpec((C, 1), lambda n: (0, 0)),             # BN shift
                      pl.BlockSpec((K * K, C, C), lambda n: (0, 0, 0)),   # w2
                      pl.BlockSpec((C, 1), lambda n: (0, 0))],            # b2
            out_specs=pl.BlockSpec((1, C, HW), lambda n: (n, 0, 0))),
        compiler_params=pltpu.CompilerParams(dimension_semantics=("parallel",)),
        cost_estimate=pl.CostEstimate(flops=2 * conv_flops + 8 * N * HW * C,
                                      transcendentals=0,
                                      bytes_accessed=2 * act_bytes + 2 * w_bytes + 4 * C * 4),
    )(col_ids, xf, w1t, scale, shift, w2t, b2.astype(jnp.float32).reshape(C, 1))
    return out.reshape(N, C, H, W)


# ------------------------------------- reference ---------------------------------------
def res_block_ref(x, params, eps=1e-5):
    dn = ("NCHW", "HWIO", "NCHW")
    y1 = lax.conv_general_dilated(x, params["w1"], (1, 1), "SAME",
                                  dimension_numbers=dn,
                                  precision=lax.Precision.HIGHEST)
    y1 = y1 + params["b1"].reshape(1, -1, 1, 1)
    mean = jnp.mean(y1, axis=(0, 2, 3), keepdims=True)
    var = jnp.mean((y1 - mean) ** 2, axis=(0, 2, 3), keepdims=True)
    z = (params["gamma"].reshape(1, -1, 1, 1) * (y1 - mean) / jnp.sqrt(var + eps)
         + params["beta"].reshape(1, -1, 1, 1))
    z = jnp.maximum(z, 0.0)
    y2 = lax.conv_general_dilated(z, params["w2"], (1, 1), "SAME",
                                  dimension_numbers=dn,
                                  precision=lax.Precision.HIGHEST)
    y2 = y2 + params["b2"].reshape(1, -1, 1, 1)
    return x + y2


if __name__ == "__main__":
    N, C, H, W, K = 2, 4, 16, 16, 3          # nf=4, ksize=3

    key = jax.random.PRNGKey(0)
    kx, k1, k2, k3, k4, k5, k6 = jax.random.split(key, 7)
    x = jax.random.normal(kx, (N, C, H, W), jnp.float32)
    params = {
        "w1": 0.1 * jax.random.normal(k1, (K, K, C, C), jnp.float32),   # HWIO
        "b1": 0.05 * jax.random.normal(k2, (C,), jnp.float32),
        "gamma": 1.0 + 0.1 * jax.random.normal(k3, (C,), jnp.float32),
        "beta": 0.1 * jax.random.normal(k4, (C,), jnp.float32),
        "w2": 0.1 * jax.random.normal(k5, (K, K, C, C), jnp.float32),   # HWIO
        "b2": 0.05 * jax.random.normal(k6, (C,), jnp.float32),
    }

    ref = res_block_ref(x, params)

    # Strict correctness check with f32 MXU operands (identical code path, dtype only).
    out_f32 = jax.block_until_ready(
        jax.jit(functools.partial(res_block, mxu_dtype=jnp.float32))(x, params))
    assert out_f32.shape == (N, C, H, W)
    assert jnp.allclose(out_f32, ref, atol=1e-4, rtol=1e-4), (
        f"f32 max abs err {jnp.max(jnp.abs(out_f32 - ref))}")

    # Production path: bf16 MXU operands, f32 accumulation and f32 BN/epilogue math.
    out_bf16 = jax.block_until_ready(jax.jit(res_block)(x, params))
    assert out_bf16.shape == (N, C, H, W)
    assert jnp.allclose(out_bf16, ref, atol=1e-1, rtol=1e-1), (
        f"bf16 max abs err {jnp.max(jnp.abs(out_bf16 - ref))}")

    print("KERNEL_OK")
</pallas_src>

<mosaic_0001>
module attributes {stable_mosaic.version = 11 : i64} {
  func.func @_conv1_stats_kernel(%arg0: i32, %arg1: memref<1x256xi32, #tpu.memory_space<vmem>>, %arg2: memref<1x4x256xf32, #tpu.memory_space<vmem>>, %arg3: memref<9x4x4xf32, #tpu.memory_space<vmem>>, %arg4: memref<1x4x2xf32, #tpu.memory_space<vmem>>) attributes {dimension_semantics = [#tpu.dimension_semantics<parallel>], iteration_bounds = array<i64: 2>, scalar_prefetch = 0 : i64, scratch_operands = 0 : i64, tpu.core_type = #tpu.core_type<tc>, window_params = [{pipeline_mode = #tpu.pipeline_mode<synchronous>, transform_indices = @transform_0, window_bounds = array<i64: 1, 256>}, {transform_indices = @transform_1, window_bounds = array<i64: 1, 4, 256>}, {pipeline_mode = #tpu.pipeline_mode<synchronous>, transform_indices = @transform_2, window_bounds = array<i64: 9, 4, 4>}, {transform_indices = @transform_3, window_bounds = array<i64: 1, 4, 2>}]} {
    %c0 = arith.constant 0 : index
    %c0_0 = arith.constant 0 : index
    %c0_1 = arith.constant 0 : index
    %0 = vector.load %arg2[%c0, %c0_0, %c0_1] : memref<1x4x256xf32, #tpu.memory_space<vmem>>, vector<1x4x256xf32>
    %1 = vector.shape_cast %0 : vector<1x4x256xf32> to vector<4x256xf32>
    %c0_2 = arith.constant 0 : index
    %c0_3 = arith.constant 0 : index
    %2 = vector.load %arg1[%c0_2, %c0_3] : memref<1x256xi32, #tpu.memory_space<vmem>>, vector<1x256xi32>
    %c-1_i32 = arith.constant -1 : i32
    %3 = vector.broadcast %c-1_i32 : i32 to vector<1x256xi32>
    %4 = arith.addi %2, %3 : vector<1x256xi32>
    %c0_i32 = arith.constant 0 : i32
    %5 = vector.broadcast %c0_i32 : i32 to vector<1x256xi32>
    %6 = arith.cmpi sge, %4, %5 : vector<1x256xi32>
    %c-1_i32_4 = arith.constant -1 : i32
    %7 = vector.broadcast %c-1_i32_4 : i32 to vector<1x256xi32>
    %8 = arith.addi %2, %7 : vector<1x256xi32>
    %c16_i32 = arith.constant 16 : i32
    %9 = vector.broadcast %c16_i32 : i32 to vector<1x256xi32>
    %10 = arith.cmpi slt, %8, %9 : vector<1x256xi32>
    %11 = arith.andi %6, %10 : vector<1x256xi1>
    %c1_i32 = arith.constant 1 : i32
    %12 = vector.broadcast %c1_i32 : i32 to vector<1x256xi32>
    %13 = arith.addi %2, %12 : vector<1x256xi32>
    %c0_i32_5 = arith.constant 0 : i32
    %14 = vector.broadcast %c0_i32_5 : i32 to vector<1x256xi32>
    %15 = arith.cmpi sge, %13, %14 : vector<1x256xi32>
    %c1_i32_6 = arith.constant 1 : i32
    %16 = vector.broadcast %c1_i32_6 : i32 to vector<1x256xi32>
    %17 = arith.addi %2, %16 : vector<1x256xi32>
    %c16_i32_7 = arith.constant 16 : i32
    %18 = vector.broadcast %c16_i32_7 : i32 to vector<1x256xi32>
    %19 = arith.cmpi slt, %17, %18 : vector<1x256xi32>
    %20 = arith.andi %15, %19 : vector<1x256xi1>
    %cst = arith.constant 0.000000e+00 : f32
    %21 = vector.broadcast %cst : f32 to vector<4x256xf32>
    %cst_8 = arith.constant 0.000000e+00 : f32
    %22 = vector.broadcast %cst_8 : f32 to vector<4x17xf32>
    %23 = vector.extract_strided_slice %1 {offsets = [0, 0], sizes = [4, 239], strides = [1, 1]} : vector<4x256xf32> to vector<4x239xf32>
    %24 = tpu.concatenate %22, %23 in 1 : vector<4x17xf32>, vector<4x239xf32> -> vector<4x256xf32>
    %cst_9 = arith.constant 0.000000e+00 : f32
    %25 = vector.broadcast %cst_9 : f32 to vector<4x256xf32>
    %26 = vector.shape_cast %11 : vector<1x256xi1> to vector<1x256xi1>
    %27 = vector.broadcast %26 : vector<1x256xi1> to vector<4x256xi1>
    %28 = arith.select %27, %24, %25 : vector<4x256xi1>, vector<4x256xf32>
    %c0_10 = arith.constant 0 : index
    %c0_11 = arith.constant 0 : index
    %c0_12 = arith.constant 0 : index
    %29 = vector.load %arg3[%c0_10, %c0_11, %c0_12] : memref<9x4x4xf32, #tpu.memory_space<vmem>>, vector<1x4x4xf32>
    %30 = vector.shape_cast %29 : vector<1x4x4xf32> to vector<4x4xf32>
    %cst_13 = arith.constant dense<0.000000e+00> : vector<4x256xf32>
    %31 = tpu.matmul %30, %28, %cst_13 {dimension_numbers = #tpu.dot_dimension_numbers<[1], [0], [0], [1], [0, 0, 1, 1], [], []>} : vector<4x4xf32>, vector<4x256xf32>, vector<4x256xf32> -> vector<4x256xf32>
    %32 = arith.addf %21, %31 : vector<4x256xf32>
    %cst_14 = arith.constant 0.000000e+00 : f32
    %33 = vector.broadcast %cst_14 : f32 to vector<4x16xf32>
    %34 = vector.extract_strided_slice %1 {offsets = [0, 0], sizes = [4, 240], strides = [1, 1]} : vector<4x256xf32> to vector<4x240xf32>
    %35 = tpu.concatenate %33, %34 in 1 : vector<4x16xf32>, vector<4x240xf32> -> vector<4x256xf32>
    %c1 = arith.constant 1 : index
    %c0_15 = arith.constant 0 : index
    %c0_16 = arith.constant 0 : index
    %36 = vector.load %arg3[%c1, %c0_15, %c0_16] : memref<9x4x4xf32, #tpu.memory_space<vmem>>, vector<1x4x4xf32>
    %37 = vector.shape_cast %36 : vector<1x4x4xf32> to vector<4x4xf32>
    %cst_17 = arith.constant dense<0.000000e+00> : vector<4x256xf32>
    %38 = tpu.matmul %37, %35, %cst_17 {dimension_numbers = #tpu.dot_dimension_numbers<[1], [0], [0], [1], [0, 0, 1, 1], [], []>} : vector<4x4xf32>, vector<4x256xf32>, vector<4x256xf32> -> vector<4x256xf32>
    %39 = arith.addf %32, %38 : vector<4x256xf32>
    %cst_18 = arith.constant 0.000000e+00 : f32
    %40 = vector.broadcast %cst_18 : f32 to vector<4x15xf32>
    %41 = vector.extract_strided_slice %1 {offsets = [0, 0], sizes = [4, 241], strides = [1, 1]} : vector<4x256xf32> to vector<4x241xf32>
    %42 = tpu.concatenate %40, %41 in 1 : vector<4x15xf32>, vector<4x241xf32> -> vector<4x256xf32>
    %cst_19 = arith.constant 0.000000e+00 : f32
    %43 = vector.broadcast %cst_19 : f32 to vector<4x256xf32>
    %44 = vector.shape_cast %20 : vector<1x256xi1> to vector<1x256xi1>
    %45 = vector.broadcast %44 : vector<1x256xi1> to vector<4x256xi1>
    %46 = arith.select %45, %42, %43 : vector<4x256xi1>, vector<4x256xf32>
    %c2 = arith.constant 2 : index
    %c0_20 = arith.constant 0 : index
    %c0_21 = arith.constant 0 : index
    %47 = vector.load %arg3[%c2, %c0_20, %c0_21] : memref<9x4x4xf32, #tpu.memory_space<vmem>>, vector<1x4x4xf32>
    %48 = vector.shape_cast %47 : vector<1x4x4xf32> to vector<4x4xf32>
    %cst_22 = arith.constant dense<0.000000e+00> : vector<4x256xf32>
    %49 = tpu.matmul %48, %46, %cst_22 {dimension_numbers = #tpu.dot_dimension_numbers<[1], [0], [0], [1], [0, 0, 1, 1], [], []>} : vector<4x4xf32>, vector<4x256xf32>, vector<4x256xf32> -> vector<4x256xf32>
    %50 = arith.addf %39, %49 : vector<4x256xf32>
    %cst_23 = arith.constant 0.000000e+00 : f32
    %51 = vector.broadcast %cst_23 : f32 to vector<4x1xf32>
    %52 = vector.extract_strided_slice %1 {offsets = [0, 0], sizes = [4, 255], strides = [1, 1]} : vector<4x256xf32> to vector<4x255xf32>
    %53 = tpu.concatenate %51, %52 in 1 : vector<4x1xf32>, vector<4x255xf32> -> vector<4x256xf32>
    %cst_24 = arith.constant 0.000000e+00 : f32
    %54 = vector.broadcast %cst_24 : f32 to vector<4x256xf32>
    %55 = vector.shape_cast %11 : vector<1x256xi1> to vector<1x256xi1>
    %56 = vector.broadcast %55 : vector<1x256xi1> to vector<4x256xi1>
    %57 = arith.select %56, %53, %54 : vector<4x256xi1>, vector<4x256xf32>
    %c3 = arith.constant 3 : index
    %c0_25 = arith.constant 0 : index
    %c0_26 = arith.constant 0 : index
    %58 = vector.load %arg3[%c3, %c0_25, %c0_26] : memref<9x4x4xf32, #tpu.memory_space<vmem>>, vector<1x4x4xf32>
    %59 = vector.shape_cast %58 : vector<1x4x4xf32> to vector<4x4xf32>
    %cst_27 = arith.constant dense<0.000000e+00> : vector<4x256xf32>
    %60 = tpu.matmul %59, %57, %cst_27 {dimension_numbers = #tpu.dot_dimension_numbers<[1], [0], [0], [1], [0, 0, 1, 1], [], []>} : vector<4x4xf32>, vector<4x256xf32>, vector<4x256xf32> -> vector<4x256xf32>
    %61 = arith.addf %50, %60 : vector<4x256xf32>
    %c4 = arith.constant 4 : index
    %c0_28 = arith.constant 0 : index
    %c0_29 = arith.constant 0 : index
    %62 = vector.load %arg3[%c4, %c0_28, %c0_29] : memref<9x4x4xf32, #tpu.memory_space<vmem>>, vector<1x4x4xf32>
    %63 = vector.shape_cast %62 : vector<1x4x4xf32> to vector<4x4xf32>
    %cst_30 = arith.constant dense<0.000000e+00> : vector<4x256xf32>
    %64 = tpu.matmul %63, %1, %cst_30 {dimension_numbers = #tpu.dot_dimension_numbers<[1], [0], [0], [1], [0, 0, 1, 1], [], []>} : vector<4x4xf32>, vector<4x256xf32>, vector<4x256xf32> -> vector<4x256xf32>
    %65 = arith.addf %61, %64 : vector<4x256xf32>
    %66 = vector.extract_strided_slice %1 {offsets = [0, 1], sizes = [4, 255], strides = [1, 1]} : vector<4x256xf32> to vector<4x255xf32>
    %cst_31 = arith.constant 0.000000e+00 : f32
    %67 = vector.broadcast %cst_31 : f32 to vector<4x1xf32>
    %68 = tpu.concatenate %66, %67 in 1 : vector<4x255xf32>, vector<4x1xf32> -> vector<4x256xf32>
    %cst_32 = arith.constant 0.000000e+00 : f32
    %69 = vector.broadcast %cst_32 : f32 to vector<4x256xf32>
    %70 = vector.shape_cast %20 : vector<1x256xi1> to vector<1x256xi1>
    %71 = vector.broadcast %70 : vector<1x256xi1> to vector<4x256xi1>
    %72 = arith.select %71, %68, %69 : vector<4x256xi1>, vector<4x256xf32>
    %c5 = arith.constant 5 : index
    %c0_33 = arith.constant 0 : index
    %c0_34 = arith.constant 0 : index
    %73 = vector.load %arg3[%c5, %c0_33, %c0_34] : memref<9x4x4xf32, #tpu.memory_space<vmem>>, vector<1x4x4xf32>
    %74 = vector.shape_cast %73 : vector<1x4x4xf32> to vector<4x4xf32>
    %cst_35 = arith.constant dense<0.000000e+00> : vector<4x256xf32>
    %75 = tpu.matmul %74, %72, %cst_35 {dimension_numbers = #tpu.dot_dimension_numbers<[1], [0], [0], [1], [0, 0, 1, 1], [], []>} : vector<4x4xf32>, vector<4x256xf32>, vector<4x256xf32> -> vector<4x256xf32>
    %76 = arith.addf %65, %75 : vector<4x256xf32>
    %77 = vector.extract_strided_slice %1 {offsets = [0, 15], sizes = [4, 241], strides = [1, 1]} : vector<4x256xf32> to vector<4x241xf32>
    %cst_36 = arith.constant 0.000000e+00 : f32
    %78 = vector.broadcast %cst_36 : f32 to vector<4x15xf32>
    %79 = tpu.concatenate %77, %78 in 1 : vector<4x241xf32>, vector<4x15xf32> -> vector<4x256xf32>
    %cst_37 = arith.constant 0.000000e+00 : f32
    %80 = vector.broadcast %cst_37 : f32 to vector<4x256xf32>
    %81 = vector.shape_cast %11 : vector<1x256xi1> to vector<1x256xi1>
    %82 = vector.broadcast %81 : vector<1x256xi1> to vector<4x256xi1>
    %83 = arith.select %82, %79, %80 : vector<4x256xi1>, vector<4x256xf32>
    %c6 = arith.constant 6 : index
    %c0_38 = arith.constant 0 : index
    %c0_39 = arith.constant 0 : index
    %84 = vector.load %arg3[%c6, %c0_38, %c0_39] : memref<9x4x4xf32, #tpu.memory_space<vmem>>, vector<1x4x4xf32>
    %85 = vector.shape_cast %84 : vector<1x4x4xf32> to vector<4x4xf32>
    %cst_40 = arith.constant dense<0.000000e+00> : vector<4x256xf32>
    %86 = tpu.matmul %85, %83, %cst_40 {dimension_numbers = #tpu.dot_dimension_numbers<[1], [0], [0], [1], [0, 0, 1, 1], [], []>} : vector<4x4xf32>, vector<4x256xf32>, vector<4x256xf32> -> vector<4x256xf32>
    %87 = arith.addf %76, %86 : vector<4x256xf32>
    %88 = vector.extract_strided_slice %1 {offsets = [0, 16], sizes = [4, 240], strides = [1, 1]} : vector<4x256xf32> to vector<4x240xf32>
    %cst_41 = arith.constant 0.000000e+00 : f32
    %89 = vector.broadcast %cst_41 : f32 to vector<4x16xf32>
    %90 = tpu.concatenate %88, %89 in 1 : vector<4x240xf32>, vector<4x16xf32> -> vector<4x256xf32>
    %c7 = arith.constant 7 : index
    %c0_42 = arith.constant 0 : index
    %c0_43 = arith.constant 0 : index
    %91 = vector.load %arg3[%c7, %c0_42, %c0_43] : memref<9x4x4xf32, #tpu.memory_space<vmem>>, vector<1x4x4xf32>
    %92 = vector.shape_cast %91 : vector<1x4x4xf32> to vector<4x4xf32>
    %cst_44 = arith.constant dense<0.000000e+00> : vector<4x256xf32>
    %93 = tpu.matmul %92, %90, %cst_44 {dimension_numbers = #tpu.dot_dimension_numbers<[1], [0], [0], [1], [0, 0, 1, 1], [], []>} : vector<4x4xf32>, vector<4x256xf32>, vector<4x256xf32> -> vector<4x256xf32>
    %94 = arith.addf %87, %93 : vector<4x256xf32>
    %95 = vector.extract_strided_slice %1 {offsets = [0, 17], sizes = [4, 239], strides = [1, 1]} : vector<4x256xf32> to vector<4x239xf32>
    %cst_45 = arith.constant 0.000000e+00 : f32
    %96 = vector.broadcast %cst_45 : f32 to vector<4x17xf32>
    %97 = tpu.concatenate %95, %96 in 1 : vector<4x239xf32>, vector<4x17xf32> -> vector<4x256xf32>
    %cst_46 = arith.constant 0.000000e+00 : f32
    %98 = vector.broadcast %cst_46 : f32 to vector<4x256xf32>
    %99 = vector.shape_cast %20 : vector<1x256xi1> to vector<1x256xi1>
    %100 = vector.broadcast %99 : vector<1x256xi1> to vector<4x256xi1>
    %101 = arith.select %100, %97, %98 : vector<4x256xi1>, vector<4x256xf32>
    %c8 = arith.constant 8 : index
    %c0_47 = arith.constant 0 : index
    %c0_48 = arith.constant 0 : index
    %102 = vector.load %arg3[%c8, %c0_47, %c0_48] : memref<9x4x4xf32, #tpu.memory_space<vmem>>, vector<1x4x4xf32>
    %103 = vector.shape_cast %102 : vector<1x4x4xf32> to vector<4x4xf32>
    %cst_49 = arith.constant dense<0.000000e+00> : vector<4x256xf32>
    %104 = tpu.matmul %103, %101, %cst_49 {dimension_numbers = #tpu.dot_dimension_numbers<[1], [0], [0], [1], [0, 0, 1, 1], [], []>} : vector<4x4xf32>, vector<4x256xf32>, vector<4x256xf32> -> vector<4x256xf32>
    %105 = arith.addf %94, %104 : vector<4x256xf32>
    %cst_50 = arith.constant dense<0.000000e+00> : vector<4xf32>
    %106 = vector.multi_reduction <add>, %105, %cst_50 [1] : vector<4x256xf32> to vector<4xf32>
    %107 = vector.shape_cast %106 : vector<4xf32> to vector<4x1xf32>
    %c0_51 = arith.constant 0 : index
    %c0_52 = arith.constant 0 : index
    %c0_53 = arith.constant 0 : index
    %108 = vector.load %arg4[%c0_51, %c0_52, %c0_53] : memref<1x4x2xf32, #tpu.memory_space<vmem>>, vector<1x4x1xf32>
    %109 = vector.shape_cast %108 : vector<1x4x1xf32> to vector<4x1xf32>
    %110 = vector.shape_cast %107 : vector<4x1xf32> to vector<1x4x1xf32>
    tpu.vector_store %arg4[%c0_51, %c0_52, %c0_53], %110 {strides = array<i32>} : memref<1x4x2xf32, #tpu.memory_space<vmem>>, vector<1x4x1xf32>,
    %111 = arith.mulf %105, %105 : vector<4x256xf32>
    %cst_54 = arith.constant dense<0.000000e+00> : vector<4xf32>
    %112 = vector.multi_reduction <add>, %111, %cst_54 [1] : vector<4x256xf32> to vector<4xf32>
    %113 = vector.shape_cast %112 : vector<4xf32> to vector<4x1xf32>
    %c0_55 = arith.constant 0 : index
    %c0_56 = arith.constant 0 : index
    %c1_57 = arith.constant 1 : index
    %114 = vector.load %arg4[%c0_55, %c0_56, %c1_57] : memref<1x4x2xf32, #tpu.memory_space<vmem>>, vector<1x4x1xf32>
    %115 = vector.shape_cast %114 : vector<1x4x1xf32> to vector<4x1xf32>
    %116 = vector.shape_cast %113 : vector<4x1xf32> to vector<1x4x1xf32>
    tpu.vector_store %arg4[%c0_55, %c0_56, %c1_57], %116 {strides = array<i32>} : memref<1x4x2xf32, #tpu.memory_space<vmem>>, vector<1x4x1xf32>,
    return
  }
  func.func @transform_0(%arg0: i32) -> (i32, i32) {
    %c0_i32 = arith.constant 0 : i32
    %c0_i32_0 = arith.constant 0 : i32
    %c0_i32_1 = arith.constant 0 : i32
    return %c0_i32, %c0_i32_0 : i32, i32
  }
  func.func @transform_1(%arg0: i32) -> (i32, i32, i32) {
    %c0_i32 = arith.constant 0 : i32
    %c0_i32_0 = arith.constant 0 : i32
    %c0_i32_1 = arith.constant 0 : i32
    return %arg0, %c0_i32, %c0_i32_0 : i32, i32, i32
  }
  func.func @transform_2(%arg0: i32) -> (i32, i32, i32) {
    %c0_i32 = arith.constant 0 : i32
    %c0_i32_0 = arith.constant 0 : i32
    %c0_i32_1 = arith.constant 0 : i32
    %c0_i32_2 = arith.constant 0 : i32
    return %c0_i32, %c0_i32_0, %c0_i32_1 : i32, i32, i32
  }
  func.func @transform_3(%arg0: i32) -> (i32, i32, i32) {
    %c0_i32 = arith.constant 0 : i32
    %c0_i32_0 = arith.constant 0 : i32
    %c0_i32_1 = arith.constant 0 : i32
    return %arg0, %c0_i32, %c0_i32_0 : i32, i32, i32
  }
}

module attributes {stable_mosaic.version = 11 : i64} {
  func.func @_fused_resblock_kernel(%arg0: i32, %arg1: memref<1x256xi32, #tpu.memory_space<vmem>>, %arg2: memref<1x4x256xf32, #tpu.memory_space<vmem>>, %arg3: memref<9x4x4xf32, #tpu.memory_space<vmem>>, %arg4: memref<4x1xf32, #tpu.memory_space<vmem>>, %arg5: memref<4x1xf32, #tpu.memory_space<vmem>>, %arg6: memref<9x4x4xf32, #tpu.memory_space<vmem>>, %arg7: memref<4x1xf32, #tpu.memory_space<vmem>>, %arg8: memref<1x4x256xf32, #tpu.memory_space<vmem>>) attributes {dimension_semantics = [#tpu.dimension_semantics<parallel>], iteration_bounds = array<i64: 2>, scalar_prefetch = 0 : i64, scratch_operands = 0 : i64, tpu.core_type = #tpu.core_type<tc>, window_params = [{pipeline_mode = #tpu.pipeline_mode<synchronous>, transform_indices = @transform_0, window_bounds = array<i64: 1, 256>}, {transform_indices = @transform_1, window_bounds = array<i64: 1, 4, 256>}, {pipeline_mode = #tpu.pipeline_mode<synchronous>, transform_indices = @transform_2, window_bounds = array<i64: 9, 4, 4>}, {pipeline_mode = #tpu.pipeline_mode<synchronous>, transform_indices = @transform_3, window_bounds = array<i64: 4, 1>}, {pipeline_mode = #tpu.pipeline_mode<synchronous>, transform_indices = @transform_4, window_bounds = array<i64: 4, 1>}, {pipeline_mode = #tpu.pipeline_mode<synchronous>, transform_indices = @transform_5, window_bounds = array<i64: 9, 4, 4>}, {pipeline_mode = #tpu.pipeline_mode<synchronous>, transform_indices = @transform_6, window_bounds = array<i64: 4, 1>}, {transform_indices = @transform_7, window_bounds = array<i64: 1, 4, 256>}]} {
    %c0 = arith.constant 0 : index
    %c0_0 = arith.constant 0 : index
    %0 = vector.load %arg1[%c0, %c0_0] : memref<1x256xi32, #tpu.memory_space<vmem>>, vector<1x256xi32>
    %c0_1 = arith.constant 0 : index
    %c0_2 = arith.constant 0 : index
    %c0_3 = arith.constant 0 : index
    %1 = vector.load %arg2[%c0_1, %c0_2, %c0_3] : memref<1x4x256xf32, #tpu.memory_space<vmem>>, vector<1x4x256xf32>
    %2 = vector.shape_cast %1 : vector<1x4x256xf32> to vector<4x256xf32>
    %c-1_i32 = arith.constant -1 : i32
    %3 = vector.broadcast %c-1_i32 : i32 to vector<1x256xi32>
    %4 = arith.addi %0, %3 : vector<1x256xi32>
    %c0_i32 = arith.constant 0 : i32
    %5 = vector.broadcast %c0_i32 : i32 to vector<1x256xi32>
    %6 = arith.cmpi sge, %4, %5 : vector<1x256xi32>
    %c-1_i32_4 = arith.constant -1 : i32
    %7 = vector.broadcast %c-1_i32_4 : i32 to vector<1x256xi32>
    %8 = arith.addi %0, %7 : vector<1x256xi32>
    %c16_i32 = arith.constant 16 : i32
    %9 = vector.broadcast %c16_i32 : i32 to vector<1x256xi32>
    %10 = arith.cmpi slt, %8, %9 : vector<1x256xi32>
    %11 = arith.andi %6, %10 : vector<1x256xi1>
    %c1_i32 = arith.constant 1 : i32
    %12 = vector.broadcast %c1_i32 : i32 to vector<1x256xi32>
    %13 = arith.addi %0, %12 : vector<1x256xi32>
    %c0_i32_5 = arith.constant 0 : i32
    %14 = vector.broadcast %c0_i32_5 : i32 to vector<1x256xi32>
    %15 = arith.cmpi sge, %13, %14 : vector<1x256xi32>
    %c1_i32_6 = arith.constant 1 : i32
    %16 = vector.broadcast %c1_i32_6 : i32 to vector<1x256xi32>
    %17 = arith.addi %0, %16 : vector<1x256xi32>
    %c16_i32_7 = arith.constant 16 : i32
    %18 = vector.broadcast %c16_i32_7 : i32 to vector<1x256xi32>
    %19 = arith.cmpi slt, %17, %18 : vector<1x256xi32>
    %20 = arith.andi %15, %19 : vector<1x256xi1>
    %cst = arith.constant 0.000000e+00 : f32
    %21 = vector.broadcast %cst : f32 to vector<4x256xf32>
    %cst_8 = arith.constant 0.000000e+00 : f32
    %22 = vector.broadcast %cst_8 : f32 to vector<4x17xf32>
    %23 = vector.extract_strided_slice %2 {offsets = [0, 0], sizes = [4, 239], strides = [1, 1]} : vector<4x256xf32> to vector<4x239xf32>
    %24 = tpu.concatenate %22, %23 in 1 : vector<4x17xf32>, vector<4x239xf32> -> vector<4x256xf32>
    %cst_9 = arith.constant 0.000000e+00 : f32
    %25 = vector.broadcast %cst_9 : f32 to vector<4x256xf32>
    %26 = vector.shape_cast %11 : vector<1x256xi1> to vector<1x256xi1>
    %27 = vector.broadcast %26 : vector<1x256xi1> to vector<4x256xi1>
    %28 = arith.select %27, %24, %25 : vector<4x256xi1>, vector<4x256xf32>
    %c0_10 = arith.constant 0 : index
    %c0_11 = arith.constant 0 : index
    %c0_12 = arith.constant 0 : index
    %29 = vector.load %arg3[%c0_10, %c0_11, %c0_12] : memref<9x4x4xf32, #tpu.memory_space<vmem>>, vector<1x4x4xf32>
    %30 = vector.shape_cast %29 : vector<1x4x4xf32> to vector<4x4xf32>
    %cst_13 = arith.constant dense<0.000000e+00> : vector<4x256xf32>
    %31 = tpu.matmul %30, %28, %cst_13 {dimension_numbers = #tpu.dot_dimension_numbers<[1], [0], [0], [1], [0, 0, 1, 1], [], []>} : vector<4x4xf32>, vector<4x256xf32>, vector<4x256xf32> -> vector<4x256xf32>
    %32 = arith.addf %21, %31 : vector<4x256xf32>
    %cst_14 = arith.constant 0.000000e+00 : f32
    %33 = vector.broadcast %cst_14 : f32 to vector<4x16xf32>
    %34 = vector.extract_strided_slice %2 {offsets = [0, 0], sizes = [4, 240], strides = [1, 1]} : vector<4x256xf32> to vector<4x240xf32>
    %35 = tpu.concatenate %33, %34 in 1 : vector<4x16xf32>, vector<4x240xf32> -> vector<4x256xf32>
    %c1 = arith.constant 1 : index
    %c0_15 = arith.constant 0 : index
    %c0_16 = arith.constant 0 : index
    %36 = vector.load %arg3[%c1, %c0_15, %c0_16] : memref<9x4x4xf32, #tpu.memory_space<vmem>>, vector<1x4x4xf32>
    %37 = vector.shape_cast %36 : vector<1x4x4xf32> to vector<4x4xf32>
    %cst_17 = arith.constant dense<0.000000e+00> : vector<4x256xf32>
    %38 = tpu.matmul %37, %35, %cst_17 {dimension_numbers = #tpu.dot_dimension_numbers<[1], [0], [0], [1], [0, 0, 1, 1], [], []>} : vector<4x4xf32>, vector<4x256xf32>, vector<4x256xf32> -> vector<4x256xf32>
    %39 = arith.addf %32, %38 : vector<4x256xf32>
    %cst_18 = arith.constant 0.000000e+00 : f32
    %40 = vector.broadcast %cst_18 : f32 to vector<4x15xf32>
    %41 = vector.extract_strided_slice %2 {offsets = [0, 0], sizes = [4, 241], strides = [1, 1]} : vector<4x256xf32> to vector<4x241xf32>
    %42 = tpu.concatenate %40, %41 in 1 : vector<4x15xf32>, vector<4x241xf32> -> vector<4x256xf32>
    %cst_19 = arith.constant 0.000000e+00 : f32
    %43 = vector.broadcast %cst_19 : f32 to vector<4x256xf32>
    %44 = vector.shape_cast %20 : vector<1x256xi1> to vector<1x256xi1>
    %45 = vector.broadcast %44 : vector<1x256xi1> to vector<4x256xi1>
    %46 = arith.select %45, %42, %43 : vector<4x256xi1>, vector<4x256xf32>
    %c2 = arith.constant 2 : index
    %c0_20 = arith.constant 0 : index
    %c0_21 = arith.constant 0 : index
    %47 = vector.load %arg3[%c2, %c0_20, %c0_21] : memref<9x4x4xf32, #tpu.memory_space<vmem>>, vector<1x4x4xf32>
    %48 = vector.shape_cast %47 : vector<1x4x4xf32> to vector<4x4xf32>
    %cst_22 = arith.constant dense<0.000000e+00> : vector<4x256xf32>
    %49 = tpu.matmul %48, %46, %cst_22 {dimension_numbers = #tpu.dot_dimension_numbers<[1], [0], [0], [1], [0, 0, 1, 1], [], []>} : vector<4x4xf32>, vector<4x256xf32>, vector<4x256xf32> -> vector<4x256xf32>
    %50 = arith.addf %39, %49 : vector<4x256xf32>
    %cst_23 = arith.constant 0.000000e+00 : f32
    %51 = vector.broadcast %cst_23 : f32 to vector<4x1xf32>
    %52 = vector.extract_strided_slice %2 {offsets = [0, 0], sizes = [4, 255], strides = [1, 1]} : vector<4x256xf32> to vector<4x255xf32>
    %53 = tpu.concatenate %51, %52 in 1 : vector<4x1xf32>, vector<4x255xf32> -> vector<4x256xf32>
    %cst_24 = arith.constant 0.000000e+00 : f32
    %54 = vector.broadcast %cst_24 : f32 to vector<4x256xf32>
    %55 = vector.shape_cast %11 : vector<1x256xi1> to vector<1x256xi1>
    %56 = vector.broadcast %55 : vector<1x256xi1> to vector<4x256xi1>
    %57 = arith.select %56, %53, %54 : vector<4x256xi1>, vector<4x256xf32>
    %c3 = arith.constant 3 : index
    %c0_25 = arith.constant 0 : index
    %c0_26 = arith.constant 0 : index
    %58 = vector.load %arg3[%c3, %c0_25, %c0_26] : memref<9x4x4xf32, #tpu.memory_space<vmem>>, vector<1x4x4xf32>
    %59 = vector.shape_cast %58 : vector<1x4x4xf32> to vector<4x4xf32>
    %cst_27 = arith.constant dense<0.000000e+00> : vector<4x256xf32>
    %60 = tpu.matmul %59, %57, %cst_27 {dimension_numbers = #tpu.dot_dimension_numbers<[1], [0], [0], [1], [0, 0, 1, 1], [], []>} : vector<4x4xf32>, vector<4x256xf32>, vector<4x256xf32> -> vector<4x256xf32>
    %61 = arith.addf %50, %60 : vector<4x256xf32>
    %c4 = arith.constant 4 : index
    %c0_28 = arith.constant 0 : index
    %c0_29 = arith.constant 0 : index
    %62 = vector.load %arg3[%c4, %c0_28, %c0_29] : memref<9x4x4xf32, #tpu.memory_space<vmem>>, vector<1x4x4xf32>
    %63 = vector.shape_cast %62 : vector<1x4x4xf32> to vector<4x4xf32>
    %cst_30 = arith.constant dense<0.000000e+00> : vector<4x256xf32>
    %64 = tpu.matmul %63, %2, %cst_30 {dimension_numbers = #tpu.dot_dimension_numbers<[1], [0], [0], [1], [0, 0, 1, 1], [], []>} : vector<4x4xf32>, vector<4x256xf32>, vector<4x256xf32> -> vector<4x256xf32>
    %65 = arith.addf %61, %64 : vector<4x256xf32>
    %66 = vector.extract_strided_slice %2 {offsets = [0, 1], sizes = [4, 255], strides = [1, 1]} : vector<4x256xf32> to vector<4x255xf32>
    %cst_31 = arith.constant 0.000000e+00 : f32
    %67 = vector.broadcast %cst_31 : f32 to vector<4x1xf32>
    %68 = tpu.concatenate %66, %67 in 1 : vector<4x255xf32>, vector<4x1xf32> -> vector<4x256xf32>
    %cst_32 = arith.constant 0.000000e+00 : f32
    %69 = vector.broadcast %cst_32 : f32 to vector<4x256xf32>
    %70 = vector.shape_cast %20 : vector<1x256xi1> to vector<1x256xi1>
    %71 = vector.broadcast %70 : vector<1x256xi1> to vector<4x256xi1>
    %72 = arith.select %71, %68, %69 : vector<4x256xi1>, vector<4x256xf32>
    %c5 = arith.constant 5 : index
    %c0_33 = arith.constant 0 : index
    %c0_34 = arith.constant 0 : index
    %73 = vector.load %arg3[%c5, %c0_33, %c0_34] : memref<9x4x4xf32, #tpu.memory_space<vmem>>, vector<1x4x4xf32>
    %74 = vector.shape_cast %73 : vector<1x4x4xf32> to vector<4x4xf32>
    %cst_35 = arith.constant dense<0.000000e+00> : vector<4x256xf32>
    %75 = tpu.matmul %74, %72, %cst_35 {dimension_numbers = #tpu.dot_dimension_numbers<[1], [0], [0], [1], [0, 0, 1, 1], [], []>} : vector<4x4xf32>, vector<4x256xf32>, vector<4x256xf32> -> vector<4x256xf32>
    %76 = arith.addf %65, %75 : vector<4x256xf32>
    %77 = vector.extract_strided_slice %2 {offsets = [0, 15], sizes = [4, 241], strides = [1, 1]} : vector<4x256xf32> to vector<4x241xf32>
    %cst_36 = arith.constant 0.000000e+00 : f32
    %78 = vector.broadcast %cst_36 : f32 to vector<4x15xf32>
    %79 = tpu.concatenate %77, %78 in 1 : vector<4x241xf32>, vector<4x15xf32> -> vector<4x256xf32>
    %cst_37 = arith.constant 0.000000e+00 : f32
    %80 = vector.broadcast %cst_37 : f32 to vector<4x256xf32>
    %81 = vector.shape_cast %11 : vector<1x256xi1> to vector<1x256xi1>
    %82 = vector.broadcast %81 : vector<1x256xi1> to vector<4x256xi1>
    %83 = arith.select %82, %79, %80 : vector<4x256xi1>, vector<4x256xf32>
    %c6 = arith.constant 6 : index
    %c0_38 = arith.constant 0 : index
    %c0_39 = arith.constant 0 : index
    %84 = vector.load %arg3[%c6, %c0_38, %c0_39] : memref<9x4x4xf32, #tpu.memory_space<vmem>>, vector<1x4x4xf32>
    %85 = vector.shape_cast %84 : vector<1x4x4xf32> to vector<4x4xf32>
    %cst_40 = arith.constant dense<0.000000e+00> : vector<4x256xf32>
    %86 = tpu.matmul %85, %83, %cst_40 {dimension_numbers = #tpu.dot_dimension_numbers<[1], [0], [0], [1], [0, 0, 1, 1], [], []>} : vector<4x4xf32>, vector<4x256xf32>, vector<4x256xf32> -> vector<4x256xf32>
    %87 = arith.addf %76, %86 : vector<4x256xf32>
    %88 = vector.extract_strided_slice %2 {offsets = [0, 16], sizes = [4, 240], strides = [1, 1]} : vector<4x256xf32> to vector<4x240xf32>
    %cst_41 = arith.constant 0.000000e+00 : f32
    %89 = vector.broadcast %cst_41 : f32 to vector<4x16xf32>
    %90 = tpu.concatenate %88, %89 in 1 : vector<4x240xf32>, vector<4x16xf32> -> vector<4x256xf32>
    %c7 = arith.constant 7 : index
    %c0_42 = arith.constant 0 : index
    %c0_43 = arith.constant 0 : index
    %91 = vector.load %arg3[%c7, %c0_42, %c0_43] : memref<9x4x4xf32, #tpu.memory_space<vmem>>, vector<1x4x4xf32>
    %92 = vector.shape_cast %91 : vector<1x4x4xf32> to vector<4x4xf32>
    %cst_44 = arith.constant dense<0.000000e+00> : vector<4x256xf32>
    %93 = tpu.matmul %92, %90, %cst_44 {dimension_numbers = #tpu.dot_dimension_numbers<[1], [0], [0], [1], [0, 0, 1, 1], [], []>} : vector<4x4xf32>, vector<4x256xf32>, vector<4x256xf32> -> vector<4x256xf32>
    %94 = arith.addf %87, %93 : vector<4x256xf32>
    %95 = vector.extract_strided_slice %2 {offsets = [0, 17], sizes = [4, 239], strides = [1, 1]} : vector<4x256xf32> to vector<4x239xf32>
    %cst_45 = arith.constant 0.000000e+00 : f32
    %96 = vector.broadcast %cst_45 : f32 to vector<4x17xf32>
    %97 = tpu.concatenate %95, %96 in 1 : vector<4x239xf32>, vector<4x17xf32> -> vector<4x256xf32>
    %cst_46 = arith.constant 0.000000e+00 : f32
    %98 = vector.broadcast %cst_46 : f32 to vector<4x256xf32>
    %99 = vector.shape_cast %20 : vector<1x256xi1> to vector<1x256xi1>
    %100 = vector.broadcast %99 : vector<1x256xi1> to vector<4x256xi1>
    %101 = arith.select %100, %97, %98 : vector<4x256xi1>, vector<4x256xf32>
    %c8 = arith.constant 8 : index
    %c0_47 = arith.constant 0 : index
    %c0_48 = arith.constant 0 : index
    %102 = vector.load %arg3[%c8, %c0_47, %c0_48] : memref<9x4x4xf32, #tpu.memory_space<vmem>>, vector<1x4x4xf32>
    %103 = vector.shape_cast %102 : vector<1x4x4xf32> to vector<4x4xf32>
    %cst_49 = arith.constant dense<0.000000e+00> : vector<4x256xf32>
    %104 = tpu.matmul %103, %101, %cst_49 {dimension_numbers = #tpu.dot_dimension_numbers<[1], [0], [0], [1], [0, 0, 1, 1], [], []>} : vector<4x4xf32>, vector<4x256xf32>, vector<4x256xf32> -> vector<4x256xf32>
    %105 = arith.addf %94, %104 : vector<4x256xf32>
    %c0_50 = arith.constant 0 : index
    %c0_51 = arith.constant 0 : index
    %106 = vector.load %arg4[%c0_50, %c0_51] : memref<4x1xf32, #tpu.memory_space<vmem>>, vector<4x1xf32>
    %107 = vector.broadcast %106 : vector<4x1xf32> to vector<4x256xf32>
    %108 = arith.mulf %105, %107 : vector<4x256xf32>
    %c0_52 = arith.constant 0 : index
    %c0_53 = arith.constant 0 : index
    %109 = vector.load %arg5[%c0_52, %c0_53] : memref<4x1xf32, #tpu.memory_space<vmem>>, vector<4x1xf32>
    %110 = vector.broadcast %109 : vector<4x1xf32> to vector<4x256xf32>
    %111 = arith.addf %108, %110 : vector<4x256xf32>
    %cst_54 = arith.constant 0.000000e+00 : f32
    %112 = vector.broadcast %cst_54 : f32 to vector<4x256xf32>
    %113 = arith.maximumf %111, %112 : vector<4x256xf32>
    %c-1_i32_55 = arith.constant -1 : i32
    %114 = vector.broadcast %c-1_i32_55 : i32 to vector<1x256xi32>
    %115 = arith.addi %0, %114 : vector<1x256xi32>
    %c0_i32_56 = arith.constant 0 : i32
    %116 = vector.broadcast %c0_i32_56 : i32 to vector<1x256xi32>
    %117 = arith.cmpi sge, %115, %116 : vector<1x256xi32>
    %c-1_i32_57 = arith.constant -1 : i32
    %118 = vector.broadcast %c-1_i32_57 : i32 to vector<1x256xi32>
    %119 = arith.addi %0, %118 : vector<1x256xi32>
    %c16_i32_58 = arith.constant 16 : i32
    %120 = vector.broadcast %c16_i32_58 : i32 to vector<1x256xi32>
    %121 = arith.cmpi slt, %119, %120 : vector<1x256xi32>
    %122 = arith.andi %117, %121 : vector<1x256xi1>
    %c1_i32_59 = arith.constant 1 : i32
    %123 = vector.broadcast %c1_i32_59 : i32 to vector<1x256xi32>
    %124 = arith.addi %0, %123 : vector<1x256xi32>
    %c0_i32_60 = arith.constant 0 : i32
    %125 = vector.broadcast %c0_i32_60 : i32 to vector<1x256xi32>
    %126 = arith.cmpi sge, %124, %125 : vector<1x256xi32>
    %c1_i32_61 = arith.constant 1 : i32
    %127 = vector.broadcast %c1_i32_61 : i32 to vector<1x256xi32>
    %128 = arith.addi %0, %127 : vector<1x256xi32>
    %c16_i32_62 = arith.constant 16 : i32
    %129 = vector.broadcast %c16_i32_62 : i32 to vector<1x256xi32>
    %130 = arith.cmpi slt, %128, %129 : vector<1x256xi32>
    %131 = arith.andi %126, %130 : vector<1x256xi1>
    %cst_63 = arith.constant 0.000000e+00 : f32
    %132 = vector.broadcast %cst_63 : f32 to vector<4x256xf32>
    %cst_64 = arith.constant 0.000000e+00 : f32
    %133 = vector.broadcast %cst_64 : f32 to vector<4x17xf32>
    %134 = vector.extract_strided_slice %113 {offsets = [0, 0], sizes = [4, 239], strides = [1, 1]} : vector<4x256xf32> to vector<4x239xf32>
    %135 = tpu.concatenate %133, %134 in 1 : vector<4x17xf32>, vector<4x239xf32> -> vector<4x256xf32>
    %cst_65 = arith.constant 0.000000e+00 : f32
    %136 = vector.broadcast %cst_65 : f32 to vector<4x256xf32>
    %137 = vector.shape_cast %122 : vector<1x256xi1> to vector<1x256xi1>
    %138 = vector.broadcast %137 : vector<1x256xi1> to vector<4x256xi1>
    %139 = arith.select %138, %135, %136 : vector<4x256xi1>, vector<4x256xf32>
    %c0_66 = arith.constant 0 : index
    %c0_67 = arith.constant 0 : index
    %c0_68 = arith.constant 0 : index
    %140 = vector.load %arg6[%c0_66, %c0_67, %c0_68] : memref<9x4x4xf32, #tpu.memory_space<vmem>>, vector<1x4x4xf32>
    %141 = vector.shape_cast %140 : vector<1x4x4xf32> to vector<4x4xf32>
    %cst_69 = arith.constant dense<0.000000e+00> : vector<4x256xf32>
    %142 = tpu.matmul %141, %139, %cst_69 {dimension_numbers = #tpu.dot_dimension_numbers<[1], [0], [0], [1], [0, 0, 1, 1], [], []>} : vector<4x4xf32>, vector<4x256xf32>, vector<4x256xf32> -> vector<4x256xf32>
    %143 = arith.addf %132, %142 : vector<4x256xf32>
    %cst_70 = arith.constant 0.000000e+00 : f32
    %144 = vector.broadcast %cst_70 : f32 to vector<4x16xf32>
    %145 = vector.extract_strided_slice %113 {offsets = [0, 0], sizes = [4, 240], strides = [1, 1]} : vector<4x256xf32> to vector<4x240xf32>
    %146 = tpu.concatenate %144, %145 in 1 : vector<4x16xf32>, vector<4x240xf32> -> vector<4x256xf32>
    %c1_71 = arith.constant 1 : index
    %c0_72 = arith.constant 0 : index
    %c0_73 = arith.constant 0 : index
    %147 = vector.load %arg6[%c1_71, %c0_72, %c0_73] : memref<9x4x4xf32, #tpu.memory_space<vmem>>, vector<1x4x4xf32>
    %148 = vector.shape_cast %147 : vector<1x4x4xf32> to vector<4x4xf32>
    %cst_74 = arith.constant dense<0.000000e+00> : vector<4x256xf32>
    %149 = tpu.matmul %148, %146, %cst_74 {dimension_numbers = #tpu.dot_dimension_numbers<[1], [0], [0], [1], [0, 0, 1, 1], [], []>} : vector<4x4xf32>, vector<4x256xf32>, vector<4x256xf32> -> vector<4x256xf32>
    %150 = arith.addf %143, %149 : vector<4x256xf32>
    %cst_75 = arith.constant 0.000000e+00 : f32
    %151 = vector.broadcast %cst_75 : f32 to vector<4x15xf32>
    %152 = vector.extract_strided_slice %113 {offsets = [0, 0], sizes = [4, 241], strides = [1, 1]} : vector<4x256xf32> to vector<4x241xf32>
    %153 = tpu.concatenate %151, %152 in 1 : vector<4x15xf32>, vector<4x241xf32> -> vector<4x256xf32>
    %cst_76 = arith.constant 0.000000e+00 : f32
    %154 = vector.broadcast %cst_76 : f32 to vector<4x256xf32>
    %155 = vector.shape_cast %131 : vector<1x256xi1> to vector<1x256xi1>
    %156 = vector.broadcast %155 : vector<1x256xi1> to vector<4x256xi1>
    %157 = arith.select %156, %153, %154 : vector<4x256xi1>, vector<4x256xf32>
    %c2_77 = arith.constant 2 : index
    %c0_78 = arith.constant 0 : index
    %c0_79 = arith.constant 0 : index
    %158 = vector.load %arg6[%c2_77, %c0_78, %c0_79] : memref<9x4x4xf32, #tpu.memory_space<vmem>>, vector<1x4x4xf32>
    %159 = vector.shape_cast %158 : vector<1x4x4xf32> to vector<4x4xf32>
    %cst_80 = arith.constant dense<0.000000e+00> : vector<4x256xf32>
    %160 = tpu.matmul %159, %157, %cst_80 {dimension_numbers = #tpu.dot_dimension_numbers<[1], [0], [0], [1], [0, 0, 1, 1], [], []>} : vector<4x4xf32>, vector<4x256xf32>, vector<4x256xf32> -> vector<4x256xf32>
    %161 = arith.addf %150, %160 : vector<4x256xf32>
    %cst_81 = arith.constant 0.000000e+00 : f32
    %162 = vector.broadcast %cst_81 : f32 to vector<4x1xf32>
    %163 = vector.extract_strided_slice %113 {offsets = [0, 0], sizes = [4, 255], strides = [1, 1]} : vector<4x256xf32> to vector<4x255xf32>
    %164 = tpu.concatenate %162, %163 in 1 : vector<4x1xf32>, vector<4x255xf32> -> vector<4x256xf32>
    %cst_82 = arith.constant 0.000000e+00 : f32
    %165 = vector.broadcast %cst_82 : f32 to vector<4x256xf32>
    %166 = vector.shape_cast %122 : vector<1x256xi1> to vector<1x256xi1>
    %167 = vector.broadcast %166 : vector<1x256xi1> to vector<4x256xi1>
    %168 = arith.select %167, %164, %165 : vector<4x256xi1>, vector<4x256xf32>
    %c3_83 = arith.constant 3 : index
    %c0_84 = arith.constant 0 : index
    %c0_85 = arith.constant 0 : index
    %169 = vector.load %arg6[%c3_83, %c0_84, %c0_85] : memref<9x4x4xf32, #tpu.memory_space<vmem>>, vector<1x4x4xf32>
    %170 = vector.shape_cast %169 : vector<1x4x4xf32> to vector<4x4xf32>
    %cst_86 = arith.constant dense<0.000000e+00> : vector<4x256xf32>
    %171 = tpu.matmul %170, %168, %cst_86 {dimension_numbers = #tpu.dot_dimension_numbers<[1], [0], [0], [1], [0, 0, 1, 1], [], []>} : vector<4x4xf32>, vector<4x256xf32>, vector<4x256xf32> -> vector<4x256xf32>
    %172 = arith.addf %161, %171 : vector<4x256xf32>
    %c4_87 = arith.constant 4 : index
    %c0_88 = arith.constant 0 : index
    %c0_89 = arith.constant 0 : index
    %173 = vector.load %arg6[%c4_87, %c0_88, %c0_89] : memref<9x4x4xf32, #tpu.memory_space<vmem>>, vector<1x4x4xf32>
    %174 = vector.shape_cast %173 : vector<1x4x4xf32> to vector<4x4xf32>
    %cst_90 = arith.constant dense<0.000000e+00> : vector<4x256xf32>
    %175 = tpu.matmul %174, %113, %cst_90 {dimension_numbers = #tpu.dot_dimension_numbers<[1], [0], [0], [1], [0, 0, 1, 1], [], []>} : vector<4x4xf32>, vector<4x256xf32>, vector<4x256xf32> -> vector<4x256xf32>
    %176 = arith.addf %172, %175 : vector<4x256xf32>
    %177 = vector.extract_strided_slice %113 {offsets = [0, 1], sizes = [4, 255], strides = [1, 1]} : vector<4x256xf32> to vector<4x255xf32>
    %cst_91 = arith.constant 0.000000e+00 : f32
    %178 = vector.broadcast %cst_91 : f32 to vector<4x1xf32>
    %179 = tpu.concatenate %177, %178 in 1 : vector<4x255xf32>, vector<4x1xf32> -> vector<4x256xf32>
    %cst_92 = arith.constant 0.000000e+00 : f32
    %180 = vector.broadcast %cst_92 : f32 to vector<4x256xf32>
    %181 = vector.shape_cast %131 : vector<1x256xi1> to vector<1x256xi1>
    %182 = vector.broadcast %181 : vector<1x256xi1> to vector<4x256xi1>
    %183 = arith.select %182, %179, %180 : vector<4x256xi1>, vector<4x256xf32>
    %c5_93 = arith.constant 5 : index
    %c0_94 = arith.constant 0 : index
    %c0_95 = arith.constant 0 : index
    %184 = vector.load %arg6[%c5_93, %c0_94, %c0_95] : memref<9x4x4xf32, #tpu.memory_space<vmem>>, vector<1x4x4xf32>
    %185 = vector.shape_cast %184 : vector<1x4x4xf32> to vector<4x4xf32>
    %cst_96 = arith.constant dense<0.000000e+00> : vector<4x256xf32>
    %186 = tpu.matmul %185, %183, %cst_96 {dimension_numbers = #tpu.dot_dimension_numbers<[1], [0], [0], [1], [0, 0, 1, 1], [], []>} : vector<4x4xf32>, vector<4x256xf32>, vector<4x256xf32> -> vector<4x256xf32>
    %187 = arith.addf %176, %186 : vector<4x256xf32>
    %188 = vector.extract_strided_slice %113 {offsets = [0, 15], sizes = [4, 241], strides = [1, 1]} : vector<4x256xf32> to vector<4x241xf32>
    %cst_97 = arith.constant 0.000000e+00 : f32
    %189 = vector.broadcast %cst_97 : f32 to vector<4x15xf32>
    %190 = tpu.concatenate %188, %189 in 1 : vector<4x241xf32>, vector<4x15xf32> -> vector<4x256xf32>
    %cst_98 = arith.constant 0.000000e+00 : f32
    %191 = vector.broadcast %cst_98 : f32 to vector<4x256xf32>
    %192 = vector.shape_cast %122 : vector<1x256xi1> to vector<1x256xi1>
    %193 = vector.broadcast %192 : vector<1x256xi1> to vector<4x256xi1>
    %194 = arith.select %193, %190, %191 : vector<4x256xi1>, vector<4x256xf32>
    %c6_99 = arith.constant 6 : index
    %c0_100 = arith.constant 0 : index
    %c0_101 = arith.constant 0 : index
    %195 = vector.load %arg6[%c6_99, %c0_100, %c0_101] : memref<9x4x4xf32, #tpu.memory_space<vmem>>, vector<1x4x4xf32>
    %196 = vector.shape_cast %195 : vector<1x4x4xf32> to vector<4x4xf32>
    %cst_102 = arith.constant dense<0.000000e+00> : vector<4x256xf32>
    %197 = tpu.matmul %196, %194, %cst_102 {dimension_numbers = #tpu.dot_dimension_numbers<[1], [0], [0], [1], [0, 0, 1, 1], [], []>} : vector<4x4xf32>, vector<4x256xf32>, vector<4x256xf32> -> vector<4x256xf32>
    %198 = arith.addf %187, %197 : vector<4x256xf32>
    %199 = vector.extract_strided_slice %113 {offsets = [0, 16], sizes = [4, 240], strides = [1, 1]} : vector<4x256xf32> to vector<4x240xf32>
    %cst_103 = arith.constant 0.000000e+00 : f32
    %200 = vector.broadcast %cst_103 : f32 to vector<4x16xf32>
    %201 = tpu.concatenate %199, %200 in 1 : vector<4x240xf32>, vector<4x16xf32> -> vector<4x256xf32>
    %c7_104 = arith.constant 7 : index
    %c0_105 = arith.constant 0 : index
    %c0_106 = arith.constant 0 : index
    %202 = vector.load %arg6[%c7_104, %c0_105, %c0_106] : memref<9x4x4xf32, #tpu.memory_space<vmem>>, vector<1x4x4xf32>
    %203 = vector.shape_cast %202 : vector<1x4x4xf32> to vector<4x4xf32>
    %cst_107 = arith.constant dense<0.000000e+00> : vector<4x256xf32>
    %204 = tpu.matmul %203, %201, %cst_107 {dimension_numbers = #tpu.dot_dimension_numbers<[1], [0], [0], [1], [0, 0, 1, 1], [], []>} : vector<4x4xf32>, vector<4x256xf32>, vector<4x256xf32> -> vector<4x256xf32>
    %205 = arith.addf %198, %204 : vector<4x256xf32>
    %206 = vector.extract_strided_slice %113 {offsets = [0, 17], sizes = [4, 239], strides = [1, 1]} : vector<4x256xf32> to vector<4x239xf32>
    %cst_108 = arith.constant 0.000000e+00 : f32
    %207 = vector.broadcast %cst_108 : f32 to vector<4x17xf32>
    %208 = tpu.concatenate %206, %207 in 1 : vector<4x239xf32>, vector<4x17xf32> -> vector<4x256xf32>
    %cst_109 = arith.constant 0.000000e+00 : f32
    %209 = vector.broadcast %cst_109 : f32 to vector<4x256xf32>
    %210 = vector.shape_cast %131 : vector<1x256xi1> to vector<1x256xi1>
    %211 = vector.broadcast %210 : vector<1x256xi1> to vector<4x256xi1>
    %212 = arith.select %211, %208, %209 : vector<4x256xi1>, vector<4x256xf32>
    %c8_110 = arith.constant 8 : index
    %c0_111 = arith.constant 0 : index
    %c0_112 = arith.constant 0 : index
    %213 = vector.load %arg6[%c8_110, %c0_111, %c0_112] : memref<9x4x4xf32, #tpu.memory_space<vmem>>, vector<1x4x4xf32>
    %214 = vector.shape_cast %213 : vector<1x4x4xf32> to vector<4x4xf32>
    %cst_113 = arith.constant dense<0.000000e+00> : vector<4x256xf32>
    %215 = tpu.matmul %214, %212, %cst_113 {dimension_numbers = #tpu.dot_dimension_numbers<[1], [0], [0], [1], [0, 0, 1, 1], [], []>} : vector<4x4xf32>, vector<4x256xf32>, vector<4x256xf32> -> vector<4x256xf32>
    %216 = arith.addf %205, %215 : vector<4x256xf32>
    %c0_114 = arith.constant 0 : index
    %c0_115 = arith.constant 0 : index
    %217 = vector.load %arg7[%c0_114, %c0_115] : memref<4x1xf32, #tpu.memory_space<vmem>>, vector<4x1xf32>
    %218 = vector.broadcast %217 : vector<4x1xf32> to vector<4x256xf32>
    %219 = arith.addf %216, %218 : vector<4x256xf32>
    %220 = arith.addf %219, %2 : vector<4x256xf32>
    %c0_116 = arith.constant 0 : index
    %c0_117 = arith.constant 0 : index
    %c0_118 = arith.constant 0 : index
    %221 = vector.load %arg8[%c0_116, %c0_117, %c0_118] : memref<1x4x256xf32, #tpu.memory_space<vmem>>, vector<1x4x256xf32>
    %222 = vector.shape_cast %221 : vector<1x4x256xf32> to vector<4x256xf32>
    %223 = vector.shape_cast %220 : vector<4x256xf32> to vector<1x4x256xf32>
    tpu.vector_store %arg8[%c0_116, %c0_117, %c0_118], %223 {strides = array<i32>} : memref<1x4x256xf32, #tpu.memory_space<vmem>>, vector<1x4x256xf32>,
    return
  }
  func.func @transform_0(%arg0: i32) -> (i32, i32) {
    %c0_i32 = arith.constant 0 : i32
    %c0_i32_0 = arith.constant 0 : i32
    %c0_i32_1 = arith.constant 0 : i32
    return %c0_i32, %c0_i32_0 : i32, i32
  }
  func.func @transform_1(%arg0: i32) -> (i32, i32, i32) {
    %c0_i32 = arith.constant 0 : i32
    %c0_i32_0 = arith.constant 0 : i32
    %c0_i32_1 = arith.constant 0 : i32
    return %arg0, %c0_i32, %c0_i32_0 : i32, i32, i32
  }
  func.func @transform_2(%arg0: i32) -> (i32, i32, i32) {
    %c0_i32 = arith.constant 0 : i32
    %c0_i32_0 = arith.constant 0 : i32
    %c0_i32_1 = arith.constant 0 : i32
    %c0_i32_2 = arith.constant 0 : i32
    return %c0_i32, %c0_i32_0, %c0_i32_1 : i32, i32, i32
  }
  func.func @transform_3(%arg0: i32) -> (i32, i32) {
    %c0_i32 = arith.constant 0 : i32
    %c0_i32_0 = arith.constant 0 : i32
    %c0_i32_1 = arith.constant 0 : i32
    return %c0_i32, %c0_i32_0 : i32, i32
  }
  func.func @transform_4(%arg0: i32) -> (i32, i32) {
    %c0_i32 = arith.constant 0 : i32
    %c0_i32_0 = arith.constant 0 : i32
    %c0_i32_1 = arith.constant 0 : i32
    return %c0_i32, %c0_i32_0 : i32, i32
  }
  func.func @transform_5(%arg0: i32) -> (i32, i32, i32) {
    %c0_i32 = arith.constant 0 : i32
    %c0_i32_0 = arith.constant 0 : i32
    %c0_i32_1 = arith.constant 0 : i32
    %c0_i32_2 = arith.constant 0 : i32
    return %c0_i32, %c0_i32_0, %c0_i32_1 : i32, i32, i32
  }
  func.func @transform_6(%arg0: i32) -> (i32, i32) {
    %c0_i32 = arith.constant 0 : i32
    %c0_i32_0 = arith.constant 0 : i32
    %c0_i32_1 = arith.constant 0 : i32
    return %c0_i32, %c0_i32_0 : i32, i32
  }
  func.func @transform_7(%arg0: i32) -> (i32, i32, i32) {
    %c0_i32 = arith.constant 0 : i32
    %c0_i32_0 = arith.constant 0 : i32
    %c0_i32_1 = arith.constant 0 : i32
    return %arg0, %c0_i32, %c0_i32_0 : i32, i32, i32
  }
}

</mosaic_0001>

<llo_original>
// kernel: res_block.2
$region0: #{res_block.2}
  #allocation0 [shape = 'u32[]', space=smem, size = 0x4, offset = 0x4, fixed_abs, tag = 'smem constant byte address 0x4 - core index']
  #allocation1 [shape = 'u32[144,128]{1,0:T(1,128)}', space=vmem, size = 0x12000, scoped, tag = 'internal scratch']
  %s0 = inlined_call_operand.vmem [shape: s32[1,256], index: 0, kind: input, shape index: {}]
  %s1 = inlined_call_operand.vmem [shape: f32[2,4,256], index: 1, kind: input, shape index: {}]
  %s2 = inlined_call_operand.vmem [shape: f32[9,4,4], index: 2, kind: input, shape index: {}]
  %s3 = inlined_call_operand.vmem [shape: f32[2,4,2], index: 3, kind: output, shape index: {}]
  %s4 = sld [smem:[#allocation0]]
  $region45: #{res_block.2} parent=0
    _
  %s6 = ssub.s32 1, %s4
  %s7 = scalar_select 0, %s6, %s4
  loop: start=0, step=1, limit=4
  $region2: #{res_block.2} parent=0 // loop_pre_header
    _
  $region3: #{res_block.2} parent=0 // loop_header
    %s9 = sphi 0, %s13
    %p10 = scmp.ge.s32.totalorder %s9, 4
    %s17 = sphi 0, %s17
    %s19 = sphi 0, %s17
    %s20 = sphi 0, %s19
    %s34 = sphi 0, %s20
    %s40 = sphi 0, %s42
    %s43 = sphi 0, %s40
    %s44 = sphi 0, %s43
    %s60 = sphi 0, %s44
    %s64 = sphi 0, %s64
    %s66 = sphi 0, %s64
    %s67 = sphi 0, %s66
    %s81 = sphi 0, %s67
    %s87 = sphi 0, %s89
    %s90 = sphi 0, %s87
    %s91 = sphi 0, %s90
    %s107 = sphi 0, %s91
  $region4: #{res_block.2} parent=0 // loop_header_branch
    %12 = sbr.rel (%p10) target = $region8
  $region5: #{res_block.2} parent=0 // loop_body
    %s14 = ssub.s32 %s9, 1
    %s15 = ssub.s32 %s9, 2
    %s16 = sadd.s32 %s9, 1
    %s18 = sadd.s32 %s17, 1
    %p21 = scmp.eq.s32.totalorder %s9, 1
    %p22 = scmp.ne.s32.totalorder %s17, %s19
    %p23 = scmp.eq.s32.totalorder %s9, 0
    %p24 = por %p22, %p23
    %p25 = scmp.ne.s32.totalorder %s17, %s19
    %p26 = scmp.eq.s32.totalorder %s14, 1
    %p27 = por %p25, %p26
    %p28 = scmp.ne.s32.totalorder %s19, %s20
    %p29 = scmp.eq.s32.totalorder %s14, 0
    %p30 = por %p28, %p29
    %p31 = scmp.ne.s32.totalorder %s19, %s20
    %p32 = scmp.eq.s32.totalorder %s15, 1
    %p33 = por %p31, %p32
    %p35 = scmp.ne.s32.totalorder %s20, %s34
    %p36 = scmp.eq.s32.totalorder %s15, 0
    %p37 = por %p35, %p36
    %s38 = ssub.s32 %s9, %s16
    %p39 = scmp.eq.s32.totalorder %s38, 0
    %s41 = sadd.s32 %s40, 1
    %s42 = scalar_select %p39, %s40, %s41
    %p45 = pneg %p39
    %p46 = scmp.eq.s32.totalorder %s9, 1
    %p47 = por %p45, %p46
    %p48 = scmp.ne.s32.totalorder %s40, %s43
    %p49 = scmp.eq.s32.totalorder %s9, 0
    %p50 = por %p48, %p49
    %p51 = scmp.ne.s32.totalorder %s40, %s43
    %p52 = scmp.eq.s32.totalorder %s14, 1
    %p53 = por %p51, %p52
    %p54 = scmp.ne.s32.totalorder %s43, %s44
    %p55 = scmp.eq.s32.totalorder %s14, 0
    %p56 = por %p54, %p55
    %p57 = scmp.ne.s32.totalorder %s43, %s44
    %p58 = scmp.eq.s32.totalorder %s15, 1
    %p59 = por %p57, %p58
    %p61 = scmp.ne.s32.totalorder %s44, %s60
    %p62 = scmp.eq.s32.totalorder %s15, 0
    %p63 = por %p61, %p62
    %s65 = sadd.s32 %s64, 1
    %p68 = scmp.eq.s32.totalorder %s9, 1
    %p69 = scmp.ne.s32.totalorder %s64, %s66
    %p70 = scmp.eq.s32.totalorder %s9, 0
    %p71 = por %p69, %p70
    %p72 = scmp.ne.s32.totalorder %s64, %s66
    %p73 = scmp.eq.s32.totalorder %s14, 1
    %p74 = por %p72, %p73
    %p75 = scmp.ne.s32.totalorder %s66, %s67
    %p76 = scmp.eq.s32.totalorder %s14, 0
    %p77 = por %p75, %p76
    %p78 = scmp.ne.s32.totalorder %s66, %s67
    %p79 = scmp.eq.s32.totalorder %s15, 1
    %p80 = por %p78, %p79
    %p82 = scmp.ne.s32.totalorder %s67, %s81
    %p83 = scmp.eq.s32.totalorder %s15, 0
    %p84 = por %p82, %p83
    %s85 = ssub.s32 %s9, %s16
    %p86 = scmp.eq.s32.totalorder %s85, 0
    %s88 = sadd.s32 %s87, 1
    %s89 = scalar_select %p86, %s87, %s88
    %p92 = pneg %p86
    %p93 = scmp.eq.s32.totalorder %s9, 1
    %p94 = por %p92, %p93
    %p95 = scmp.ne.s32.totalorder %s87, %s90
    %p96 = scmp.eq.s32.totalorder %s9, 0
    %p97 = por %p95, %p96
    %p98 = scmp.ne.s32.totalorder %s87, %s90
    %p99 = scmp.eq.s32.totalorder %s14, 1
    %p100 = por %p98, %p99
    %p101 = scmp.ne.s32.totalorder %s90, %s91
    %p102 = scmp.eq.s32.totalorder %s14, 0
    %p103 = por %p101, %p102
    %p104 = scmp.ne.s32.totalorder %s90, %s91
    %p105 = scmp.eq.s32.totalorder %s15, 1
    %p106 = por %p104, %p105
    %p108 = scmp.ne.s32.totalorder %s91, %s107
    %p109 = scmp.eq.s32.totalorder %s15, 0
    %p110 = por %p108, %p109
    %p111 = scmp.le.s32.totalorder 1, %s9
    %p112 = scmp.lt.s32.totalorder %s9, 3
    %p113 = pnand %p111, %p112
    %p114 = pneg %p113
    // Predicated region
    $region9: #{res_block.2} parent=5 // pred_check
      _
    $region10: #{res_block.2} parent=5 // pred_check_branch
      %116 = sbr.rel (%p113) target = $region12
    $region11: #{res_block.2} parent=5 // pred_region
      %s117 = ssub.s32 %s9, 1
      // Predicated region
      $region13: #{res_block.2} parent=11 // pred_check
        %p118 = pneg %p30
      $region14: #{res_block.2} parent=11 // pred_check_branch
        %120 = sbr.rel (%p118) target = $region16
      $region15: #{res_block.2} parent=11 // pred_region
        _
      $region16: #{res_block.2} parent=11 // pred_fallthru
        _
      // Predicated region
      $region17: #{res_block.2} parent=11 // pred_check
        %p121 = pneg %p77
      $region18: #{res_block.2} parent=11 // pred_check_branch
        %123 = sbr.rel (%p121) target = $region20
      $region19: #{res_block.2} parent=11 // pred_region
        _
      $region20: #{res_block.2} parent=11 // pred_fallthru
        _
    $region12: #{res_block.2} parent=5 // pred_fallthru
      _
    %p124 = scmp.lt.s32.totalorder %s9, 2
    // Predicated region
    $region21: #{res_block.2} parent=5 // pred_check
      %p125 = pneg %p124
    $region22: #{res_block.2} parent=5 // pred_check_branch
      %127 = sbr.rel (%p125) target = $region24
    $region23: #{res_block.2} parent=5 // pred_region
      // Predicated region
      $region25: #{res_block.2} parent=23 // pred_check
        %p128 = pneg %p50
      $region26: #{res_block.2} parent=23 // pred_check_branch
        %130 = sbr.rel (%p128) target = $region28
      $region27: #{res_block.2} parent=23 // pred_region
        %p131 = scmp.lt.s32.totalorder %s9, 1
        %s132 = scalar_select %p131, %s9, 1
        %s133 = smul.addr %s132, 2
        %s134 = smul.addr %s133, 4
        %s135 = scalar_lea.vmem %s1, %s134
      $region28: #{res_block.2} parent=23 // pred_fallthru
        _
    $region24: #{res_block.2} parent=5 // pred_fallthru
      _
    %p136 = scmp.le.s32.totalorder 1, %s9
    %p137 = scmp.lt.s32.totalorder %s9, 3
    %p138 = pnand %p136, %p137
    %p139 = pneg %p138
    // Predicated region
    $region29: #{res_block.2} parent=5 // pred_check
      _
    $region30: #{res_block.2} parent=5 // pred_check_branch
      %141 = sbr.rel (%p138) target = $region32
    $region31: #{res_block.2} parent=5 // pred_region
      %s142 = ssub.s32 %s9, 1
      %p143 = pneg %p30
      %p144 = pneg %p27
      %p145 = scmp.lt.s32.totalorder %s14, 1
      %s146 = scalar_select %p145, %s14, 1
      %s147 = smul.addr %s146, 2
      %s148 = smul.addr %s147, 4
      %s149 = scalar_lea.vmem %s1, %s148
      %p150 = pneg %p56
      %p151 = pneg %p53
      %p152 = pneg %p77
      %p153 = pneg %p74
      %p154 = pneg %p103
      %p155 = pneg %p100
      %p156 = scmp.lt.s32.totalorder %s14, 1
      %s157 = scalar_select %p156, %s14, 1
      %s158 = smul.addr %s157, 4
      %s159 = scalar_lea.vmem %s3, %s158
      %p160 = scmp.lt.s32.totalorder %s14, 1
      %s161 = scalar_select %p160, %s14, 1
      %s162 = smul.addr %s161, 2
      %s163 = smul.addr %s162, 4
      %s164 = scalar_lea.vmem %s1, %s163
      %p165 = scmp.lt.s32.totalorder %s14, 1
      %s166 = scalar_select %p165, %s14, 1
      %s167 = smul.addr %s166, 4
      %s168 = scalar_lea.vmem %s3, %s167
      %v169 = vld [vmem:[%s164] sm:$0xff]
      %v170 = vld [vmem:[%s0] sm:$0x3]
      %v171 = vadd.s32 %v170, 4294967295
      %vm172 = vcmp.ge.s32.totalorder %v171, 0
      %vm173 = vcmp.lt.s32.totalorder %v171, 16
      %vm174 = vmand %vm172, %vm173
      %v175 = vadd.s32 %v170, 1
      %vm176 = vcmp.ge.s32.totalorder %v175, 0
      %vm177 = vcmp.lt.s32.totalorder %v175, 16
      %vm178 = vmand %vm176, %vm177
      %v180 = vcombine.high %v169, %v169
      %181 = vrot.lane.b32.xlu0 %v169, 17
      %v182 = vpop.permute.xlu0 %181
      %183 = vrot.lane.b32.xlu0 %v180, 17
      %v184 = vpop.permute.xlu0 %183
      %vm185 = vcmask 138240
      %v186 = vsel %vm185, %v182, %v184
      %v189 = vsel %vm185, 0.0, %v182
      %v190 = vsel %vm174, 1, 0
      %v191 = vlaneseq
      %v192 = vshrl.u32 %v191, 7
      %v193 = vsub.s32 0, %v192
      %v194 = vrot.slane %v190, %v193
      %v195 = vlaneseq
      %v196 = vshrl.u32 %v195, 7
      %v197 = vsub.s32 1, %v196
      %v198 = vrot.slane %v190, %v197
      %vm199 = vcmp.eq.s32.totalorder %v194, 1
      %vm200 = vcmp.eq.s32.totalorder %v198, 1
      %v201 = vsel %vm199, %v189, 0.0
      %v202 = vsel %vm200, %v186, 0.0
      %v203 = vld [vmem:[%s2] sm:$0xf]
      %204 = vrot.lane.b32.xlu0 %v169, 16
      %v205 = vpop.permute.xlu0 %204
      %206 = vrot.lane.b32.xlu0 %v180, 16
      %v207 = vpop.permute.xlu0 %206
      %vm208 = vcmask 130048
      %v209 = vsel %vm208, %v205, %v207
      %v211 = vsel %vm208, 0.0, %v205
      %s212 = scalar_lea.vmem %s2, 4
      %v213 = vld [vmem:[%s212] sm:$0xf]
      %vm214 = vcmask 31744
      %v216 = vsel %vm214, %v213, 0
      %vm218 = vcmask 1043456
      %v220 = vsel %vm218, %v211, 0
      %v222 = vsel %vm218, %v209, 0
      %224 = vmatprep.subr.mxu0 %v222
      %225 = vmatpush1.msra.mxu0 %v220
      %226 = vmatprep.subr.mxu0 0.0
      %227 = vmatpush1.msra.mxu0 0.0
      %228 = vmatprep.subr.mxu0 0.0
      %229 = vmatpush1.msra.mxu0 0.0
      %230 = vmatprep.subr.mxu0 0.0
      %231 = vmatpush1.msra.mxu0 0.0
      %232 = vmatprep.subr.mxu0 0.0
      %233 = vmatpush1.msra.mxu0 0.0
      %234 = vmatprep.subr.mxu0 0.0
      %235 = vmatpush1.msra.mxu0 0.0
      %236 = vmatprep.subr.mxu0 0.0
      %237 = vmatpush1.msra.mxu0 0.0
      %238 = vmatprep.subr.mxu0 0.0
      %239 = vmatpush1.msra.mxu0 0.0
      %240 = vmatprep.subr.mxu0 0.0
      %241 = vmatpush1.msra.mxu0 0.0
      %242 = vmatprep.subr.mxu0 0.0
      %243 = vmatpush1.msra.mxu0 0.0
      %244 = vmatprep.subr.mxu0 0.0
      %245 = vmatpush1.msra.mxu0 0.0
      %246 = vmatprep.subr.mxu0 0.0
      %247 = vmatpush1.msra.mxu0 0.0
      %248 = vmatprep.subr.mxu0 0.0
      %249 = vmatpush1.msra.mxu0 0.0
      %250 = vmatprep.subr.mxu0 0.0
      %251 = vmatpush1.msra.mxu0 0.0
      %252 = vmatprep.subr.mxu0 0.0
      %253 = vmatpush1.msra.mxu0 0.0
      %254 = vmatprep.subr.mxu0 0.0
      %255 = vmatpush1.msra.mxu0 0.0
      %256 = vmatprep.subr.mxu0 0.0
      %257 = vmatpush1.msra.mxu0 0.0
      %258 = vmatprep.subr.mxu0 0.0
      %259 = vmatpush1.msra.mxu0 0.0
      %260 = vmatprep.subr.mxu0 0.0
      %261 = vmatpush1.msra.mxu0 0.0
      %262 = vmatprep.subr.mxu0 0.0
      %263 = vmatpush1.msra.mxu0 0.0
      %264 = vmatprep.subr.mxu0 0.0
      %265 = vmatpush1.msra.mxu0 0.0
      %266 = vmatprep.subr.mxu0 0.0
      %267 = vmatpush1.msra.mxu0 0.0
      %268 = vmatprep.subr.mxu0 0.0
      %269 = vmatpush1.msra.mxu0 0.0
      %270 = vmatprep.subr.mxu0 0.0
      %271 = vmatpush1.msra.mxu0 0.0
      %272 = vmatprep.subr.mxu0 0.0
      %273 = vmatpush1.msra.mxu0 0.0
      %274 = vmatprep.subr.mxu0 0.0
      %275 = vmatpush1.msra.mxu0 0.0
      %276 = vmatprep.subr.mxu0 0.0
      %277 = vmatpush1.msra.mxu0 0.0
      %278 = vmatprep.subr.mxu0 0.0
      %279 = vmatpush1.msra.mxu0 0.0
      %280 = vmatprep.subr.mxu0 0.0
      %281 = vmatpush1.msra.mxu0 0.0
      %282 = vmatprep.subr.mxu0 0.0
      %283 = vmatpush1.msra.mxu0 0.0
      %284 = vmatprep.subr.mxu0 0.0
      %285 = vmatpush1.msra.mxu0 0.0
      %286 = vmatprep.subr.mxu0 0.0
      %287 = vmatpush1.msra.mxu0 0.0
      %288 = vmatprep.mubr.f32.mxu0 0.0
      %289 = vmatmul.mubr.f32.gmra.mrb[0].mxu0 %v216
      %v290 = vpop.f32.mrb[0].mxu0
      %v291 = vadd.f32 0.0, %v290
      %v292 = vpop.f32.mrb[0].mxu0
      %v293 = vadd.f32 0.0, %v292
      %294 = vdwg.mxu0
      %v296 = vsel %vm214, %v203, 0
      %v299 = vsel %vm218, %v201, 0
      %v302 = vsel %vm218, %v202, 0
      %304 = vmatprep.subr.mxu0 %v302
      %305 = vmatpush1.msra.mxu0 %v299
      %306 = vmatprep.subr.mxu0 0.0
      %307 = vmatpush1.msra.mxu0 0.0
      %308 = vmatprep.subr.mxu0 0.0
      %309 = vmatpush1.msra.mxu0 0.0
      %310 = vmatprep.subr.mxu0 0.0
      %311 = vmatpush1.msra.mxu0 0.0
      %312 = vmatprep.subr.mxu0 0.0
      %313 = vmatpush1.msra.mxu0 0.0
      %314 = vmatprep.subr.mxu0 0.0
      %315 = vmatpush1.msra.mxu0 0.0
      %316 = vmatprep.subr.mxu0 0.0
      %317 = vmatpush1.msra.mxu0 0.0
      %318 = vmatprep.subr.mxu0 0.0
      %319 = vmatpush1.msra.mxu0 0.0
      %320 = vmatprep.subr.mxu0 0.0
      %321 = vmatpush1.msra.mxu0 0.0
      %322 = vmatprep.subr.mxu0 0.0
      %323 = vmatpush1.msra.mxu0 0.0
      %324 = vmatprep.subr.mxu0 0.0
      %325 = vmatpush1.msra.mxu0 0.0
      %326 = vmatprep.subr.mxu0 0.0
      %327 = vmatpush1.msra.mxu0 0.0
      %328 = vmatprep.subr.mxu0 0.0
      %329 = vmatpush1.msra.mxu0 0.0
      %330 = vmatprep.subr.mxu0 0.0
      %331 = vmatpush1.msra.mxu0 0.0
      %332 = vmatprep.subr.mxu0 0.0
      %333 = vmatpush1.msra.mxu0 0.0
      %334 = vmatprep.subr.mxu0 0.0
      %335 = vmatpush1.msra.mxu0 0.0
      %336 = vmatprep.subr.mxu0 0.0
      %337 = vmatpush1.msra.mxu0 0.0
      %338 = vmatprep.subr.mxu0 0.0
      %339 = vmatpush1.msra.mxu0 0.0
      %340 = vmatprep.subr.mxu0 0.0
      %341 = vmatpush1.msra.mxu0 0.0
      %342 = vmatprep.subr.mxu0 0.0
      %343 = vmatpush1.msra.mxu0 0.0
      %344 = vmatprep.subr.mxu0 0.0
      %345 = vmatpush1.msra.mxu0 0.0
      %346 = vmatprep.subr.mxu0 0.0
      %347 = vmatpush1.msra.mxu0 0.0
      %348 = vmatprep.subr.mxu0 0.0
      %349 = vmatpush1.msra.mxu0 0.0
      %350 = vmatprep.subr.mxu0 0.0
      %351 = vmatpush1.msra.mxu0 0.0
      %352 = vmatprep.subr.mxu0 0.0
      %353 = vmatpush1.msra.mxu0 0.0
      %354 = vmatprep.subr.mxu0 0.0
      %355 = vmatpush1.msra.mxu0 0.0
      %356 = vmatprep.subr.mxu0 0.0
      %357 = vmatpush1.msra.mxu0 0.0
      %358 = vmatprep.subr.mxu0 0.0
      %359 = vmatpush1.msra.mxu0 0.0
      %360 = vmatprep.subr.mxu0 0.0
      %361 = vmatpush1.msra.mxu0 0.0
      %362 = vmatprep.subr.mxu0 0.0
      %363 = vmatpush1.msra.mxu0 0.0
      %364 = vmatprep.subr.mxu0 0.0
      %365 = vmatpush1.msra.mxu0 0.0
      %366 = vmatprep.subr.mxu0 0.0
      %367 = vmatpush1.msra.mxu0 0.0
      %368 = vmatprep.mubr.f32.mxu0 0.0
      %369 = vmatmul.mubr.f32.gmra.mrb[0].mxu0 %v296
      %v370 = vpop.f32.mrb[0].mxu0
      %v371 = vadd.f32 %v291, %v370
      %v372 = vpop.f32.mrb[0].mxu0
      %v373 = vadd.f32 %v293, %v372
      %374 = vdwg.mxu0
      %375 = vrot.lane.b32.xlu0 %v169, 15
      %v376 = vpop.permute.xlu0 %375
      %377 = vrot.lane.b32.xlu0 %v180, 15
      %v378 = vpop.permute.xlu0 %377
      %vm379 = vcmask 121856
      %v380 = vsel %vm379, %v376, %v378
      %v383 = vsel %vm379, 0.0, %v376
      %v384 = vsel %vm178, 1, 0
      %v385 = vlaneseq
      %v386 = vshrl.u32 %v385, 7
      %v387 = vsub.s32 0, %v386
      %v388 = vrot.slane %v384, %v387
      %v389 = vlaneseq
      %v390 = vshrl.u32 %v389, 7
      %v391 = vsub.s32 1, %v390
      %v392 = vrot.slane %v384, %v391
      %vm393 = vcmp.eq.s32.totalorder %v388, 1
      %vm394 = vcmp.eq.s32.totalorder %v392, 1
      %v395 = vsel %vm393, %v383, 0.0
      %v396 = vsel %vm394, %v380, 0.0
      %s397 = scalar_lea.vmem %s2, 8
      %v398 = vld [vmem:[%s397] sm:$0xf]
      %v400 = vsel %vm214, %v398, 0
      %v403 = vsel %vm218, %v395, 0
      %v406 = vsel %vm218, %v396, 0
      %408 = vmatprep.subr.mxu0 %v406
      %409 = vmatpush1.msra.mxu0 %v403
      %410 = vmatprep.subr.mxu0 0.0
      %411 = vmatpush1.msra.mxu0 0.0
      %412 = vmatprep.subr.mxu0 0.0
      %413 = vmatpush1.msra.mxu0 0.0
      %414 = vmatprep.subr.mxu0 0.0
      %415 = vmatpush1.msra.mxu0 0.0
      %416 = vmatprep.subr.mxu0 0.0
      %417 = vmatpush1.msra.mxu0 0.0
      %418 = vmatprep.subr.mxu0 0.0
      %419 = vmatpush1.msra.mxu0 0.0
      %420 = vmatprep.subr.mxu0 0.0
      %421 = vmatpush1.msra.mxu0 0.0
      %422 = vmatprep.subr.mxu0 0.0
      %423 = vmatpush1.msra.mxu0 0.0
      %424 = vmatprep.subr.mxu0 0.0
      %425 = vmatpush1.msra.mxu0 0.0
      %426 = vmatprep.subr.mxu0 0.0
      %427 = vmatpush1.msra.mxu0 0.0
      %428 = vmatprep.subr.mxu0 0.0
      %429 = vmatpush1.msra.mxu0 0.0
      %430 = vmatprep.subr.mxu0 0.0
      %431 = vmatpush1.msra.mxu0 0.0
      %432 = vmatprep.subr.mxu0 0.0
      %433 = vmatpush1.msra.mxu0 0.0
      %434 = vmatprep.subr.mxu0 0.0
      %435 = vmatpush1.msra.mxu0 0.0
      %436 = vmatprep.subr.mxu0 0.0
      %437 = vmatpush1.msra.mxu0 0.0
      %438 = vmatprep.subr.mxu0 0.0
      %439 = vmatpush1.msra.mxu0 0.0
      %440 = vmatprep.subr.mxu0 0.0
      %441 = vmatpush1.msra.mxu0 0.0
      %442 = vmatprep.subr.mxu0 0.0
      %443 = vmatpush1.msra.mxu0 0.0
      %444 = vmatprep.subr.mxu0 0.0
      %445 = vmatpush1.msra.mxu0 0.0
      %446 = vmatprep.subr.mxu0 0.0
      %447 = vmatpush1.msra.mxu0 0.0
      %448 = vmatprep.subr.mxu0 0.0
      %449 = vmatpush1.msra.mxu0 0.0
      %450 = vmatprep.subr.mxu0 0.0
      %451 = vmatpush1.msra.mxu0 0.0
      %452 = vmatprep.subr.mxu0 0.0
      %453 = vmatpush1.msra.mxu0 0.0
      %454 = vmatprep.subr.mxu0 0.0
      %455 = vmatpush1.msra.mxu0 0.0
      %456 = vmatprep.subr.mxu0 0.0
      %457 = vmatpush1.msra.mxu0 0.0
      %458 = vmatprep.subr.mxu0 0.0
      %459 = vmatpush1.msra.mxu0 0.0
      %460 = vmatprep.subr.mxu0 0.0
      %461 = vmatpush1.msra.mxu0 0.0
      %462 = vmatprep.subr.mxu0 0.0
      %463 = vmatpush1.msra.mxu0 0.0
      %464 = vmatprep.subr.mxu0 0.0
      %465 = vmatpush1.msra.mxu0 0.0
      %466 = vmatprep.subr.mxu0 0.0
      %467 = vmatpush1.msra.mxu0 0.0
      %468 = vmatprep.subr.mxu0 0.0
      %469 = vmatpush1.msra.mxu0 0.0
      %470 = vmatprep.subr.mxu0 0.0
      %471 = vmatpush1.msra.mxu0 0.0
      %472 = vmatprep.mubr.f32.mxu0 0.0
      %473 = vmatmul.mubr.f32.gmra.mrb[0].mxu0 %v400
      %v474 = vpop.f32.mrb[0].mxu0
      %v475 = vadd.f32 0.0, %v474
      %v476 = vpop.f32.mrb[0].mxu0
      %v477 = vadd.f32 0.0, %v476
      %478 = vdwg.mxu0
      %v479 = vadd.f32 %v371, %v475
      %v480 = vadd.f32 %v373, %v477
      %481 = vrot.lane.b32.xlu0 %v169, 1
      %v482 = vpop.permute.xlu0 %481
      %483 = vrot.lane.b32.xlu0 %v180, 1
      %v484 = vpop.permute.xlu0 %483
      %vm485 = vcmask 7168
      %v486 = vsel %vm485, %v482, %v484
      %v489 = vsel %vm485, 0.0, %v482
      %v490 = vsel %vm199, %v489, 0.0
      %v491 = vsel %vm200, %v486, 0.0
      %s492 = scalar_lea.vmem %s2, 12
      %v493 = vld [vmem:[%s492] sm:$0xf]
      %v495 = vsel %vm214, %v493, 0
      %v498 = vsel %vm218, %v490, 0
      %v501 = vsel %vm218, %v491, 0
      %503 = vmatprep.subr.mxu0 %v501
      %504 = vmatpush1.msra.mxu0 %v498
      %505 = vmatprep.subr.mxu0 0.0
      %506 = vmatpush1.msra.mxu0 0.0
      %507 = vmatprep.subr.mxu0 0.0
      %508 = vmatpush1.msra.mxu0 0.0
      %509 = vmatprep.subr.mxu0 0.0
      %510 = vmatpush1.msra.mxu0 0.0
      %511 = vmatprep.subr.mxu0 0.0
      %512 = vmatpush1.msra.mxu0 0.0
      %513 = vmatprep.subr.mxu0 0.0
      %514 = vmatpush1.msra.mxu0 0.0
      %515 = vmatprep.subr.mxu0 0.0
      %516 = vmatpush1.msra.mxu0 0.0
      %517 = vmatprep.subr.mxu0 0.0
      %518 = vmatpush1.msra.mxu0 0.0
      %519 = vmatprep.subr.mxu0 0.0
      %520 = vmatpush1.msra.mxu0 0.0
      %521 = vmatprep.subr.mxu0 0.0
      %522 = vmatpush1.msra.mxu0 0.0
      %523 = vmatprep.subr.mxu0 0.0
      %524 = vmatpush1.msra.mxu0 0.0
      %525 = vmatprep.subr.mxu0 0.0
      %526 = vmatpush1.msra.mxu0 0.0
      %527 = vmatprep.subr.mxu0 0.0
      %528 = vmatpush1.msra.mxu0 0.0
      %529 = vmatprep.subr.mxu0 0.0
      %530 = vmatpush1.msra.mxu0 0.0
      %531 = vmatprep.subr.mxu0 0.0
      %532 = vmatpush1.msra.mxu0 0.0
      %533 = vmatprep.subr.mxu0 0.0
      %534 = vmatpush1.msra.mxu0 0.0
      %535 = vmatprep.subr.mxu0 0.0
      %536 = vmatpush1.msra.mxu0 0.0
      %537 = vmatprep.subr.mxu0 0.0
      %538 = vmatpush1.msra.mxu0 0.0
      %539 = vmatprep.subr.mxu0 0.0
      %540 = vmatpush1.msra.mxu0 0.0
      %541 = vmatprep.subr.mxu0 0.0
      %542 = vmatpush1.msra.mxu0 0.0
      %543 = vmatprep.subr.mxu0 0.0
      %544 = vmatpush1.msra.mxu0 0.0
      %545 = vmatprep.subr.mxu0 0.0
      %546 = vmatpush1.msra.mxu0 0.0
      %547 = vmatprep.subr.mxu0 0.0
      %548 = vmatpush1.msra.mxu0 0.0
      %549 = vmatprep.subr.mxu0 0.0
      %550 = vmatpush1.msra.mxu0 0.0
      %551 = vmatprep.subr.mxu0 0.0
      %552 = vmatpush1.msra.mxu0 0.0
      %553 = vmatprep.subr.mxu0 0.0
      %554 = vmatpush1.msra.mxu0 0.0
      %555 = vmatprep.subr.mxu0 0.0
      %556 = vmatpush1.msra.mxu0 0.0
      %557 = vmatprep.subr.mxu0 0.0
      %558 = vmatpush1.msra.mxu0 0.0
      %559 = vmatprep.subr.mxu0 0.0
      %560 = vmatpush1.msra.mxu0 0.0
      %561 = vmatprep.subr.mxu0 0.0
      %562 = vmatpush1.msra.mxu0 0.0
      %563 = vmatprep.subr.mxu0 0.0
      %564 = vmatpush1.msra.mxu0 0.0
      %565 = vmatprep.subr.mxu0 0.0
      %566 = vmatpush1.msra.mxu0 0.0
      %567 = vmatprep.mubr.f32.mxu0 0.0
      %568 = vmatmul.mubr.f32.gmra.mrb[0].mxu0 %v495
      %v569 = vpop.f32.mrb[0].mxu0
      %v570 = vadd.f32 0.0, %v569
      %v571 = vpop.f32.mrb[0].mxu0
      %v572 = vadd.f32 0.0, %v571
      %573 = vdwg.mxu0
      %v574 = vadd.f32 %v479, %v570
      %v575 = vadd.f32 %v480, %v572
      %s576 = scalar_lea.vmem %s2, 16
      %v577 = vld [vmem:[%s576] sm:$0xf]
      %v579 = vsel %vm214, %v577, 0
      %v581 = vsel %vm218, %v169, 0
      %v583 = vsel %vm218, %v180, 0
      %585 = vmatprep.subr.mxu0 %v583
      %586 = vmatpush1.msra.mxu0 %v581
      %587 = vmatprep.subr.mxu0 0.0
      %588 = vmatpush1.msra.mxu0 0.0
      %589 = vmatprep.subr.mxu0 0.0
      %590 = vmatpush1.msra.mxu0 0.0
      %591 = vmatprep.subr.mxu0 0.0
      %592 = vmatpush1.msra.mxu0 0.0
      %593 = vmatprep.subr.mxu0 0.0
      %594 = vmatpush1.msra.mxu0 0.0
      %595 = vmatprep.subr.mxu0 0.0
      %596 = vmatpush1.msra.mxu0 0.0
      %597 = vmatprep.subr.mxu0 0.0
      %598 = vmatpush1.msra.mxu0 0.0
      %599 = vmatprep.subr.mxu0 0.0
      %600 = vmatpush1.msra.mxu0 0.0
      %601 = vmatprep.subr.mxu0 0.0
      %602 = vmatpush1.msra.mxu0 0.0
      %603 = vmatprep.subr.mxu0 0.0
      %604 = vmatpush1.msra.mxu0 0.0
      %605 = vmatprep.subr.mxu0 0.0
      %606 = vmatpush1.msra.mxu0 0.0
      %607 = vmatprep.subr.mxu0 0.0
      %608 = vmatpush1.msra.mxu0 0.0
      %609 = vmatprep.subr.mxu0 0.0
      %610 = vmatpush1.msra.mxu0 0.0
      %611 = vmatprep.subr.mxu0 0.0
      %612 = vmatpush1.msra.mxu0 0.0
      %613 = vmatprep.subr.mxu0 0.0
      %614 = vmatpush1.msra.mxu0 0.0
      %615 = vmatprep.subr.mxu0 0.0
      %616 = vmatpush1.msra.mxu0 0.0
      %617 = vmatprep.subr.mxu0 0.0
      %618 = vmatpush1.msra.mxu0 0.0
      %619 = vmatprep.subr.mxu0 0.0
      %620 = vmatpush1.msra.mxu0 0.0
      %621 = vmatprep.subr.mxu0 0.0
      %622 = vmatpush1.msra.mxu0 0.0
      %623 = vmatprep.subr.mxu0 0.0
      %624 = vmatpush1.msra.mxu0 0.0
      %625 = vmatprep.subr.mxu0 0.0
      %626 = vmatpush1.msra.mxu0 0.0
      %627 = vmatprep.subr.mxu0 0.0
      %628 = vmatpush1.msra.mxu0 0.0
      %629 = vmatprep.subr.mxu0 0.0
      %630 = vmatpush1.msra.mxu0 0.0
      %631 = vmatprep.subr.mxu0 0.0
      %632 = vmatpush1.msra.mxu0 0.0
      %633 = vmatprep.subr.mxu0 0.0
      %634 = vmatpush1.msra.mxu0 0.0
      %635 = vmatprep.subr.mxu0 0.0
      %636 = vmatpush1.msra.mxu0 0.0
      %637 = vmatprep.subr.mxu0 0.0
      %638 = vmatpush1.msra.mxu0 0.0
      %639 = vmatprep.subr.mxu0 0.0
      %640 = vmatpush1.msra.mxu0 0.0
      %641 = vmatprep.subr.mxu0 0.0
      %642 = vmatpush1.msra.mxu0 0.0
      %643 = vmatprep.subr.mxu0 0.0
      %644 = vmatpush1.msra.mxu0 0.0
      %645 = vmatprep.subr.mxu0 0.0
      %646 = vmatpush1.msra.mxu0 0.0
      %647 = vmatprep.subr.mxu0 0.0
      %648 = vmatpush1.msra.mxu0 0.0
      %649 = vmatprep.mubr.f32.mxu0 0.0
      %650 = vmatmul.mubr.f32.gmra.mrb[0].mxu0 %v579
      %v651 = vpop.f32.mrb[0].mxu0
      %v652 = vadd.f32 0.0, %v651
      %v653 = vpop.f32.mrb[0].mxu0
      %v654 = vadd.f32 0.0, %v653
      %655 = vdwg.mxu0
      %v656 = vadd.f32 %v574, %v652
      %v657 = vadd.f32 %v575, %v654
      %658 = vrot.lane.b32.xlu0 %v169, 127
      %v659 = vpop.permute.xlu0 %658
      %660 = vrot.lane.b32.xlu0 %v180, 127
      %v661 = vpop.permute.xlu0 %660
      %vm662 = vcmask 1039360
      %v663 = vsel %vm662, %v659, %v661
      %v666 = vsel %vm662, %v661, 0.0
      %v667 = vsel %vm393, %v663, 0.0
      %v668 = vsel %vm394, %v666, 0.0
      %s669 = scalar_lea.vmem %s2, 20
      %v670 = vld [vmem:[%s669] sm:$0xf]
      %v672 = vsel %vm214, %v670, 0
      %v675 = vsel %vm218, %v667, 0
      %v678 = vsel %vm218, %v668, 0
      %680 = vmatprep.subr.mxu0 %v678
      %681 = vmatpush1.msra.mxu0 %v675
      %682 = vmatprep.subr.mxu0 0.0
      %683 = vmatpush1.msra.mxu0 0.0
      %684 = vmatprep.subr.mxu0 0.0
      %685 = vmatpush1.msra.mxu0 0.0
      %686 = vmatprep.subr.mxu0 0.0
      %687 = vmatpush1.msra.mxu0 0.0
      %688 = vmatprep.subr.mxu0 0.0
      %689 = vmatpush1.msra.mxu0 0.0
      %690 = vmatprep.subr.mxu0 0.0
      %691 = vmatpush1.msra.mxu0 0.0
      %692 = vmatprep.subr.mxu0 0.0
      %693 = vmatpush1.msra.mxu0 0.0
      %694 = vmatprep.subr.mxu0 0.0
      %695 = vmatpush1.msra.mxu0 0.0
      %696 = vmatprep.subr.mxu0 0.0
      %697 = vmatpush1.msra.mxu0 0.0
      %698 = vmatprep.subr.mxu0 0.0
      %699 = vmatpush1.msra.mxu0 0.0
      %700 = vmatprep.subr.mxu0 0.0
      %701 = vmatpush1.msra.mxu0 0.0
      %702 = vmatprep.subr.mxu0 0.0
      %703 = vmatpush1.msra.mxu0 0.0
      %704 = vmatprep.subr.mxu0 0.0
      %705 = vmatpush1.msra.mxu0 0.0
      %706 = vmatprep.subr.mxu0 0.0
      %707 = vmatpush1.msra.mxu0 0.0
      %708 = vmatprep.subr.mxu0 0.0
      %709 = vmatpush1.msra.mxu0 0.0
      %710 = vmatprep.subr.mxu0 0.0
      %711 = vmatpush1.msra.mxu0 0.0
      %712 = vmatprep.subr.mxu0 0.0
      %713 = vmatpush1.msra.mxu0 0.0
      %714 = vmatprep.subr.mxu0 0.0
      %715 = vmatpush1.msra.mxu0 0.0
      %716 = vmatprep.subr.mxu0 0.0
      %717 = vmatpush1.msra.mxu0 0.0
      %718 = vmatprep.subr.mxu0 0.0
      %719 = vmatpush1.msra.mxu0 0.0
      %720 = vmatprep.subr.mxu0 0.0
      %721 = vmatpush1.msra.mxu0 0.0
      %722 = vmatprep.subr.mxu0 0.0
      %723 = vmatpush1.msra.mxu0 0.0
      %724 = vmatprep.subr.mxu0 0.0
      %725 = vmatpush1.msra.mxu0 0.0
      %726 = vmatprep.subr.mxu0 0.0
      %727 = vmatpush1.msra.mxu0 0.0
      %728 = vmatprep.subr.mxu0 0.0
      %729 = vmatpush1.msra.mxu0 0.0
      %730 = vmatprep.subr.mxu0 0.0
      %731 = vmatpush1.msra.mxu0 0.0
      %732 = vmatprep.subr.mxu0 0.0
      %733 = vmatpush1.msra.mxu0 0.0
      %734 = vmatprep.subr.mxu0 0.0
      %735 = vmatpush1.msra.mxu0 0.0
      %736 = vmatprep.subr.mxu0 0.0
      %737 = vmatpush1.msra.mxu0 0.0
      %738 = vmatprep.subr.mxu0 0.0
      %739 = vmatpush1.msra.mxu0 0.0
      %740 = vmatprep.subr.mxu0 0.0
      %741 = vmatpush1.msra.mxu0 0.0
      %742 = vmatprep.subr.mxu0 0.0
      %743 = vmatpush1.msra.mxu0 0.0
      %744 = vmatprep.mubr.f32.mxu0 0.0
      %745 = vmatmul.mubr.f32.gmra.mrb[0].mxu0 %v672
      %v746 = vpop.f32.mrb[0].mxu0
      %v747 = vadd.f32 0.0, %v746
      %v748 = vpop.f32.mrb[0].mxu0
      %v749 = vadd.f32 0.0, %v748
      %750 = vdwg.mxu0
      %v751 = vadd.f32 %v656, %v747
      %v752 = vadd.f32 %v657, %v749
      %753 = vrot.lane.b32.xlu0 %v169, 113
      %v754 = vpop.permute.xlu0 %753
      %755 = vrot.lane.b32.xlu0 %v180, 113
      %v756 = vpop.permute.xlu0 %755
      %vm757 = vcmask 924672
      %v758 = vsel %vm757, %v754, %v756
      %v761 = vsel %vm757, %v756, 0.0
      %v762 = vsel %vm199, %v758, 0.0
      %v763 = vsel %vm200, %v761, 0.0
      %s764 = scalar_lea.vmem %s2, 24
      %v765 = vld [vmem:[%s764] sm:$0xf]
      %v767 = vsel %vm214, %v765, 0
      %v770 = vsel %vm218, %v762, 0
      %v773 = vsel %vm218, %v763, 0
      %775 = vmatprep.subr.mxu0 %v773
      %776 = vmatpush1.msra.mxu0 %v770
      %777 = vmatprep.subr.mxu0 0.0
      %778 = vmatpush1.msra.mxu0 0.0
      %779 = vmatprep.subr.mxu0 0.0
      %780 = vmatpush1.msra.mxu0 0.0
      %781 = vmatprep.subr.mxu0 0.0
      %782 = vmatpush1.msra.mxu0 0.0
      %783 = vmatprep.subr.mxu0 0.0
      %784 = vmatpush1.msra.mxu0 0.0
      %785 = vmatprep.subr.mxu0 0.0
      %786 = vmatpush1.msra.mxu0 0.0
      %787 = vmatprep.subr.mxu0 0.0
      %788 = vmatpush1.msra.mxu0 0.0
      %789 = vmatprep.subr.mxu0 0.0
      %790 = vmatpush1.msra.mxu0 0.0
      %791 = vmatprep.subr.mxu0 0.0
      %792 = vmatpush1.msra.mxu0 0.0
      %793 = vmatprep.subr.mxu0 0.0
      %794 = vmatpush1.msra.mxu0 0.0
      %795 = vmatprep.subr.mxu0 0.0
      %796 = vmatpush1.msra.mxu0 0.0
      %797 = vmatprep.subr.mxu0 0.0
      %798 = vmatpush1.msra.mxu0 0.0
      %799 = vmatprep.subr.mxu0 0.0
      %800 = vmatpush1.msra.mxu0 0.0
      %801 = vmatprep.subr.mxu0 0.0
      %802 = vmatpush1.msra.mxu0 0.0
      %803 = vmatprep.subr.mxu0 0.0
      %804 = vmatpush1.msra.mxu0 0.0
      %805 = vmatprep.subr.mxu0 0.0
      %806 = vmatpush1.msra.mxu0 0.0
      %807 = vmatprep.subr.mxu0 0.0
      %808 = vmatpush1.msra.mxu0 0.0
      %809 = vmatprep.subr.mxu0 0.0
      %810 = vmatpush1.msra.mxu0 0.0
      %811 = vmatprep.subr.mxu0 0.0
      %812 = vmatpush1.msra.mxu0 0.0
      %813 = vmatprep.subr.mxu0 0.0
      %814 = vmatpush1.msra.mxu0 0.0
      %815 = vmatprep.subr.mxu0 0.0
      %816 = vmatpush1.msra.mxu0 0.0
      %817 = vmatprep.subr.mxu0 0.0
      %818 = vmatpush1.msra.mxu0 0.0
      %819 = vmatprep.subr.mxu0 0.0
      %820 = vmatpush1.msra.mxu0 0.0
      %821 = vmatprep.subr.mxu0 0.0
      %822 = vmatpush1.msra.mxu0 0.0
      %823 = vmatprep.subr.mxu0 0.0
      %824 = vmatpush1.msra.mxu0 0.0
      %825 = vmatprep.subr.mxu0 0.0
      %826 = vmatpush1.msra.mxu0 0.0
      %827 = vmatprep.subr.mxu0 0.0
      %828 = vmatpush1.msra.mxu0 0.0
      %829 = vmatprep.subr.mxu0 0.0
      %830 = vmatpush1.msra.mxu0 0.0
      %831 = vmatprep.subr.mxu0 0.0
      %832 = vmatpush1.msra.mxu0 0.0
      %833 = vmatprep.subr.mxu0 0.0
      %834 = vmatpush1.msra.mxu0 0.0
      %835 = vmatprep.subr.mxu0 0.0
      %836 = vmatpush1.msra.mxu0 0.0
      %837 = vmatprep.subr.mxu0 0.0
      %838 = vmatpush1.msra.mxu0 0.0
      %839 = vmatprep.mubr.f32.mxu0 0.0
      %840 = vmatmul.mubr.f32.gmra.mrb[0].mxu0 %v767
      %v841 = vpop.f32.mrb[0].mxu0
      %v842 = vadd.f32 0.0, %v841
      %v843 = vpop.f32.mrb[0].mxu0
      %v844 = vadd.f32 0.0, %v843
      %845 = vdwg.mxu0
      %v846 = vadd.f32 %v751, %v842
      %v847 = vadd.f32 %v752, %v844
      %848 = vrot.lane.b32.xlu0 %v169, 112
      %v849 = vpop.permute.xlu0 %848
      %850 = vrot.lane.b32.xlu0 %v180, 112
      %v851 = vpop.permute.xlu0 %850
      %vm852 = vcmask 916480
      %v853 = vsel %vm852, %v849, %v851
      %v855 = vsel %vm852, %v851, 0.0
      %s856 = scalar_lea.vmem %s2, 28
      %v857 = vld [vmem:[%s856] sm:$0xf]
      %v859 = vsel %vm214, %v857, 0
      %v861 = vsel %vm218, %v853, 0
      %v864 = vsel %vm218, %v855, 0
      %866 = vmatprep.subr.mxu0 %v864
      %867 = vmatpush1.msra.mxu0 %v861
      %868 = vmatprep.subr.mxu0 0.0
      %869 = vmatpush1.msra.mxu0 0.0
      %870 = vmatprep.subr.mxu0 0.0
      %871 = vmatpush1.msra.mxu0 0.0
      %872 = vmatprep.subr.mxu0 0.0
      %873 = vmatpush1.msra.mxu0 0.0
      %874 = vmatprep.subr.mxu0 0.0
      %875 = vmatpush1.msra.mxu0 0.0
      %876 = vmatprep.subr.mxu0 0.0
      %877 = vmatpush1.msra.mxu0 0.0
      %878 = vmatprep.subr.mxu0 0.0
      %879 = vmatpush1.msra.mxu0 0.0
      %880 = vmatprep.subr.mxu0 0.0
      %881 = vmatpush1.msra.mxu0 0.0
      %882 = vmatprep.subr.mxu0 0.0
      %883 = vmatpush1.msra.mxu0 0.0
      %884 = vmatprep.subr.mxu0 0.0
      %885 = vmatpush1.msra.mxu0 0.0
      %886 = vmatprep.subr.mxu0 0.0
      %887 = vmatpush1.msra.mxu0 0.0
      %888 = vmatprep.subr.mxu0 0.0
      %889 = vmatpush1.msra.mxu0 0.0
      %890 = vmatprep.subr.mxu0 0.0
      %891 = vmatpush1.msra.mxu0 0.0
      %892 = vmatprep.subr.mxu0 0.0
      %893 = vmatpush1.msra.mxu0 0.0
      %894 = vmatprep.subr.mxu0 0.0
      %895 = vmatpush1.msra.mxu0 0.0
      %896 = vmatprep.subr.mxu0 0.0
      %897 = vmatpush1.msra.mxu0 0.0
      %898 = vmatprep.subr.mxu0 0.0
      %899 = vmatpush1.msra.mxu0 0.0
      %900 = vmatprep.subr.mxu0 0.0
      %901 = vmatpush1.msra.mxu0 0.0
      %902 = vmatprep.subr.mxu0 0.0
      %903 = vmatpush1.msra.mxu0 0.0
      %904 = vmatprep.subr.mxu0 0.0
      %905 = vmatpush1.msra.mxu0 0.0
      %906 = vmatprep.subr.mxu0 0.0
      %907 = vmatpush1.msra.mxu0 0.0
      %908 = vmatprep.subr.mxu0 0.0
      %909 = vmatpush1.msra.mxu0 0.0
      %910 = vmatprep.subr.mxu0 0.0
      %911 = vmatpush1.msra.mxu0 0.0
      %912 = vmatprep.subr.mxu0 0.0
      %913 = vmatpush1.msra.mxu0 0.0
      %914 = vmatprep.subr.mxu0 0.0
      %915 = vmatpush1.msra.mxu0 0.0
      %916 = vmatprep.subr.mxu0 0.0
      %917 = vmatpush1.msra.mxu0 0.0
      %918 = vmatprep.subr.mxu0 0.0
      %919 = vmatpush1.msra.mxu0 0.0
      %920 = vmatprep.subr.mxu0 0.0
      %921 = vmatpush1.msra.mxu0 0.0
      %922 = vmatprep.subr.mxu0 0.0
      %923 = vmatpush1.msra.mxu0 0.0
      %924 = vmatprep.subr.mxu0 0.0
      %925 = vmatpush1.msra.mxu0 0.0
      %926 = vmatprep.subr.mxu0 0.0
      %927 = vmatpush1.msra.mxu0 0.0
      %928 = vmatprep.subr.mxu0 0.0
      %929 = vmatpush1.msra.mxu0 0.0
      %930 = vmatprep.mubr.f32.mxu0 0.0
      %931 = vmatmul.mubr.f32.gmra.mrb[0].mxu0 %v859
      %v932 = vpop.f32.mrb[0].mxu0
      %v933 = vadd.f32 0.0, %v932
      %v934 = vpop.f32.mrb[0].mxu0
      %v935 = vadd.f32 0.0, %v934
      %936 = vdwg.mxu0
      %v937 = vadd.f32 %v846, %v933
      %v938 = vadd.f32 %v847, %v935
      %939 = vrot.lane.b32.xlu0 %v169, 111
      %v940 = vpop.permute.xlu0 %939
      %941 = vrot.lane.b32.xlu0 %v180, 111
      %v942 = vpop.permute.xlu0 %941
      %vm943 = vcmask 908288
      %v944 = vsel %vm943, %v940, %v942
      %v947 = vsel %vm943, %v942, 0.0
      %v948 = vsel %vm393, %v944, 0.0
      %v949 = vsel %vm394, %v947, 0.0
      %s950 = scalar_lea.vmem %s2, 32
      %v951 = vld [vmem:[%s950] sm:$0xf]
      %v953 = vsel %vm214, %v951, 0
      %v956 = vsel %vm218, %v948, 0
      %v959 = vsel %vm218, %v949, 0
      %961 = vmatprep.subr.mxu0 %v959
      %962 = vmatpush1.msra.mxu0 %v956
      %963 = vmatprep.subr.mxu0 0.0
      %964 = vmatpush1.msra.mxu0 0.0
      %965 = vmatprep.subr.mxu0 0.0
      %966 = vmatpush1.msra.mxu0 0.0
      %967 = vmatprep.subr.mxu0 0.0
      %968 = vmatpush1.msra.mxu0 0.0
      %969 = vmatprep.subr.mxu0 0.0
      %970 = vmatpush1.msra.mxu0 0.0
      %971 = vmatprep.subr.mxu0 0.0
      %972 = vmatpush1.msra.mxu0 0.0
      %973 = vmatprep.subr.mxu0 0.0
      %974 = vmatpush1.msra.mxu0 0.0
      %975 = vmatprep.subr.mxu0 0.0
      %976 = vmatpush1.msra.mxu0 0.0
      %977 = vmatprep.subr.mxu0 0.0
      %978 = vmatpush1.msra.mxu0 0.0
      %979 = vmatprep.subr.mxu0 0.0
      %980 = vmatpush1.msra.mxu0 0.0
      %981 = vmatprep.subr.mxu0 0.0
      %982 = vmatpush1.msra.mxu0 0.0
      %983 = vmatprep.subr.mxu0 0.0
      %984 = vmatpush1.msra.mxu0 0.0
      %985 = vmatprep.subr.mxu0 0.0
      %986 = vmatpush1.msra.mxu0 0.0
      %987 = vmatprep.subr.mxu0 0.0
      %988 = vmatpush1.msra.mxu0 0.0
      %989 = vmatprep.subr.mxu0 0.0
      %990 = vmatpush1.msra.mxu0 0.0
      %991 = vmatprep.subr.mxu0 0.0
      %992 = vmatpush1.msra.mxu0 0.0
      %993 = vmatprep.subr.mxu0 0.0
      %994 = vmatpush1.msra.mxu0 0.0
      %995 = vmatprep.subr.mxu0 0.0
      %996 = vmatpush1.msra.mxu0 0.0
      %997 = vmatprep.subr.mxu0 0.0
      %998 = vmatpush1.msra.mxu0 0.0
      %999 = vmatprep.subr.mxu0 0.0
      %1000 = vmatpush1.msra.mxu0 0.0
      %1001 = vmatprep.subr.mxu0 0.0
      %1002 = vmatpush1.msra.mxu0 0.0
      %1003 = vmatprep.subr.mxu0 0.0
      %1004 = vmatpush1.msra.mxu0 0.0
      %1005 = vmatprep.subr.mxu0 0.0
      %1006 = vmatpush1.msra.mxu0 0.0
      %1007 = vmatprep.subr.mxu0 0.0
      %1008 = vmatpush1.msra.mxu0 0.0
      %1009 = vmatprep.subr.mxu0 0.0
      %1010 = vmatpush1.msra.mxu0 0.0
      %1011 = vmatprep.subr.mxu0 0.0
      %1012 = vmatpush1.msra.mxu0 0.0
      %1013 = vmatprep.subr.mxu0 0.0
      %1014 = vmatpush1.msra.mxu0 0.0
      %1015 = vmatprep.subr.mxu0 0.0
      %1016 = vmatpush1.msra.mxu0 0.0
      %1017 = vmatprep.subr.mxu0 0.0
      %1018 = vmatpush1.msra.mxu0 0.0
      %1019 = vmatprep.subr.mxu0 0.0
      %1020 = vmatpush1.msra.mxu0 0.0
      %1021 = vmatprep.subr.mxu0 0.0
      %1022 = vmatpush1.msra.mxu0 0.0
      %1023 = vmatprep.subr.mxu0 0.0
      %1024 = vmatpush1.msra.mxu0 0.0
      %1025 = vmatprep.mubr.f32.mxu0 0.0
      %1026 = vmatmul.mubr.f32.gmra.mrb[0].mxu0 %v953
      %v1027 = vpop.f32.mrb[0].mxu0
      %v1028 = vadd.f32 0.0, %v1027
      %v1029 = vpop.f32.mrb[0].mxu0
      %v1030 = vadd.f32 0.0, %v1029
      %1031 = vdwg.mxu0
      %v1032 = vadd.f32 %v937, %v1028
      %v1033 = vadd.f32 %v938, %v1030
      %v1034 = vsel %vm218, %v1032, 0.0
      %v1035 = vsel %vm218, %v1033, 0.0
      %v1036 = vadd.f32 %v1034, %v1035
      %1037 = vadd.xlane.f32.xlu0 %v1036
      %v1038 = vpop.xlane.xlu0 %1037
      %vm1039 = vcmask 3072
      %1040 = vst.msk [vmem:[%s168] sm:$0xf] %vm1039, %v1038
      %v1041 = vmul.f32 %v1032, %v1032
      %v1042 = vmul.f32 %v1033, %v1033
      %v1043 = vsel %vm218, %v1041, 0.0
      %v1044 = vsel %vm218, %v1042, 0.0
      %v1045 = vadd.f32 %v1043, %v1044
      %1046 = vadd.xlane.f32.xlu0 %v1045
      %v1047 = vpop.xlane.xlu0 %1046
      %vm1048 = vcmask 11272
      %1049 = vst.msk [vmem:[%s168] sm:$0xf] %vm1048, %v1047
      %p1050 = scmp.lt.s32.totalorder %s14, 1
      %s1051 = scalar_select %p1050, %s14, 1
      %s1052 = smul.addr %s1051, 4
      %s1053 = scalar_lea.vmem %s3, %s1052
      // Predicated region
      $region33: #{res_block.2} parent=31 // pred_check
        %p1054 = pneg %p100
      $region34: #{res_block.2} parent=31 // pred_check_branch
        %1056 = sbr.rel (%p1054) target = $region36
      $region35: #{res_block.2} parent=31 // pred_region
        _
      $region36: #{res_block.2} parent=31 // pred_fallthru
        _
    $region32: #{res_block.2} parent=5 // pred_fallthru
      _
    %p1057 = scmp.le.s32.totalorder 2, %s9
    // Predicated region
    $region37: #{res_block.2} parent=5 // pred_check
      %p1058 = pneg %p1057
    $region38: #{res_block.2} parent=5 // pred_check_branch
      %1060 = sbr.rel (%p1058) target = $region40
    $region39: #{res_block.2} parent=5 // pred_region
      %s1061 = ssub.s32 %s9, 2
      // Predicated region
      $region41: #{res_block.2} parent=39 // pred_check
        %p1062 = pneg %p106
      $region42: #{res_block.2} parent=39 // pred_check_branch
        %1064 = sbr.rel (%p1062) target = $region44
      $region43: #{res_block.2} parent=39 // pred_region
        %p1065 = scmp.lt.s32.totalorder %s15, 1
        %s1066 = scalar_select %p1065, %s15, 1
        %s1067 = smul.addr %s1066, 4
        %s1068 = scalar_lea.vmem %s3, %s1067
      $region44: #{res_block.2} parent=39 // pred_fallthru
        _
    $region40: #{res_block.2} parent=5 // pred_fallthru
      _
  $region6: #{res_block.2} parent=0 // loop_footer
    %s13 = sadd.s32 1, %s9
  $region7: #{res_block.2} parent=0 // loop_footer_branch
    %8 = sbr.rel target = $region3
  $region8: #{res_block.2} parent=0 // loop_exit
    _

// kernel: res_block.3
$region0: #{res_block.3}
  #allocation0 [shape = 'u32[]', space=smem, size = 0x4, offset = 0x4, fixed_abs, tag = 'smem constant byte address 0x4 - core index']
  #allocation1 [shape = 'u32[144,128]{1,0:T(1,128)}', space=vmem, size = 0x12000, scoped, tag = 'internal scratch']
  %s0 = inlined_call_operand.vmem [shape: s32[1,256], index: 0, kind: input, shape index: {}]
  %s1 = inlined_call_operand.vmem [shape: f32[2,4,256], index: 1, kind: input, shape index: {}]
  %s2 = inlined_call_operand.vmem [shape: f32[9,4,4], index: 2, kind: input, shape index: {}]
  %s3 = inlined_call_operand.vmem [shape: f32[4,1], index: 3, kind: input, shape index: {}]
  %s4 = inlined_call_operand.vmem [shape: f32[4,1], index: 4, kind: input, shape index: {}]
  %s5 = inlined_call_operand.vmem [shape: f32[9,4,4], index: 5, kind: input, shape index: {}]
  %s6 = inlined_call_operand.vmem [shape: f32[4,1], index: 6, kind: input, shape index: {}]
  %s7 = inlined_call_operand.vmem [shape: f32[2,4,256], index: 7, kind: output, shape index: {}]
  %s8 = sld [smem:[#allocation0]]
  $region61: #{res_block.3} parent=0
    _
  %s10 = ssub.s32 1, %s8
  %s11 = scalar_select 0, %s10, %s8
  loop: start=0, step=1, limit=4
  $region2: #{res_block.3} parent=0 // loop_pre_header
    _
  $region3: #{res_block.3} parent=0 // loop_header
    %s13 = sphi 0, %s17
    %p14 = scmp.ge.s32.totalorder %s13, 4
    %s21 = sphi 0, %s21
    %s23 = sphi 0, %s21
    %s24 = sphi 0, %s23
    %s38 = sphi 0, %s24
    %s44 = sphi 0, %s46
    %s47 = sphi 0, %s44
    %s48 = sphi 0, %s47
    %s64 = sphi 0, %s48
    %s68 = sphi 0, %s68
    %s70 = sphi 0, %s68
    %s71 = sphi 0, %s70
    %s85 = sphi 0, %s71
    %s89 = sphi 0, %s89
    %s91 = sphi 0, %s89
    %s92 = sphi 0, %s91
    %s106 = sphi 0, %s92
    %s110 = sphi 0, %s110
    %s112 = sphi 0, %s110
    %s113 = sphi 0, %s112
    %s127 = sphi 0, %s113
    %s131 = sphi 0, %s131
    %s133 = sphi 0, %s131
    %s134 = sphi 0, %s133
    %s148 = sphi 0, %s134
    %s152 = sphi 0, %s152
    %s154 = sphi 0, %s152
    %s155 = sphi 0, %s154
    %s169 = sphi 0, %s155
    %s175 = sphi 0, %s177
    %s178 = sphi 0, %s175
    %s179 = sphi 0, %s178
    %s195 = sphi 0, %s179
  $region4: #{res_block.3} parent=0 // loop_header_branch
    %16 = sbr.rel (%p14) target = $region8
  $region5: #{res_block.3} parent=0 // loop_body
    %s18 = ssub.s32 %s13, 1
    %s19 = ssub.s32 %s13, 2
    %s20 = sadd.s32 %s13, 1
    %s22 = sadd.s32 %s21, 1
    %p25 = scmp.eq.s32.totalorder %s13, 1
    %p26 = scmp.ne.s32.totalorder %s21, %s23
    %p27 = scmp.eq.s32.totalorder %s13, 0
    %p28 = por %p26, %p27
    %p29 = scmp.ne.s32.totalorder %s21, %s23
    %p30 = scmp.eq.s32.totalorder %s18, 1
    %p31 = por %p29, %p30
    %p32 = scmp.ne.s32.totalorder %s23, %s24
    %p33 = scmp.eq.s32.totalorder %s18, 0
    %p34 = por %p32, %p33
    %p35 = scmp.ne.s32.totalorder %s23, %s24
    %p36 = scmp.eq.s32.totalorder %s19, 1
    %p37 = por %p35, %p36
    %p39 = scmp.ne.s32.totalorder %s24, %s38
    %p40 = scmp.eq.s32.totalorder %s19, 0
    %p41 = por %p39, %p40
    %s42 = ssub.s32 %s13, %s20
    %p43 = scmp.eq.s32.totalorder %s42, 0
    %s45 = sadd.s32 %s44, 1
    %s46 = scalar_select %p43, %s44, %s45
    %p49 = pneg %p43
    %p50 = scmp.eq.s32.totalorder %s13, 1
    %p51 = por %p49, %p50
    %p52 = scmp.ne.s32.totalorder %s44, %s47
    %p53 = scmp.eq.s32.totalorder %s13, 0
    %p54 = por %p52, %p53
    %p55 = scmp.ne.s32.totalorder %s44, %s47
    %p56 = scmp.eq.s32.totalorder %s18, 1
    %p57 = por %p55, %p56
    %p58 = scmp.ne.s32.totalorder %s47, %s48
    %p59 = scmp.eq.s32.totalorder %s18, 0
    %p60 = por %p58, %p59
    %p61 = scmp.ne.s32.totalorder %s47, %s48
    %p62 = scmp.eq.s32.totalorder %s19, 1
    %p63 = por %p61, %p62
    %p65 = scmp.ne.s32.totalorder %s48, %s64
    %p66 = scmp.eq.s32.totalorder %s19, 0
    %p67 = por %p65, %p66
    %s69 = sadd.s32 %s68, 1
    %p72 = scmp.eq.s32.totalorder %s13, 1
    %p73 = scmp.ne.s32.totalorder %s68, %s70
    %p74 = scmp.eq.s32.totalorder %s13, 0
    %p75 = por %p73, %p74
    %p76 = scmp.ne.s32.totalorder %s68, %s70
    %p77 = scmp.eq.s32.totalorder %s18, 1
    %p78 = por %p76, %p77
    %p79 = scmp.ne.s32.totalorder %s70, %s71
    %p80 = scmp.eq.s32.totalorder %s18, 0
    %p81 = por %p79, %p80
    %p82 = scmp.ne.s32.totalorder %s70, %s71
    %p83 = scmp.eq.s32.totalorder %s19, 1
    %p84 = por %p82, %p83
    %p86 = scmp.ne.s32.totalorder %s71, %s85
    %p87 = scmp.eq.s32.totalorder %s19, 0
    %p88 = por %p86, %p87
    %s90 = sadd.s32 %s89, 1
    %p93 = scmp.eq.s32.totalorder %s13, 1
    %p94 = scmp.ne.s32.totalorder %s89, %s91
    %p95 = scmp.eq.s32.totalorder %s13, 0
    %p96 = por %p94, %p95
    %p97 = scmp.ne.s32.totalorder %s89, %s91
    %p98 = scmp.eq.s32.totalorder %s18, 1
    %p99 = por %p97, %p98
    %p100 = scmp.ne.s32.totalorder %s91, %s92
    %p101 = scmp.eq.s32.totalorder %s18, 0
    %p102 = por %p100, %p101
    %p103 = scmp.ne.s32.totalorder %s91, %s92
    %p104 = scmp.eq.s32.totalorder %s19, 1
    %p105 = por %p103, %p104
    %p107 = scmp.ne.s32.totalorder %s92, %s106
    %p108 = scmp.eq.s32.totalorder %s19, 0
    %p109 = por %p107, %p108
    %s111 = sadd.s32 %s110, 1
    %p114 = scmp.eq.s32.totalorder %s13, 1
    %p115 = scmp.ne.s32.totalorder %s110, %s112
    %p116 = scmp.eq.s32.totalorder %s13, 0
    %p117 = por %p115, %p116
    %p118 = scmp.ne.s32.totalorder %s110, %s112
    %p119 = scmp.eq.s32.totalorder %s18, 1
    %p120 = por %p118, %p119
    %p121 = scmp.ne.s32.totalorder %s112, %s113
    %p122 = scmp.eq.s32.totalorder %s18, 0
    %p123 = por %p121, %p122
    %p124 = scmp.ne.s32.totalorder %s112, %s113
    %p125 = scmp.eq.s32.totalorder %s19, 1
    %p126 = por %p124, %p125
    %p128 = scmp.ne.s32.totalorder %s113, %s127
    %p129 = scmp.eq.s32.totalorder %s19, 0
    %p130 = por %p128, %p129
    %s132 = sadd.s32 %s131, 1
    %p135 = scmp.eq.s32.totalorder %s13, 1
    %p136 = scmp.ne.s32.totalorder %s131, %s133
    %p137 = scmp.eq.s32.totalorder %s13, 0
    %p138 = por %p136, %p137
    %p139 = scmp.ne.s32.totalorder %s131, %s133
    %p140 = scmp.eq.s32.totalorder %s18, 1
    %p141 = por %p139, %p140
    %p142 = scmp.ne.s32.totalorder %s133, %s134
    %p143 = scmp.eq.s32.totalorder %s18, 0
    %p144 = por %p142, %p143
    %p145 = scmp.ne.s32.totalorder %s133, %s134
    %p146 = scmp.eq.s32.totalorder %s19, 1
    %p147 = por %p145, %p146
    %p149 = scmp.ne.s32.totalorder %s134, %s148
    %p150 = scmp.eq.s32.totalorder %s19, 0
    %p151 = por %p149, %p150
    %s153 = sadd.s32 %s152, 1
    %p156 = scmp.eq.s32.totalorder %s13, 1
    %p157 = scmp.ne.s32.totalorder %s152, %s154
    %p158 = scmp.eq.s32.totalorder %s13, 0
    %p159 = por %p157, %p158
    %p160 = scmp.ne.s32.totalorder %s152, %s154
    %p161 = scmp.eq.s32.totalorder %s18, 1
    %p162 = por %p160, %p161
    %p163 = scmp.ne.s32.totalorder %s154, %s155
    %p164 = scmp.eq.s32.totalorder %s18, 0
    %p165 = por %p163, %p164
    %p166 = scmp.ne.s32.totalorder %s154, %s155
    %p167 = scmp.eq.s32.totalorder %s19, 1
    %p168 = por %p166, %p167
    %p170 = scmp.ne.s32.totalorder %s155, %s169
    %p171 = scmp.eq.s32.totalorder %s19, 0
    %p172 = por %p170, %p171
    %s173 = ssub.s32 %s13, %s20
    %p174 = scmp.eq.s32.totalorder %s173, 0
    %s176 = sadd.s32 %s175, 1
    %s177 = scalar_select %p174, %s175, %s176
    %p180 = pneg %p174
    %p181 = scmp.eq.s32.totalorder %s13, 1
    %p182 = por %p180, %p181
    %p183 = scmp.ne.s32.totalorder %s175, %s178
    %p184 = scmp.eq.s32.totalorder %s13, 0
    %p185 = por %p183, %p184
    %p186 = scmp.ne.s32.totalorder %s175, %s178
    %p187 = scmp.eq.s32.totalorder %s18, 1
    %p188 = por %p186, %p187
    %p189 = scmp.ne.s32.totalorder %s178, %s179
    %p190 = scmp.eq.s32.totalorder %s18, 0
    %p191 = por %p189, %p190
    %p192 = scmp.ne.s32.totalorder %s178, %s179
    %p193 = scmp.eq.s32.totalorder %s19, 1
    %p194 = por %p192, %p193
    %p196 = scmp.ne.s32.totalorder %s179, %s195
    %p197 = scmp.eq.s32.totalorder %s19, 0
    %p198 = por %p196, %p197
    %p199 = scmp.le.s32.totalorder 1, %s13
    %p200 = scmp.lt.s32.totalorder %s13, 3
    %p201 = pnand %p199, %p200
    %p202 = pneg %p201
    // Predicated region
    $region9: #{res_block.3} parent=5 // pred_check
      _
    $region10: #{res_block.3} parent=5 // pred_check_branch
      %204 = sbr.rel (%p201) target = $region12
    $region11: #{res_block.3} parent=5 // pred_region
      %s205 = ssub.s32 %s13, 1
      // Predicated region
      $region13: #{res_block.3} parent=11 // pred_check
        %p206 = pneg %p34
      $region14: #{res_block.3} parent=11 // pred_check_branch
        %208 = sbr.rel (%p206) target = $region16
      $region15: #{res_block.3} parent=11 // pred_region
        _
      $region16: #{res_block.3} parent=11 // pred_fallthru
        _
      // Predicated region
      $region17: #{res_block.3} parent=11 // pred_check
        %p209 = pneg %p81
      $region18: #{res_block.3} parent=11 // pred_check_branch
        %211 = sbr.rel (%p209) target = $region20
      $region19: #{res_block.3} parent=11 // pred_region
        _
      $region20: #{res_block.3} parent=11 // pred_fallthru
        _
      // Predicated region
      $region21: #{res_block.3} parent=11 // pred_check
        %p212 = pneg %p102
      $region22: #{res_block.3} parent=11 // pred_check_branch
        %214 = sbr.rel (%p212) target = $region24
      $region23: #{res_block.3} parent=11 // pred_region
        _
      $region24: #{res_block.3} parent=11 // pred_fallthru
        _
      // Predicated region
      $region25: #{res_block.3} parent=11 // pred_check
        %p215 = pneg %p123
      $region26: #{res_block.3} parent=11 // pred_check_branch
        %217 = sbr.rel (%p215) target = $region28
      $region27: #{res_block.3} parent=11 // pred_region
        _
      $region28: #{res_block.3} parent=11 // pred_fallthru
        _
      // Predicated region
      $region29: #{res_block.3} parent=11 // pred_check
        %p218 = pneg %p144
      $region30: #{res_block.3} parent=11 // pred_check_branch
        %220 = sbr.rel (%p218) target = $region32
      $region31: #{res_block.3} parent=11 // pred_region
        _
      $region32: #{res_block.3} parent=11 // pred_fallthru
        _
      // Predicated region
      $region33: #{res_block.3} parent=11 // pred_check
        %p221 = pneg %p165
      $region34: #{res_block.3} parent=11 // pred_check_branch
        %223 = sbr.rel (%p221) target = $region36
      $region35: #{res_block.3} parent=11 // pred_region
        _
      $region36: #{res_block.3} parent=11 // pred_fallthru
        _
    $region12: #{res_block.3} parent=5 // pred_fallthru
      _
    %p224 = scmp.lt.s32.totalorder %s13, 2
    // Predicated region
    $region37: #{res_block.3} parent=5 // pred_check
      %p225 = pneg %p224
    $region38: #{res_block.3} parent=5 // pred_check_branch
      %227 = sbr.rel (%p225) target = $region40
    $region39: #{res_block.3} parent=5 // pred_region
      // Predicated region
      $region41: #{res_block.3} parent=39 // pred_check
        %p228 = pneg %p54
      $region42: #{res_block.3} parent=39 // pred_check_branch
        %230 = sbr.rel (%p228) target = $region44
      $region43: #{res_block.3} parent=39 // pred_region
        %p231 = scmp.lt.s32.totalorder %s13, 1
        %s232 = scalar_select %p231, %s13, 1
        %s233 = smul.addr %s232, 2
        %s234 = smul.addr %s233, 4
        %s235 = scalar_lea.vmem %s1, %s234
      $region44: #{res_block.3} parent=39 // pred_fallthru
        _
    $region40: #{res_block.3} parent=5 // pred_fallthru
      _
    %p236 = scmp.le.s32.totalorder 1, %s13
    %p237 = scmp.lt.s32.totalorder %s13, 3
    %p238 = pnand %p236, %p237
    %p239 = pneg %p238
    // Predicated region
    $region45: #{res_block.3} parent=5 // pred_check
      _
    $region46: #{res_block.3} parent=5 // pred_check_branch
      %241 = sbr.rel (%p238) target = $region48
    $region47: #{res_block.3} parent=5 // pred_region
      %s242 = ssub.s32 %s13, 1
      %p243 = pneg %p34
      %p244 = pneg %p31
      %p245 = scmp.lt.s32.totalorder %s18, 1
      %s246 = scalar_select %p245, %s18, 1
      %s247 = smul.addr %s246, 2
      %s248 = smul.addr %s247, 4
      %s249 = scalar_lea.vmem %s1, %s248
      %p250 = pneg %p60
      %p251 = pneg %p57
      %p252 = pneg %p81
      %p253 = pneg %p78
      %p254 = pneg %p102
      %p255 = pneg %p99
      %p256 = pneg %p123
      %p257 = pneg %p120
      %p258 = pneg %p144
      %p259 = pneg %p141
      %p260 = pneg %p165
      %p261 = pneg %p162
      %p262 = pneg %p191
      %p263 = pneg %p188
      %p264 = scmp.lt.s32.totalorder %s18, 1
      %s265 = scalar_select %p264, %s18, 1
      %s266 = smul.addr %s265, 2
      %s267 = smul.addr %s266, 4
      %s268 = scalar_lea.vmem %s7, %s267
      %p269 = scmp.lt.s32.totalorder %s18, 1
      %s270 = scalar_select %p269, %s18, 1
      %s271 = smul.addr %s270, 2
      %s272 = smul.addr %s271, 4
      %s273 = scalar_lea.vmem %s1, %s272
      %p274 = scmp.lt.s32.totalorder %s18, 1
      %s275 = scalar_select %p274, %s18, 1
      %s276 = smul.addr %s275, 2
      %s277 = smul.addr %s276, 4
      %s278 = scalar_lea.vmem %s7, %s277
      %v279 = vld [vmem:[%s0] sm:$0x3]
      %v280 = vld [vmem:[%s273] sm:$0xff]
      %v281 = vadd.s32 %v279, 4294967295
      %vm282 = vcmp.ge.s32.totalorder %v281, 0
      %vm283 = vcmp.lt.s32.totalorder %v281, 16
      %vm284 = vmand %vm282, %vm283
      %v285 = vadd.s32 %v279, 1
      %vm286 = vcmp.ge.s32.totalorder %v285, 0
      %vm287 = vcmp.lt.s32.totalorder %v285, 16
      %vm288 = vmand %vm286, %vm287
      %v290 = vcombine.high %v280, %v280
      %291 = vrot.lane.b32.xlu0 %v280, 17
      %v292 = vpop.permute.xlu0 %291
      %293 = vrot.lane.b32.xlu0 %v290, 17
      %v294 = vpop.permute.xlu0 %293
      %vm295 = vcmask 138240
      %v296 = vsel %vm295, %v292, %v294
      %v299 = vsel %vm295, 0.0, %v292
      %v300 = vsel %vm284, 1, 0
      %v301 = vlaneseq
      %v302 = vshrl.u32 %v301, 7
      %v303 = vsub.s32 0, %v302
      %v304 = vrot.slane %v300, %v303
      %v305 = vlaneseq
      %v306 = vshrl.u32 %v305, 7
      %v307 = vsub.s32 1, %v306
      %v308 = vrot.slane %v300, %v307
      %vm309 = vcmp.eq.s32.totalorder %v304, 1
      %vm310 = vcmp.eq.s32.totalorder %v308, 1
      %v311 = vsel %vm309, %v299, 0.0
      %v312 = vsel %vm310, %v296, 0.0
      %v313 = vld [vmem:[%s2] sm:$0xf]
      %314 = vrot.lane.b32.xlu0 %v280, 16
      %v315 = vpop.permute.xlu0 %314
      %316 = vrot.lane.b32.xlu0 %v290, 16
      %v317 = vpop.permute.xlu0 %316
      %vm318 = vcmask 130048
      %v319 = vsel %vm318, %v315, %v317
      %v321 = vsel %vm318, 0.0, %v315
      %s322 = scalar_lea.vmem %s2, 4
      %v323 = vld [vmem:[%s322] sm:$0xf]
      %vm324 = vcmask 31744
      %v326 = vsel %vm324, %v323, 0
      %vm328 = vcmask 1043456
      %v330 = vsel %vm328, %v321, 0
      %v332 = vsel %vm328, %v319, 0
      %334 = vmatprep.subr.mxu0 %v332
      %335 = vmatpush1.msra.mxu0 %v330
      %336 = vmatprep.subr.mxu0 0.0
      %337 = vmatpush1.msra.mxu0 0.0
      %338 = vmatprep.subr.mxu0 0.0
      %339 = vmatpush1.msra.mxu0 0.0
      %340 = vmatprep.subr.mxu0 0.0
      %341 = vmatpush1.msra.mxu0 0.0
      %342 = vmatprep.subr.mxu0 0.0
      %343 = vmatpush1.msra.mxu0 0.0
      %344 = vmatprep.subr.mxu0 0.0
      %345 = vmatpush1.msra.mxu0 0.0
      %346 = vmatprep.subr.mxu0 0.0
      %347 = vmatpush1.msra.mxu0 0.0
      %348 = vmatprep.subr.mxu0 0.0
      %349 = vmatpush1.msra.mxu0 0.0
      %350 = vmatprep.subr.mxu0 0.0
      %351 = vmatpush1.msra.mxu0 0.0
      %352 = vmatprep.subr.mxu0 0.0
      %353 = vmatpush1.msra.mxu0 0.0
      %354 = vmatprep.subr.mxu0 0.0
      %355 = vmatpush1.msra.mxu0 0.0
      %356 = vmatprep.subr.mxu0 0.0
      %357 = vmatpush1.msra.mxu0 0.0
      %358 = vmatprep.subr.mxu0 0.0
      %359 = vmatpush1.msra.mxu0 0.0
      %360 = vmatprep.subr.mxu0 0.0
      %361 = vmatpush1.msra.mxu0 0.0
      %362 = vmatprep.subr.mxu0 0.0
      %363 = vmatpush1.msra.mxu0 0.0
      %364 = vmatprep.subr.mxu0 0.0
      %365 = vmatpush1.msra.mxu0 0.0
      %366 = vmatprep.subr.mxu0 0.0
      %367 = vmatpush1.msra.mxu0 0.0
      %368 = vmatprep.subr.mxu0 0.0
      %369 = vmatpush1.msra.mxu0 0.0
      %370 = vmatprep.subr.mxu0 0.0
      %371 = vmatpush1.msra.mxu0 0.0
      %372 = vmatprep.subr.mxu0 0.0
      %373 = vmatpush1.msra.mxu0 0.0
      %374 = vmatprep.subr.mxu0 0.0
      %375 = vmatpush1.msra.mxu0 0.0
      %376 = vmatprep.subr.mxu0 0.0
      %377 = vmatpush1.msra.mxu0 0.0
      %378 = vmatprep.subr.mxu0 0.0
      %379 = vmatpush1.msra.mxu0 0.0
      %380 = vmatprep.subr.mxu0 0.0
      %381 = vmatpush1.msra.mxu0 0.0
      %382 = vmatprep.subr.mxu0 0.0
      %383 = vmatpush1.msra.mxu0 0.0
      %384 = vmatprep.subr.mxu0 0.0
      %385 = vmatpush1.msra.mxu0 0.0
      %386 = vmatprep.subr.mxu0 0.0
      %387 = vmatpush1.msra.mxu0 0.0
      %388 = vmatprep.subr.mxu0 0.0
      %389 = vmatpush1.msra.mxu0 0.0
      %390 = vmatprep.subr.mxu0 0.0
      %391 = vmatpush1.msra.mxu0 0.0
      %392 = vmatprep.subr.mxu0 0.0
      %393 = vmatpush1.msra.mxu0 0.0
      %394 = vmatprep.subr.mxu0 0.0
      %395 = vmatpush1.msra.mxu0 0.0
      %396 = vmatprep.subr.mxu0 0.0
      %397 = vmatpush1.msra.mxu0 0.0
      %398 = vmatprep.mubr.f32.mxu0 0.0
      %399 = vmatmul.mubr.f32.gmra.mrb[0].mxu0 %v326
      %v400 = vpop.f32.mrb[0].mxu0
      %v401 = vadd.f32 0.0, %v400
      %v402 = vpop.f32.mrb[0].mxu0
      %v403 = vadd.f32 0.0, %v402
      %404 = vdwg.mxu0
      %v406 = vsel %vm324, %v313, 0
      %v409 = vsel %vm328, %v311, 0
      %v412 = vsel %vm328, %v312, 0
      %414 = vmatprep.subr.mxu0 %v412
      %415 = vmatpush1.msra.mxu0 %v409
      %416 = vmatprep.subr.mxu0 0.0
      %417 = vmatpush1.msra.mxu0 0.0
      %418 = vmatprep.subr.mxu0 0.0
      %419 = vmatpush1.msra.mxu0 0.0
      %420 = vmatprep.subr.mxu0 0.0
      %421 = vmatpush1.msra.mxu0 0.0
      %422 = vmatprep.subr.mxu0 0.0
      %423 = vmatpush1.msra.mxu0 0.0
      %424 = vmatprep.subr.mxu0 0.0
      %425 = vmatpush1.msra.mxu0 0.0
      %426 = vmatprep.subr.mxu0 0.0
      %427 = vmatpush1.msra.mxu0 0.0
      %428 = vmatprep.subr.mxu0 0.0
      %429 = vmatpush1.msra.mxu0 0.0
      %430 = vmatprep.subr.mxu0 0.0
      %431 = vmatpush1.msra.mxu0 0.0
      %432 = vmatprep.subr.mxu0 0.0
      %433 = vmatpush1.msra.mxu0 0.0
      %434 = vmatprep.subr.mxu0 0.0
      %435 = vmatpush1.msra.mxu0 0.0
      %436 = vmatprep.subr.mxu0 0.0
      %437 = vmatpush1.msra.mxu0 0.0
      %438 = vmatprep.subr.mxu0 0.0
      %439 = vmatpush1.msra.mxu0 0.0
      %440 = vmatprep.subr.mxu0 0.0
      %441 = vmatpush1.msra.mxu0 0.0
      %442 = vmatprep.subr.mxu0 0.0
      %443 = vmatpush1.msra.mxu0 0.0
      %444 = vmatprep.subr.mxu0 0.0
      %445 = vmatpush1.msra.mxu0 0.0
      %446 = vmatprep.subr.mxu0 0.0
      %447 = vmatpush1.msra.mxu0 0.0
      %448 = vmatprep.subr.mxu0 0.0
      %449 = vmatpush1.msra.mxu0 0.0
      %450 = vmatprep.subr.mxu0 0.0
      %451 = vmatpush1.msra.mxu0 0.0
      %452 = vmatprep.subr.mxu0 0.0
      %453 = vmatpush1.msra.mxu0 0.0
      %454 = vmatprep.subr.mxu0 0.0
      %455 = vmatpush1.msra.mxu0 0.0
      %456 = vmatprep.subr.mxu0 0.0
      %457 = vmatpush1.msra.mxu0 0.0
      %458 = vmatprep.subr.mxu0 0.0
      %459 = vmatpush1.msra.mxu0 0.0
      %460 = vmatprep.subr.mxu0 0.0
      %461 = vmatpush1.msra.mxu0 0.0
      %462 = vmatprep.subr.mxu0 0.0
      %463 = vmatpush1.msra.mxu0 0.0
      %464 = vmatprep.subr.mxu0 0.0
      %465 = vmatpush1.msra.mxu0 0.0
      %466 = vmatprep.subr.mxu0 0.0
      %467 = vmatpush1.msra.mxu0 0.0
      %468 = vmatprep.subr.mxu0 0.0
      %469 = vmatpush1.msra.mxu0 0.0
      %470 = vmatprep.subr.mxu0 0.0
      %471 = vmatpush1.msra.mxu0 0.0
      %472 = vmatprep.subr.mxu0 0.0
      %473 = vmatpush1.msra.mxu0 0.0
      %474 = vmatprep.subr.mxu0 0.0
      %475 = vmatpush1.msra.mxu0 0.0
      %476 = vmatprep.subr.mxu0 0.0
      %477 = vmatpush1.msra.mxu0 0.0
      %478 = vmatprep.mubr.f32.mxu0 0.0
      %479 = vmatmul.mubr.f32.gmra.mrb[0].mxu0 %v406
      %v480 = vpop.f32.mrb[0].mxu0
      %v481 = vadd.f32 %v401, %v480
      %v482 = vpop.f32.mrb[0].mxu0
      %v483 = vadd.f32 %v403, %v482
      %484 = vdwg.mxu0
      %485 = vrot.lane.b32.xlu0 %v280, 15
      %v486 = vpop.permute.xlu0 %485
      %487 = vrot.lane.b32.xlu0 %v290, 15
      %v488 = vpop.permute.xlu0 %487
      %vm489 = vcmask 121856
      %v490 = vsel %vm489, %v486, %v488
      %v493 = vsel %vm489, 0.0, %v486
      %v494 = vsel %vm288, 1, 0
      %v495 = vlaneseq
      %v496 = vshrl.u32 %v495, 7
      %v497 = vsub.s32 0, %v496
      %v498 = vrot.slane %v494, %v497
      %v499 = vlaneseq
      %v500 = vshrl.u32 %v499, 7
      %v501 = vsub.s32 1, %v500
      %v502 = vrot.slane %v494, %v501
      %vm503 = vcmp.eq.s32.totalorder %v498, 1
      %vm504 = vcmp.eq.s32.totalorder %v502, 1
      %v505 = vsel %vm503, %v493, 0.0
      %v506 = vsel %vm504, %v490, 0.0
      %s507 = scalar_lea.vmem %s2, 8
      %v508 = vld [vmem:[%s507] sm:$0xf]
      %v510 = vsel %vm324, %v508, 0
      %v513 = vsel %vm328, %v505, 0
      %v516 = vsel %vm328, %v506, 0
      %518 = vmatprep.subr.mxu0 %v516
      %519 = vmatpush1.msra.mxu0 %v513
      %520 = vmatprep.subr.mxu0 0.0
      %521 = vmatpush1.msra.mxu0 0.0
      %522 = vmatprep.subr.mxu0 0.0
      %523 = vmatpush1.msra.mxu0 0.0
      %524 = vmatprep.subr.mxu0 0.0
      %525 = vmatpush1.msra.mxu0 0.0
      %526 = vmatprep.subr.mxu0 0.0
      %527 = vmatpush1.msra.mxu0 0.0
      %528 = vmatprep.subr.mxu0 0.0
      %529 = vmatpush1.msra.mxu0 0.0
      %530 = vmatprep.subr.mxu0 0.0
      %531 = vmatpush1.msra.mxu0 0.0
      %532 = vmatprep.subr.mxu0 0.0
      %533 = vmatpush1.msra.mxu0 0.0
      %534 = vmatprep.subr.mxu0 0.0
      %535 = vmatpush1.msra.mxu0 0.0
      %536 = vmatprep.subr.mxu0 0.0
      %537 = vmatpush1.msra.mxu0 0.0
      %538 = vmatprep.subr.mxu0 0.0
      %539 = vmatpush1.msra.mxu0 0.0
      %540 = vmatprep.subr.mxu0 0.0
      %541 = vmatpush1.msra.mxu0 0.0
      %542 = vmatprep.subr.mxu0 0.0
      %543 = vmatpush1.msra.mxu0 0.0
      %544 = vmatprep.subr.mxu0 0.0
      %545 = vmatpush1.msra.mxu0 0.0
      %546 = vmatprep.subr.mxu0 0.0
      %547 = vmatpush1.msra.mxu0 0.0
      %548 = vmatprep.subr.mxu0 0.0
      %549 = vmatpush1.msra.mxu0 0.0
      %550 = vmatprep.subr.mxu0 0.0
      %551 = vmatpush1.msra.mxu0 0.0
      %552 = vmatprep.subr.mxu0 0.0
      %553 = vmatpush1.msra.mxu0 0.0
      %554 = vmatprep.subr.mxu0 0.0
      %555 = vmatpush1.msra.mxu0 0.0
      %556 = vmatprep.subr.mxu0 0.0
      %557 = vmatpush1.msra.mxu0 0.0
      %558 = vmatprep.subr.mxu0 0.0
      %559 = vmatpush1.msra.mxu0 0.0
      %560 = vmatprep.subr.mxu0 0.0
      %561 = vmatpush1.msra.mxu0 0.0
      %562 = vmatprep.subr.mxu0 0.0
      %563 = vmatpush1.msra.mxu0 0.0
      %564 = vmatprep.subr.mxu0 0.0
      %565 = vmatpush1.msra.mxu0 0.0
      %566 = vmatprep.subr.mxu0 0.0
      %567 = vmatpush1.msra.mxu0 0.0
      %568 = vmatprep.subr.mxu0 0.0
      %569 = vmatpush1.msra.mxu0 0.0
      %570 = vmatprep.subr.mxu0 0.0
      %571 = vmatpush1.msra.mxu0 0.0
      %572 = vmatprep.subr.mxu0 0.0
      %573 = vmatpush1.msra.mxu0 0.0
      %574 = vmatprep.subr.mxu0 0.0
      %575 = vmatpush1.msra.mxu0 0.0
      %576 = vmatprep.subr.mxu0 0.0
      %577 = vmatpush1.msra.mxu0 0.0
      %578 = vmatprep.subr.mxu0 0.0
      %579 = vmatpush1.msra.mxu0 0.0
      %580 = vmatprep.subr.mxu0 0.0
      %581 = vmatpush1.msra.mxu0 0.0
      %582 = vmatprep.mubr.f32.mxu0 0.0
      %583 = vmatmul.mubr.f32.gmra.mrb[0].mxu0 %v510
      %v584 = vpop.f32.mrb[0].mxu0
      %v585 = vadd.f32 0.0, %v584
      %v586 = vpop.f32.mrb[0].mxu0
      %v587 = vadd.f32 0.0, %v586
      %588 = vdwg.mxu0
      %v589 = vadd.f32 %v481, %v585
      %v590 = vadd.f32 %v483, %v587
      %591 = vrot.lane.b32.xlu0 %v280, 1
      %v592 = vpop.permute.xlu0 %591
      %593 = vrot.lane.b32.xlu0 %v290, 1
      %v594 = vpop.permute.xlu0 %593
      %vm595 = vcmask 7168
      %v596 = vsel %vm595, %v592, %v594
      %v599 = vsel %vm595, 0.0, %v592
      %v600 = vsel %vm309, %v599, 0.0
      %v601 = vsel %vm310, %v596, 0.0
      %s602 = scalar_lea.vmem %s2, 12
      %v603 = vld [vmem:[%s602] sm:$0xf]
      %v605 = vsel %vm324, %v603, 0
      %v608 = vsel %vm328, %v600, 0
      %v611 = vsel %vm328, %v601, 0
      %613 = vmatprep.subr.mxu0 %v611
      %614 = vmatpush1.msra.mxu0 %v608
      %615 = vmatprep.subr.mxu0 0.0
      %616 = vmatpush1.msra.mxu0 0.0
      %617 = vmatprep.subr.mxu0 0.0
      %618 = vmatpush1.msra.mxu0 0.0
      %619 = vmatprep.subr.mxu0 0.0
      %620 = vmatpush1.msra.mxu0 0.0
      %621 = vmatprep.subr.mxu0 0.0
      %622 = vmatpush1.msra.mxu0 0.0
      %623 = vmatprep.subr.mxu0 0.0
      %624 = vmatpush1.msra.mxu0 0.0
      %625 = vmatprep.subr.mxu0 0.0
      %626 = vmatpush1.msra.mxu0 0.0
      %627 = vmatprep.subr.mxu0 0.0
      %628 = vmatpush1.msra.mxu0 0.0
      %629 = vmatprep.subr.mxu0 0.0
      %630 = vmatpush1.msra.mxu0 0.0
      %631 = vmatprep.subr.mxu0 0.0
      %632 = vmatpush1.msra.mxu0 0.0
      %633 = vmatprep.subr.mxu0 0.0
      %634 = vmatpush1.msra.mxu0 0.0
      %635 = vmatprep.subr.mxu0 0.0
      %636 = vmatpush1.msra.mxu0 0.0
      %637 = vmatprep.subr.mxu0 0.0
      %638 = vmatpush1.msra.mxu0 0.0
      %639 = vmatprep.subr.mxu0 0.0
      %640 = vmatpush1.msra.mxu0 0.0
      %641 = vmatprep.subr.mxu0 0.0
      %642 = vmatpush1.msra.mxu0 0.0
      %643 = vmatprep.subr.mxu0 0.0
      %644 = vmatpush1.msra.mxu0 0.0
      %645 = vmatprep.subr.mxu0 0.0
      %646 = vmatpush1.msra.mxu0 0.0
      %647 = vmatprep.subr.mxu0 0.0
      %648 = vmatpush1.msra.mxu0 0.0
      %649 = vmatprep.subr.mxu0 0.0
      %650 = vmatpush1.msra.mxu0 0.0
      %651 = vmatprep.subr.mxu0 0.0
      %652 = vmatpush1.msra.mxu0 0.0
      %653 = vmatprep.subr.mxu0 0.0
      %654 = vmatpush1.msra.mxu0 0.0
      %655 = vmatprep.subr.mxu0 0.0
      %656 = vmatpush1.msra.mxu0 0.0
      %657 = vmatprep.subr.mxu0 0.0
      %658 = vmatpush1.msra.mxu0 0.0
      %659 = vmatprep.subr.mxu0 0.0
      %660 = vmatpush1.msra.mxu0 0.0
      %661 = vmatprep.subr.mxu0 0.0
      %662 = vmatpush1.msra.mxu0 0.0
      %663 = vmatprep.subr.mxu0 0.0
      %664 = vmatpush1.msra.mxu0 0.0
      %665 = vmatprep.subr.mxu0 0.0
      %666 = vmatpush1.msra.mxu0 0.0
      %667 = vmatprep.subr.mxu0 0.0
      %668 = vmatpush1.msra.mxu0 0.0
      %669 = vmatprep.subr.mxu0 0.0
      %670 = vmatpush1.msra.mxu0 0.0
      %671 = vmatprep.subr.mxu0 0.0
      %672 = vmatpush1.msra.mxu0 0.0
      %673 = vmatprep.subr.mxu0 0.0
      %674 = vmatpush1.msra.mxu0 0.0
      %675 = vmatprep.subr.mxu0 0.0
      %676 = vmatpush1.msra.mxu0 0.0
      %677 = vmatprep.mubr.f32.mxu0 0.0
      %678 = vmatmul.mubr.f32.gmra.mrb[0].mxu0 %v605
      %v679 = vpop.f32.mrb[0].mxu0
      %v680 = vadd.f32 0.0, %v679
      %v681 = vpop.f32.mrb[0].mxu0
      %v682 = vadd.f32 0.0, %v681
      %683 = vdwg.mxu0
      %v684 = vadd.f32 %v589, %v680
      %v685 = vadd.f32 %v590, %v682
      %s686 = scalar_lea.vmem %s2, 16
      %v687 = vld [vmem:[%s686] sm:$0xf]
      %v689 = vsel %vm324, %v687, 0
      %v691 = vsel %vm328, %v280, 0
      %v693 = vsel %vm328, %v290, 0
      %695 = vmatprep.subr.mxu0 %v693
      %696 = vmatpush1.msra.mxu0 %v691
      %697 = vmatprep.subr.mxu0 0.0
      %698 = vmatpush1.msra.mxu0 0.0
      %699 = vmatprep.subr.mxu0 0.0
      %700 = vmatpush1.msra.mxu0 0.0
      %701 = vmatprep.subr.mxu0 0.0
      %702 = vmatpush1.msra.mxu0 0.0
      %703 = vmatprep.subr.mxu0 0.0
      %704 = vmatpush1.msra.mxu0 0.0
      %705 = vmatprep.subr.mxu0 0.0
      %706 = vmatpush1.msra.mxu0 0.0
      %707 = vmatprep.subr.mxu0 0.0
      %708 = vmatpush1.msra.mxu0 0.0
      %709 = vmatprep.subr.mxu0 0.0
      %710 = vmatpush1.msra.mxu0 0.0
      %711 = vmatprep.subr.mxu0 0.0
      %712 = vmatpush1.msra.mxu0 0.0
      %713 = vmatprep.subr.mxu0 0.0
      %714 = vmatpush1.msra.mxu0 0.0
      %715 = vmatprep.subr.mxu0 0.0
      %716 = vmatpush1.msra.mxu0 0.0
      %717 = vmatprep.subr.mxu0 0.0
      %718 = vmatpush1.msra.mxu0 0.0
      %719 = vmatprep.subr.mxu0 0.0
      %720 = vmatpush1.msra.mxu0 0.0
      %721 = vmatprep.subr.mxu0 0.0
      %722 = vmatpush1.msra.mxu0 0.0
      %723 = vmatprep.subr.mxu0 0.0
      %724 = vmatpush1.msra.mxu0 0.0
      %725 = vmatprep.subr.mxu0 0.0
      %726 = vmatpush1.msra.mxu0 0.0
      %727 = vmatprep.subr.mxu0 0.0
      %728 = vmatpush1.msra.mxu0 0.0
      %729 = vmatprep.subr.mxu0 0.0
      %730 = vmatpush1.msra.mxu0 0.0
      %731 = vmatprep.subr.mxu0 0.0
      %732 = vmatpush1.msra.mxu0 0.0
      %733 = vmatprep.subr.mxu0 0.0
      %734 = vmatpush1.msra.mxu0 0.0
      %735 = vmatprep.subr.mxu0 0.0
      %736 = vmatpush1.msra.mxu0 0.0
      %737 = vmatprep.subr.mxu0 0.0
      %738 = vmatpush1.msra.mxu0 0.0
      %739 = vmatprep.subr.mxu0 0.0
      %740 = vmatpush1.msra.mxu0 0.0
      %741 = vmatprep.subr.mxu0 0.0
      %742 = vmatpush1.msra.mxu0 0.0
      %743 = vmatprep.subr.mxu0 0.0
      %744 = vmatpush1.msra.mxu0 0.0
      %745 = vmatprep.subr.mxu0 0.0
      %746 = vmatpush1.msra.mxu0 0.0
      %747 = vmatprep.subr.mxu0 0.0
      %748 = vmatpush1.msra.mxu0 0.0
      %749 = vmatprep.subr.mxu0 0.0
      %750 = vmatpush1.msra.mxu0 0.0
      %751 = vmatprep.subr.mxu0 0.0
      %752 = vmatpush1.msra.mxu0 0.0
      %753 = vmatprep.subr.mxu0 0.0
      %754 = vmatpush1.msra.mxu0 0.0
      %755 = vmatprep.subr.mxu0 0.0
      %756 = vmatpush1.msra.mxu0 0.0
      %757 = vmatprep.subr.mxu0 0.0
      %758 = vmatpush1.msra.mxu0 0.0
      %759 = vmatprep.mubr.f32.mxu0 0.0
      %760 = vmatmul.mubr.f32.gmra.mrb[0].mxu0 %v689
      %v761 = vpop.f32.mrb[0].mxu0
      %v762 = vadd.f32 0.0, %v761
      %v763 = vpop.f32.mrb[0].mxu0
      %v764 = vadd.f32 0.0, %v763
      %765 = vdwg.mxu0
      %v766 = vadd.f32 %v684, %v762
      %v767 = vadd.f32 %v685, %v764
      %768 = vrot.lane.b32.xlu0 %v280, 127
      %v769 = vpop.permute.xlu0 %768
      %770 = vrot.lane.b32.xlu0 %v290, 127
      %v771 = vpop.permute.xlu0 %770
      %vm772 = vcmask 1039360
      %v773 = vsel %vm772, %v769, %v771
      %v776 = vsel %vm772, %v771, 0.0
      %v777 = vsel %vm503, %v773, 0.0
      %v778 = vsel %vm504, %v776, 0.0
      %s779 = scalar_lea.vmem %s2, 20
      %v780 = vld [vmem:[%s779] sm:$0xf]
      %v782 = vsel %vm324, %v780, 0
      %v785 = vsel %vm328, %v777, 0
      %v788 = vsel %vm328, %v778, 0
      %790 = vmatprep.subr.mxu0 %v788
      %791 = vmatpush1.msra.mxu0 %v785
      %792 = vmatprep.subr.mxu0 0.0
      %793 = vmatpush1.msra.mxu0 0.0
      %794 = vmatprep.subr.mxu0 0.0
      %795 = vmatpush1.msra.mxu0 0.0
      %796 = vmatprep.subr.mxu0 0.0
      %797 = vmatpush1.msra.mxu0 0.0
      %798 = vmatprep.subr.mxu0 0.0
      %799 = vmatpush1.msra.mxu0 0.0
      %800 = vmatprep.subr.mxu0 0.0
      %801 = vmatpush1.msra.mxu0 0.0
      %802 = vmatprep.subr.mxu0 0.0
      %803 = vmatpush1.msra.mxu0 0.0
      %804 = vmatprep.subr.mxu0 0.0
      %805 = vmatpush1.msra.mxu0 0.0
      %806 = vmatprep.subr.mxu0 0.0
      %807 = vmatpush1.msra.mxu0 0.0
      %808 = vmatprep.subr.mxu0 0.0
      %809 = vmatpush1.msra.mxu0 0.0
      %810 = vmatprep.subr.mxu0 0.0
      %811 = vmatpush1.msra.mxu0 0.0
      %812 = vmatprep.subr.mxu0 0.0
      %813 = vmatpush1.msra.mxu0 0.0
      %814 = vmatprep.subr.mxu0 0.0
      %815 = vmatpush1.msra.mxu0 0.0
      %816 = vmatprep.subr.mxu0 0.0
      %817 = vmatpush1.msra.mxu0 0.0
      %818 = vmatprep.subr.mxu0 0.0
      %819 = vmatpush1.msra.mxu0 0.0
      %820 = vmatprep.subr.mxu0 0.0
      %821 = vmatpush1.msra.mxu0 0.0
      %822 = vmatprep.subr.mxu0 0.0
      %823 = vmatpush1.msra.mxu0 0.0
      %824 = vmatprep.subr.mxu0 0.0
      %825 = vmatpush1.msra.mxu0 0.0
      %826 = vmatprep.subr.mxu0 0.0
      %827 = vmatpush1.msra.mxu0 0.0
      %828 = vmatprep.subr.mxu0 0.0
      %829 = vmatpush1.msra.mxu0 0.0
      %830 = vmatprep.subr.mxu0 0.0
      %831 = vmatpush1.msra.mxu0 0.0
      %832 = vmatprep.subr.mxu0 0.0
      %833 = vmatpush1.msra.mxu0 0.0
      %834 = vmatprep.subr.mxu0 0.0
      %835 = vmatpush1.msra.mxu0 0.0
      %836 = vmatprep.subr.mxu0 0.0
      %837 = vmatpush1.msra.mxu0 0.0
      %838 = vmatprep.subr.mxu0 0.0
      %839 = vmatpush1.msra.mxu0 0.0
      %840 = vmatprep.subr.mxu0 0.0
      %841 = vmatpush1.msra.mxu0 0.0
      %842 = vmatprep.subr.mxu0 0.0
      %843 = vmatpush1.msra.mxu0 0.0
      %844 = vmatprep.subr.mxu0 0.0
      %845 = vmatpush1.msra.mxu0 0.0
      %846 = vmatprep.subr.mxu0 0.0
      %847 = vmatpush1.msra.mxu0 0.0
      %848 = vmatprep.subr.mxu0 0.0
      %849 = vmatpush1.msra.mxu0 0.0
      %850 = vmatprep.subr.mxu0 0.0
      %851 = vmatpush1.msra.mxu0 0.0
      %852 = vmatprep.subr.mxu0 0.0
      %853 = vmatpush1.msra.mxu0 0.0
      %854 = vmatprep.mubr.f32.mxu0 0.0
      %855 = vmatmul.mubr.f32.gmra.mrb[0].mxu0 %v782
      %v856 = vpop.f32.mrb[0].mxu0
      %v857 = vadd.f32 0.0, %v856
      %v858 = vpop.f32.mrb[0].mxu0
      %v859 = vadd.f32 0.0, %v858
      %860 = vdwg.mxu0
      %v861 = vadd.f32 %v766, %v857
      %v862 = vadd.f32 %v767, %v859
      %863 = vrot.lane.b32.xlu0 %v280, 113
      %v864 = vpop.permute.xlu0 %863
      %865 = vrot.lane.b32.xlu0 %v290, 113
      %v866 = vpop.permute.xlu0 %865
      %vm867 = vcmask 924672
      %v868 = vsel %vm867, %v864, %v866
      %v871 = vsel %vm867, %v866, 0.0
      %v872 = vsel %vm309, %v868, 0.0
      %v873 = vsel %vm310, %v871, 0.0
      %s874 = scalar_lea.vmem %s2, 24
      %v875 = vld [vmem:[%s874] sm:$0xf]
      %v877 = vsel %vm324, %v875, 0
      %v880 = vsel %vm328, %v872, 0
      %v883 = vsel %vm328, %v873, 0
      %885 = vmatprep.subr.mxu0 %v883
      %886 = vmatpush1.msra.mxu0 %v880
      %887 = vmatprep.subr.mxu0 0.0
      %888 = vmatpush1.msra.mxu0 0.0
      %889 = vmatprep.subr.mxu0 0.0
      %890 = vmatpush1.msra.mxu0 0.0
      %891 = vmatprep.subr.mxu0 0.0
      %892 = vmatpush1.msra.mxu0 0.0
      %893 = vmatprep.subr.mxu0 0.0
      %894 = vmatpush1.msra.mxu0 0.0
      %895 = vmatprep.subr.mxu0 0.0
      %896 = vmatpush1.msra.mxu0 0.0
      %897 = vmatprep.subr.mxu0 0.0
      %898 = vmatpush1.msra.mxu0 0.0
      %899 = vmatprep.subr.mxu0 0.0
      %900 = vmatpush1.msra.mxu0 0.0
      %901 = vmatprep.subr.mxu0 0.0
      %902 = vmatpush1.msra.mxu0 0.0
      %903 = vmatprep.subr.mxu0 0.0
      %904 = vmatpush1.msra.mxu0 0.0
      %905 = vmatprep.subr.mxu0 0.0
      %906 = vmatpush1.msra.mxu0 0.0
      %907 = vmatprep.subr.mxu0 0.0
      %908 = vmatpush1.msra.mxu0 0.0
      %909 = vmatprep.subr.mxu0 0.0
      %910 = vmatpush1.msra.mxu0 0.0
      %911 = vmatprep.subr.mxu0 0.0
      %912 = vmatpush1.msra.mxu0 0.0
      %913 = vmatprep.subr.mxu0 0.0
      %914 = vmatpush1.msra.mxu0 0.0
      %915 = vmatprep.subr.mxu0 0.0
      %916 = vmatpush1.msra.mxu0 0.0
      %917 = vmatprep.subr.mxu0 0.0
      %918 = vmatpush1.msra.mxu0 0.0
      %919 = vmatprep.subr.mxu0 0.0
      %920 = vmatpush1.msra.mxu0 0.0
      %921 = vmatprep.subr.mxu0 0.0
      %922 = vmatpush1.msra.mxu0 0.0
      %923 = vmatprep.subr.mxu0 0.0
      %924 = vmatpush1.msra.mxu0 0.0
      %925 = vmatprep.subr.mxu0 0.0
      %926 = vmatpush1.msra.mxu0 0.0
      %927 = vmatprep.subr.mxu0 0.0
      %928 = vmatpush1.msra.mxu0 0.0
      %929 = vmatprep.subr.mxu0 0.0
      %930 = vmatpush1.msra.mxu0 0.0
      %931 = vmatprep.subr.mxu0 0.0
      %932 = vmatpush1.msra.mxu0 0.0
      %933 = vmatprep.subr.mxu0 0.0
      %934 = vmatpush1.msra.mxu0 0.0
      %935 = vmatprep.subr.mxu0 0.0
      %936 = vmatpush1.msra.mxu0 0.0
      %937 = vmatprep.subr.mxu0 0.0
      %938 = vmatpush1.msra.mxu0 0.0
      %939 = vmatprep.subr.mxu0 0.0
      %940 = vmatpush1.msra.mxu0 0.0
      %941 = vmatprep.subr.mxu0 0.0
      %942 = vmatpush1.msra.mxu0 0.0
      %943 = vmatprep.subr.mxu0 0.0
      %944 = vmatpush1.msra.mxu0 0.0
      %945 = vmatprep.subr.mxu0 0.0
      %946 = vmatpush1.msra.mxu0 0.0
      %947 = vmatprep.subr.mxu0 0.0
      %948 = vmatpush1.msra.mxu0 0.0
      %949 = vmatprep.mubr.f32.mxu0 0.0
      %950 = vmatmul.mubr.f32.gmra.mrb[0].mxu0 %v877
      %v951 = vpop.f32.mrb[0].mxu0
      %v952 = vadd.f32 0.0, %v951
      %v953 = vpop.f32.mrb[0].mxu0
      %v954 = vadd.f32 0.0, %v953
      %955 = vdwg.mxu0
      %v956 = vadd.f32 %v861, %v952
      %v957 = vadd.f32 %v862, %v954
      %958 = vrot.lane.b32.xlu0 %v280, 112
      %v959 = vpop.permute.xlu0 %958
      %960 = vrot.lane.b32.xlu0 %v290, 112
      %v961 = vpop.permute.xlu0 %960
      %vm962 = vcmask 916480
      %v963 = vsel %vm962, %v959, %v961
      %v965 = vsel %vm962, %v961, 0.0
      %s966 = scalar_lea.vmem %s2, 28
      %v967 = vld [vmem:[%s966] sm:$0xf]
      %v969 = vsel %vm324, %v967, 0
      %v971 = vsel %vm328, %v963, 0
      %v974 = vsel %vm328, %v965, 0
      %976 = vmatprep.subr.mxu0 %v974
      %977 = vmatpush1.msra.mxu0 %v971
      %978 = vmatprep.subr.mxu0 0.0
      %979 = vmatpush1.msra.mxu0 0.0
      %980 = vmatprep.subr.mxu0 0.0
      %981 = vmatpush1.msra.mxu0 0.0
      %982 = vmatprep.subr.mxu0 0.0
      %983 = vmatpush1.msra.mxu0 0.0
      %984 = vmatprep.subr.mxu0 0.0
      %985 = vmatpush1.msra.mxu0 0.0
      %986 = vmatprep.subr.mxu0 0.0
      %987 = vmatpush1.msra.mxu0 0.0
      %988 = vmatprep.subr.mxu0 0.0
      %989 = vmatpush1.msra.mxu0 0.0
      %990 = vmatprep.subr.mxu0 0.0
      %991 = vmatpush1.msra.mxu0 0.0
      %992 = vmatprep.subr.mxu0 0.0
      %993 = vmatpush1.msra.mxu0 0.0
      %994 = vmatprep.subr.mxu0 0.0
      %995 = vmatpush1.msra.mxu0 0.0
      %996 = vmatprep.subr.mxu0 0.0
      %997 = vmatpush1.msra.mxu0 0.0
      %998 = vmatprep.subr.mxu0 0.0
      %999 = vmatpush1.msra.mxu0 0.0
      %1000 = vmatprep.subr.mxu0 0.0
      %1001 = vmatpush1.msra.mxu0 0.0
      %1002 = vmatprep.subr.mxu0 0.0
      %1003 = vmatpush1.msra.mxu0 0.0
      %1004 = vmatprep.subr.mxu0 0.0
      %1005 = vmatpush1.msra.mxu0 0.0
      %1006 = vmatprep.subr.mxu0 0.0
      %1007 = vmatpush1.msra.mxu0 0.0
      %1008 = vmatprep.subr.mxu0 0.0
      %1009 = vmatpush1.msra.mxu0 0.0
      %1010 = vmatprep.subr.mxu0 0.0
      %1011 = vmatpush1.msra.mxu0 0.0
      %1012 = vmatprep.subr.mxu0 0.0
      %1013 = vmatpush1.msra.mxu0 0.0
      %1014 = vmatprep.subr.mxu0 0.0
      %1015 = vmatpush1.msra.mxu0 0.0
      %1016 = vmatprep.subr.mxu0 0.0
      %1017 = vmatpush1.msra.mxu0 0.0
      %1018 = vmatprep.subr.mxu0 0.0
      %1019 = vmatpush1.msra.mxu0 0.0
      %1020 = vmatprep.subr.mxu0 0.0
      %1021 = vmatpush1.msra.mxu0 0.0
      %1022 = vmatprep.subr.mxu0 0.0
      %1023 = vmatpush1.msra.mxu0 0.0
      %1024 = vmatprep.subr.mxu0 0.0
      %1025 = vmatpush1.msra.mxu0 0.0
      %1026 = vmatprep.subr.mxu0 0.0
      %1027 = vmatpush1.msra.mxu0 0.0
      %1028 = vmatprep.subr.mxu0 0.0
      %1029 = vmatpush1.msra.mxu0 0.0
      %1030 = vmatprep.subr.mxu0 0.0
      %1031 = vmatpush1.msra.mxu0 0.0
      %1032 = vmatprep.subr.mxu0 0.0
      %1033 = vmatpush1.msra.mxu0 0.0
      %1034 = vmatprep.subr.mxu0 0.0
      %1035 = vmatpush1.msra.mxu0 0.0
      %1036 = vmatprep.subr.mxu0 0.0
      %1037 = vmatpush1.msra.mxu0 0.0
      %1038 = vmatprep.subr.mxu0 0.0
      %1039 = vmatpush1.msra.mxu0 0.0
      %1040 = vmatprep.mubr.f32.mxu0 0.0
      %1041 = vmatmul.mubr.f32.gmra.mrb[0].mxu0 %v969
      %v1042 = vpop.f32.mrb[0].mxu0
      %v1043 = vadd.f32 0.0, %v1042
      %v1044 = vpop.f32.mrb[0].mxu0
      %v1045 = vadd.f32 0.0, %v1044
      %1046 = vdwg.mxu0
      %v1047 = vadd.f32 %v956, %v1043
      %v1048 = vadd.f32 %v957, %v1045
      %1049 = vrot.lane.b32.xlu0 %v280, 111
      %v1050 = vpop.permute.xlu0 %1049
      %1051 = vrot.lane.b32.xlu0 %v290, 111
      %v1052 = vpop.permute.xlu0 %1051
      %vm1053 = vcmask 908288
      %v1054 = vsel %vm1053, %v1050, %v1052
      %v1057 = vsel %vm1053, %v1052, 0.0
      %v1058 = vsel %vm503, %v1054, 0.0
      %v1059 = vsel %vm504, %v1057, 0.0
      %s1060 = scalar_lea.vmem %s2, 32
      %v1061 = vld [vmem:[%s1060] sm:$0xf]
      %v1063 = vsel %vm324, %v1061, 0
      %v1066 = vsel %vm328, %v1058, 0
      %v1069 = vsel %vm328, %v1059, 0
      %1071 = vmatprep.subr.mxu0 %v1069
      %1072 = vmatpush1.msra.mxu0 %v1066
      %1073 = vmatprep.subr.mxu0 0.0
      %1074 = vmatpush1.msra.mxu0 0.0
      %1075 = vmatprep.subr.mxu0 0.0
      %1076 = vmatpush1.msra.mxu0 0.0
      %1077 = vmatprep.subr.mxu0 0.0
      %1078 = vmatpush1.msra.mxu0 0.0
      %1079 = vmatprep.subr.mxu0 0.0
      %1080 = vmatpush1.msra.mxu0 0.0
      %1081 = vmatprep.subr.mxu0 0.0
      %1082 = vmatpush1.msra.mxu0 0.0
      %1083 = vmatprep.subr.mxu0 0.0
      %1084 = vmatpush1.msra.mxu0 0.0
      %1085 = vmatprep.subr.mxu0 0.0
      %1086 = vmatpush1.msra.mxu0 0.0
      %1087 = vmatprep.subr.mxu0 0.0
      %1088 = vmatpush1.msra.mxu0 0.0
      %1089 = vmatprep.subr.mxu0 0.0
      %1090 = vmatpush1.msra.mxu0 0.0
      %1091 = vmatprep.subr.mxu0 0.0
      %1092 = vmatpush1.msra.mxu0 0.0
      %1093 = vmatprep.subr.mxu0 0.0
      %1094 = vmatpush1.msra.mxu0 0.0
      %1095 = vmatprep.subr.mxu0 0.0
      %1096 = vmatpush1.msra.mxu0 0.0
      %1097 = vmatprep.subr.mxu0 0.0
      %1098 = vmatpush1.msra.mxu0 0.0
      %1099 = vmatprep.subr.mxu0 0.0
      %1100 = vmatpush1.msra.mxu0 0.0
      %1101 = vmatprep.subr.mxu0 0.0
      %1102 = vmatpush1.msra.mxu0 0.0
      %1103 = vmatprep.subr.mxu0 0.0
      %1104 = vmatpush1.msra.mxu0 0.0
      %1105 = vmatprep.subr.mxu0 0.0
      %1106 = vmatpush1.msra.mxu0 0.0
      %1107 = vmatprep.subr.mxu0 0.0
      %1108 = vmatpush1.msra.mxu0 0.0
      %1109 = vmatprep.subr.mxu0 0.0
      %1110 = vmatpush1.msra.mxu0 0.0
      %1111 = vmatprep.subr.mxu0 0.0
      %1112 = vmatpush1.msra.mxu0 0.0
      %1113 = vmatprep.subr.mxu0 0.0
      %1114 = vmatpush1.msra.mxu0 0.0
      %1115 = vmatprep.subr.mxu0 0.0
      %1116 = vmatpush1.msra.mxu0 0.0
      %1117 = vmatprep.subr.mxu0 0.0
      %1118 = vmatpush1.msra.mxu0 0.0
      %1119 = vmatprep.subr.mxu0 0.0
      %1120 = vmatpush1.msra.mxu0 0.0
      %1121 = vmatprep.subr.mxu0 0.0
      %1122 = vmatpush1.msra.mxu0 0.0
      %1123 = vmatprep.subr.mxu0 0.0
      %1124 = vmatpush1.msra.mxu0 0.0
      %1125 = vmatprep.subr.mxu0 0.0
      %1126 = vmatpush1.msra.mxu0 0.0
      %1127 = vmatprep.subr.mxu0 0.0
      %1128 = vmatpush1.msra.mxu0 0.0
      %1129 = vmatprep.subr.mxu0 0.0
      %1130 = vmatpush1.msra.mxu0 0.0
      %1131 = vmatprep.subr.mxu0 0.0
      %1132 = vmatpush1.msra.mxu0 0.0
      %1133 = vmatprep.subr.mxu0 0.0
      %1134 = vmatpush1.msra.mxu0 0.0
      %1135 = vmatprep.mubr.f32.mxu0 0.0
      %1136 = vmatmul.mubr.f32.gmra.mrb[0].mxu0 %v1063
      %v1137 = vpop.f32.mrb[0].mxu0
      %v1138 = vadd.f32 0.0, %v1137
      %v1139 = vpop.f32.mrb[0].mxu0
      %v1140 = vadd.f32 0.0, %v1139
      %1141 = vdwg.mxu0
      %v1142 = vadd.f32 %v1047, %v1138
      %v1143 = vadd.f32 %v1048, %v1140
      %v1144 = vld [vmem:[%s3] sm:$0xf]
      %1146 = vset.pattern.permute.xlu0 0
      %1147 = vperm.xlu0 %1146, %v1144
      %v1148 = vpop.permute.xlu0 %1147
      %v1150 = vmul.f32 %v1142, %v1148
      %v1151 = vmul.f32 %v1143, %v1148
      %v1152 = vld [vmem:[%s4] sm:$0xf]
      %1154 = vset.pattern.permute.xlu0 0
      %1155 = vperm.xlu0 %1154, %v1152
      %v1156 = vpop.permute.xlu0 %1155
      %v1158 = vadd.f32 %v1150, %v1156
      %v1159 = vadd.f32 %v1151, %v1156
      %v1160 = vmax.f32 %v1158, 0.0
      %v1161 = vmax.f32 %v1159, 0.0
      %1164 = vrot.lane.b32.xlu0 %v1160, 17
      %v1165 = vpop.permute.xlu0 %1164
      %1166 = vrot.lane.b32.xlu0 %v1161, 17
      %v1167 = vpop.permute.xlu0 %1166
      %v1168 = vsel %vm295, %v1165, %v1167
      %v1171 = vsel %vm295, 0.0, %v1165
      %v1172 = vsel %vm309, %v1171, 0.0
      %v1173 = vsel %vm310, %v1168, 0.0
      %v1174 = vld [vmem:[%s5] sm:$0xf]
      %1175 = vrot.lane.b32.xlu0 %v1160, 16
      %v1176 = vpop.permute.xlu0 %1175
      %1177 = vrot.lane.b32.xlu0 %v1161, 16
      %v1178 = vpop.permute.xlu0 %1177
      %v1179 = vsel %vm318, %v1176, %v1178
      %v1181 = vsel %vm318, 0.0, %v1176
      %s1182 = scalar_lea.vmem %s5, 4
      %v1183 = vld [vmem:[%s1182] sm:$0xf]
      %v1185 = vsel %vm324, %v1183, 0
      %v1188 = vsel %vm328, %v1181, 0
      %v1190 = vsel %vm328, %v1179, 0
      %1192 = vmatprep.subr.mxu0 %v1190
      %1193 = vmatpush1.msra.mxu0 %v1188
      %1194 = vmatprep.subr.mxu0 0.0
      %1195 = vmatpush1.msra.mxu0 0.0
      %1196 = vmatprep.subr.mxu0 0.0
      %1197 = vmatpush1.msra.mxu0 0.0
      %1198 = vmatprep.subr.mxu0 0.0
      %1199 = vmatpush1.msra.mxu0 0.0
      %1200 = vmatprep.subr.mxu0 0.0
      %1201 = vmatpush1.msra.mxu0 0.0
      %1202 = vmatprep.subr.mxu0 0.0
      %1203 = vmatpush1.msra.mxu0 0.0
      %1204 = vmatprep.subr.mxu0 0.0
      %1205 = vmatpush1.msra.mxu0 0.0
      %1206 = vmatprep.subr.mxu0 0.0
      %1207 = vmatpush1.msra.mxu0 0.0
      %1208 = vmatprep.subr.mxu0 0.0
      %1209 = vmatpush1.msra.mxu0 0.0
      %1210 = vmatprep.subr.mxu0 0.0
      %1211 = vmatpush1.msra.mxu0 0.0
      %1212 = vmatprep.subr.mxu0 0.0
      %1213 = vmatpush1.msra.mxu0 0.0
      %1214 = vmatprep.subr.mxu0 0.0
      %1215 = vmatpush1.msra.mxu0 0.0
      %1216 = vmatprep.subr.mxu0 0.0
      %1217 = vmatpush1.msra.mxu0 0.0
      %1218 = vmatprep.subr.mxu0 0.0
      %1219 = vmatpush1.msra.mxu0 0.0
      %1220 = vmatprep.subr.mxu0 0.0
      %1221 = vmatpush1.msra.mxu0 0.0
      %1222 = vmatprep.subr.mxu0 0.0
      %1223 = vmatpush1.msra.mxu0 0.0
      %1224 = vmatprep.subr.mxu0 0.0
      %1225 = vmatpush1.msra.mxu0 0.0
      %1226 = vmatprep.subr.mxu0 0.0
      %1227 = vmatpush1.msra.mxu0 0.0
      %1228 = vmatprep.subr.mxu0 0.0
      %1229 = vmatpush1.msra.mxu0 0.0
      %1230 = vmatprep.subr.mxu0 0.0
      %1231 = vmatpush1.msra.mxu0 0.0
      %1232 = vmatprep.subr.mxu0 0.0
      %1233 = vmatpush1.msra.mxu0 0.0
      %1234 = vmatprep.subr.mxu0 0.0
      %1235 = vmatpush1.msra.mxu0 0.0
      %1236 = vmatprep.subr.mxu0 0.0
      %1237 = vmatpush1.msra.mxu0 0.0
      %1238 = vmatprep.subr.mxu0 0.0
      %1239 = vmatpush1.msra.mxu0 0.0
      %1240 = vmatprep.subr.mxu0 0.0
      %1241 = vmatpush1.msra.mxu0 0.0
      %1242 = vmatprep.subr.mxu0 0.0
      %1243 = vmatpush1.msra.mxu0 0.0
      %1244 = vmatprep.subr.mxu0 0.0
      %1245 = vmatpush1.msra.mxu0 0.0
      %1246 = vmatprep.subr.mxu0 0.0
      %1247 = vmatpush1.msra.mxu0 0.0
      %1248 = vmatprep.subr.mxu0 0.0
      %1249 = vmatpush1.msra.mxu0 0.0
      %1250 = vmatprep.subr.mxu0 0.0
      %1251 = vmatpush1.msra.mxu0 0.0
      %1252 = vmatprep.subr.mxu0 0.0
      %1253 = vmatpush1.msra.mxu0 0.0
      %1254 = vmatprep.subr.mxu0 0.0
      %1255 = vmatpush1.msra.mxu0 0.0
      %1256 = vmatprep.mubr.f32.mxu0 0.0
      %1257 = vmatmul.mubr.f32.gmra.mrb[0].mxu0 %v1185
      %v1258 = vpop.f32.mrb[0].mxu0
      %v1259 = vadd.f32 0.0, %v1258
      %v1260 = vpop.f32.mrb[0].mxu0
      %v1261 = vadd.f32 0.0, %v1260
      %1262 = vdwg.mxu0
      %v1264 = vsel %vm324, %v1174, 0
      %v1267 = vsel %vm328, %v1172, 0
      %v1270 = vsel %vm328, %v1173, 0
      %1272 = vmatprep.subr.mxu0 %v1270
      %1273 = vmatpush1.msra.mxu0 %v1267
      %1274 = vmatprep.subr.mxu0 0.0
      %1275 = vmatpush1.msra.mxu0 0.0
      %1276 = vmatprep.subr.mxu0 0.0
      %1277 = vmatpush1.msra.mxu0 0.0
      %1278 = vmatprep.subr.mxu0 0.0
      %1279 = vmatpush1.msra.mxu0 0.0
      %1280 = vmatprep.subr.mxu0 0.0
      %1281 = vmatpush1.msra.mxu0 0.0
      %1282 = vmatprep.subr.mxu0 0.0
      %1283 = vmatpush1.msra.mxu0 0.0
      %1284 = vmatprep.subr.mxu0 0.0
      %1285 = vmatpush1.msra.mxu0 0.0
      %1286 = vmatprep.subr.mxu0 0.0
      %1287 = vmatpush1.msra.mxu0 0.0
      %1288 = vmatprep.subr.mxu0 0.0
      %1289 = vmatpush1.msra.mxu0 0.0
      %1290 = vmatprep.subr.mxu0 0.0
      %1291 = vmatpush1.msra.mxu0 0.0
      %1292 = vmatprep.subr.mxu0 0.0
      %1293 = vmatpush1.msra.mxu0 0.0
      %1294 = vmatprep.subr.mxu0 0.0
      %1295 = vmatpush1.msra.mxu0 0.0
      %1296 = vmatprep.subr.mxu0 0.0
      %1297 = vmatpush1.msra.mxu0 0.0
      %1298 = vmatprep.subr.mxu0 0.0
      %1299 = vmatpush1.msra.mxu0 0.0
      %1300 = vmatprep.subr.mxu0 0.0
      %1301 = vmatpush1.msra.mxu0 0.0
      %1302 = vmatprep.subr.mxu0 0.0
      %1303 = vmatpush1.msra.mxu0 0.0
      %1304 = vmatprep.subr.mxu0 0.0
      %1305 = vmatpush1.msra.mxu0 0.0
      %1306 = vmatprep.subr.mxu0 0.0
      %1307 = vmatpush1.msra.mxu0 0.0
      %1308 = vmatprep.subr.mxu0 0.0
      %1309 = vmatpush1.msra.mxu0 0.0
      %1310 = vmatprep.subr.mxu0 0.0
      %1311 = vmatpush1.msra.mxu0 0.0
      %1312 = vmatprep.subr.mxu0 0.0
      %1313 = vmatpush1.msra.mxu0 0.0
      %1314 = vmatprep.subr.mxu0 0.0
      %1315 = vmatpush1.msra.mxu0 0.0
      %1316 = vmatprep.subr.mxu0 0.0
      %1317 = vmatpush1.msra.mxu0 0.0
      %1318 = vmatprep.subr.mxu0 0.0
      %1319 = vmatpush1.msra.mxu0 0.0
      %1320 = vmatprep.subr.mxu0 0.0
      %1321 = vmatpush1.msra.mxu0 0.0
      %1322 = vmatprep.subr.mxu0 0.0
      %1323 = vmatpush1.msra.mxu0 0.0
      %1324 = vmatprep.subr.mxu0 0.0
      %1325 = vmatpush1.msra.mxu0 0.0
      %1326 = vmatprep.subr.mxu0 0.0
      %1327 = vmatpush1.msra.mxu0 0.0
      %1328 = vmatprep.subr.mxu0 0.0
      %1329 = vmatpush1.msra.mxu0 0.0
      %1330 = vmatprep.subr.mxu0 0.0
      %1331 = vmatpush1.msra.mxu0 0.0
      %1332 = vmatprep.subr.mxu0 0.0
      %1333 = vmatpush1.msra.mxu0 0.0
      %1334 = vmatprep.subr.mxu0 0.0
      %1335 = vmatpush1.msra.mxu0 0.0
      %1336 = vmatprep.mubr.f32.mxu0 0.0
      %1337 = vmatmul.mubr.f32.gmra.mrb[0].mxu0 %v1264
      %v1338 = vpop.f32.mrb[0].mxu0
      %v1339 = vadd.f32 %v1259, %v1338
      %v1340 = vpop.f32.mrb[0].mxu0
      %v1341 = vadd.f32 %v1261, %v1340
      %1342 = vdwg.mxu0
      %1343 = vrot.lane.b32.xlu0 %v1160, 15
      %v1344 = vpop.permute.xlu0 %1343
      %1345 = vrot.lane.b32.xlu0 %v1161, 15
      %v1346 = vpop.permute.xlu0 %1345
      %v1347 = vsel %vm489, %v1344, %v1346
      %v1350 = vsel %vm489, 0.0, %v1344
      %v1351 = vsel %vm503, %v1350, 0.0
      %v1352 = vsel %vm504, %v1347, 0.0
      %s1353 = scalar_lea.vmem %s5, 8
      %v1354 = vld [vmem:[%s1353] sm:$0xf]
      %v1356 = vsel %vm324, %v1354, 0
      %v1359 = vsel %vm328, %v1351, 0
      %v1362 = vsel %vm328, %v1352, 0
      %1364 = vmatprep.subr.mxu0 %v1362
      %1365 = vmatpush1.msra.mxu0 %v1359
      %1366 = vmatprep.subr.mxu0 0.0
      %1367 = vmatpush1.msra.mxu0 0.0
      %1368 = vmatprep.subr.mxu0 0.0
      %1369 = vmatpush1.msra.mxu0 0.0
      %1370 = vmatprep.subr.mxu0 0.0
      %1371 = vmatpush1.msra.mxu0 0.0
      %1372 = vmatprep.subr.mxu0 0.0
      %1373 = vmatpush1.msra.mxu0 0.0
      %1374 = vmatprep.subr.mxu0 0.0
      %1375 = vmatpush1.msra.mxu0 0.0
      %1376 = vmatprep.subr.mxu0 0.0
      %1377 = vmatpush1.msra.mxu0 0.0
      %1378 = vmatprep.subr.mxu0 0.0
      %1379 = vmatpush1.msra.mxu0 0.0
      %1380 = vmatprep.subr.mxu0 0.0
      %1381 = vmatpush1.msra.mxu0 0.0
      %1382 = vmatprep.subr.mxu0 0.0
      %1383 = vmatpush1.msra.mxu0 0.0
      %1384 = vmatprep.subr.mxu0 0.0
      %1385 = vmatpush1.msra.mxu0 0.0
      %1386 = vmatprep.subr.mxu0 0.0
      %1387 = vmatpush1.msra.mxu0 0.0
      %1388 = vmatprep.subr.mxu0 0.0
      %1389 = vmatpush1.msra.mxu0 0.0
      %1390 = vmatprep.subr.mxu0 0.0
      %1391 = vmatpush1.msra.mxu0 0.0
      %1392 = vmatprep.subr.mxu0 0.0
      %1393 = vmatpush1.msra.mxu0 0.0
      %1394 = vmatprep.subr.mxu0 0.0
      %1395 = vmatpush1.msra.mxu0 0.0
      %1396 = vmatprep.subr.mxu0 0.0
      %1397 = vmatpush1.msra.mxu0 0.0
      %1398 = vmatprep.subr.mxu0 0.0
      %1399 = vmatpush1.msra.mxu0 0.0
      %1400 = vmatprep.subr.mxu0 0.0
      %1401 = vmatpush1.msra.mxu0 0.0
      %1402 = vmatprep.subr.mxu0 0.0
      %1403 = vmatpush1.msra.mxu0 0.0
      %1404 = vmatprep.subr.mxu0 0.0
      %1405 = vmatpush1.msra.mxu0 0.0
      %1406 = vmatprep.subr.mxu0 0.0
      %1407 = vmatpush1.msra.mxu0 0.0
      %1408 = vmatprep.subr.mxu0 0.0
      %1409 = vmatpush1.msra.mxu0 0.0
      %1410 = vmatprep.subr.mxu0 0.0
      %1411 = vmatpush1.msra.mxu0 0.0
      %1412 = vmatprep.subr.mxu0 0.0
      %1413 = vmatpush1.msra.mxu0 0.0
      %1414 = vmatprep.subr.mxu0 0.0
      %1415 = vmatpush1.msra.mxu0 0.0
      %1416 = vmatprep.subr.mxu0 0.0
      %1417 = vmatpush1.msra.mxu0 0.0
      %1418 = vmatprep.subr.mxu0 0.0
      %1419 = vmatpush1.msra.mxu0 0.0
      %1420 = vmatprep.subr.mxu0 0.0
      %1421 = vmatpush1.msra.mxu0 0.0
      %1422 = vmatprep.subr.mxu0 0.0
      %1423 = vmatpush1.msra.mxu0 0.0
      %1424 = vmatprep.subr.mxu0 0.0
      %1425 = vmatpush1.msra.mxu0 0.0
      %1426 = vmatprep.subr.mxu0 0.0
      %1427 = vmatpush1.msra.mxu0 0.0
      %1428 = vmatprep.mubr.f32.mxu0 0.0
      %1429 = vmatmul.mubr.f32.gmra.mrb[0].mxu0 %v1356
      %v1430 = vpop.f32.mrb[0].mxu0
      %v1431 = vadd.f32 0.0, %v1430
      %v1432 = vpop.f32.mrb[0].mxu0
      %v1433 = vadd.f32 0.0, %v1432
      %1434 = vdwg.mxu0
      %v1435 = vadd.f32 %v1339, %v1431
      %v1436 = vadd.f32 %v1341, %v1433
      %1437 = vrot.lane.b32.xlu0 %v1160, 1
      %v1438 = vpop.permute.xlu0 %1437
      %1439 = vrot.lane.b32.xlu0 %v1161, 1
      %v1440 = vpop.permute.xlu0 %1439
      %v1441 = vsel %vm595, %v1438, %v1440
      %v1444 = vsel %vm595, 0.0, %v1438
      %v1445 = vsel %vm309, %v1444, 0.0
      %v1446 = vsel %vm310, %v1441, 0.0
      %s1447 = scalar_lea.vmem %s5, 12
      %v1448 = vld [vmem:[%s1447] sm:$0xf]
      %v1450 = vsel %vm324, %v1448, 0
      %v1453 = vsel %vm328, %v1445, 0
      %v1456 = vsel %vm328, %v1446, 0
      %1458 = vmatprep.subr.mxu0 %v1456
      %1459 = vmatpush1.msra.mxu0 %v1453
      %1460 = vmatprep.subr.mxu0 0.0
      %1461 = vmatpush1.msra.mxu0 0.0
      %1462 = vmatprep.subr.mxu0 0.0
      %1463 = vmatpush1.msra.mxu0 0.0
      %1464 = vmatprep.subr.mxu0 0.0
      %1465 = vmatpush1.msra.mxu0 0.0
      %1466 = vmatprep.subr.mxu0 0.0
      %1467 = vmatpush1.msra.mxu0 0.0
      %1468 = vmatprep.subr.mxu0 0.0
      %1469 = vmatpush1.msra.mxu0 0.0
      %1470 = vmatprep.subr.mxu0 0.0
      %1471 = vmatpush1.msra.mxu0 0.0
      %1472 = vmatprep.subr.mxu0 0.0
      %1473 = vmatpush1.msra.mxu0 0.0
      %1474 = vmatprep.subr.mxu0 0.0
      %1475 = vmatpush1.msra.mxu0 0.0
      %1476 = vmatprep.subr.mxu0 0.0
      %1477 = vmatpush1.msra.mxu0 0.0
      %1478 = vmatprep.subr.mxu0 0.0
      %1479 = vmatpush1.msra.mxu0 0.0
      %1480 = vmatprep.subr.mxu0 0.0
      %1481 = vmatpush1.msra.mxu0 0.0
      %1482 = vmatprep.subr.mxu0 0.0
      %1483 = vmatpush1.msra.mxu0 0.0
      %1484 = vmatprep.subr.mxu0 0.0
      %1485 = vmatpush1.msra.mxu0 0.0
      %1486 = vmatprep.subr.mxu0 0.0
      %1487 = vmatpush1.msra.mxu0 0.0
      %1488 = vmatprep.subr.mxu0 0.0
      %1489 = vmatpush1.msra.mxu0 0.0
      %1490 = vmatprep.subr.mxu0 0.0
      %1491 = vmatpush1.msra.mxu0 0.0
      %1492 = vmatprep.subr.mxu0 0.0
      %1493 = vmatpush1.msra.mxu0 0.0
      %1494 = vmatprep.subr.mxu0 0.0
      %1495 = vmatpush1.msra.mxu0 0.0
      %1496 = vmatprep.subr.mxu0 0.0
      %1497 = vmatpush1.msra.mxu0 0.0
      %1498 = vmatprep.subr.mxu0 0.0
      %1499 = vmatpush1.msra.mxu0 0.0
      %1500 = vmatprep.subr.mxu0 0.0
      %1501 = vmatpush1.msra.mxu0 0.0
      %1502 = vmatprep.subr.mxu0 0.0
      %1503 = vmatpush1.msra.mxu0 0.0
      %1504 = vmatprep.subr.mxu0 0.0
      %1505 = vmatpush1.msra.mxu0 0.0
      %1506 = vmatprep.subr.mxu0 0.0
      %1507 = vmatpush1.msra.mxu0 0.0
      %1508 = vmatprep.subr.mxu0 0.0
      %1509 = vmatpush1.msra.mxu0 0.0
      %1510 = vmatprep.subr.mxu0 0.0
      %1511 = vmatpush1.msra.mxu0 0.0
      %1512 = vmatprep.subr.mxu0 0.0
      %1513 = vmatpush1.msra.mxu0 0.0
      %1514 = vmatprep.subr.mxu0 0.0
      %1515 = vmatpush1.msra.mxu0 0.0
      %1516 = vmatprep.subr.mxu0 0.0
      %1517 = vmatpush1.msra.mxu0 0.0
      %1518 = vmatprep.subr.mxu0 0.0
      %1519 = vmatpush1.msra.mxu0 0.0
      %1520 = vmatprep.subr.mxu0 0.0
      %1521 = vmatpush1.msra.mxu0 0.0
      %1522 = vmatprep.mubr.f32.mxu0 0.0
      %1523 = vmatmul.mubr.f32.gmra.mrb[0].mxu0 %v1450
      %v1524 = vpop.f32.mrb[0].mxu0
      %v1525 = vadd.f32 0.0, %v1524
      %v1526 = vpop.f32.mrb[0].mxu0
      %v1527 = vadd.f32 0.0, %v1526
      %1528 = vdwg.mxu0
      %v1529 = vadd.f32 %v1435, %v1525
      %v1530 = vadd.f32 %v1436, %v1527
      %s1531 = scalar_lea.vmem %s5, 16
      %v1532 = vld [vmem:[%s1531] sm:$0xf]
      %v1534 = vsel %vm324, %v1532, 0
      %v1536 = vsel %vm328, %v1160, 0
      %v1538 = vsel %vm328, %v1161, 0
      %1540 = vmatprep.subr.mxu0 %v1538
      %1541 = vmatpush1.msra.mxu0 %v1536
      %1542 = vmatprep.subr.mxu0 0.0
      %1543 = vmatpush1.msra.mxu0 0.0
      %1544 = vmatprep.subr.mxu0 0.0
      %1545 = vmatpush1.msra.mxu0 0.0
      %1546 = vmatprep.subr.mxu0 0.0
      %1547 = vmatpush1.msra.mxu0 0.0
      %1548 = vmatprep.subr.mxu0 0.0
      %1549 = vmatpush1.msra.mxu0 0.0
      %1550 = vmatprep.subr.mxu0 0.0
      %1551 = vmatpush1.msra.mxu0 0.0
      %1552 = vmatprep.subr.mxu0 0.0
      %1553 = vmatpush1.msra.mxu0 0.0
      %1554 = vmatprep.subr.mxu0 0.0
      %1555 = vmatpush1.msra.mxu0 0.0
      %1556 = vmatprep.subr.mxu0 0.0
      %1557 = vmatpush1.msra.mxu0 0.0
      %1558 = vmatprep.subr.mxu0 0.0
      %1559 = vmatpush1.msra.mxu0 0.0
      %1560 = vmatprep.subr.mxu0 0.0
      %1561 = vmatpush1.msra.mxu0 0.0
      %1562 = vmatprep.subr.mxu0 0.0
      %1563 = vmatpush1.msra.mxu0 0.0
      %1564 = vmatprep.subr.mxu0 0.0
      %1565 = vmatpush1.msra.mxu0 0.0
      %1566 = vmatprep.subr.mxu0 0.0
      %1567 = vmatpush1.msra.mxu0 0.0
      %1568 = vmatprep.subr.mxu0 0.0
      %1569 = vmatpush1.msra.mxu0 0.0
      %1570 = vmatprep.subr.mxu0 0.0
      %1571 = vmatpush1.msra.mxu0 0.0
      %1572 = vmatprep.subr.mxu0 0.0
      %1573 = vmatpush1.msra.mxu0 0.0
      %1574 = vmatprep.subr.mxu0 0.0
      %1575 = vmatpush1.msra.mxu0 0.0
      %1576 = vmatprep.subr.mxu0 0.0
      %1577 = vmatpush1.msra.mxu0 0.0
      %1578 = vmatprep.subr.mxu0 0.0
      %1579 = vmatpush1.msra.mxu0 0.0
      %1580 = vmatprep.subr.mxu0 0.0
      %1581 = vmatpush1.msra.mxu0 0.0
      %1582 = vmatprep.subr.mxu0 0.0
      %1583 = vmatpush1.msra.mxu0 0.0
      %1584 = vmatprep.subr.mxu0 0.0
      %1585 = vmatpush1.msra.mxu0 0.0
      %1586 = vmatprep.subr.mxu0 0.0
      %1587 = vmatpush1.msra.mxu0 0.0
      %1588 = vmatprep.subr.mxu0 0.0
      %1589 = vmatpush1.msra.mxu0 0.0
      %1590 = vmatprep.subr.mxu0 0.0
      %1591 = vmatpush1.msra.mxu0 0.0
      %1592 = vmatprep.subr.mxu0 0.0
      %1593 = vmatpush1.msra.mxu0 0.0
      %1594 = vmatprep.subr.mxu0 0.0
      %1595 = vmatpush1.msra.mxu0 0.0
      %1596 = vmatprep.subr.mxu0 0.0
      %1597 = vmatpush1.msra.mxu0 0.0
      %1598 = vmatprep.subr.mxu0 0.0
      %1599 = vmatpush1.msra.mxu0 0.0
      %1600 = vmatprep.subr.mxu0 0.0
      %1601 = vmatpush1.msra.mxu0 0.0
      %1602 = vmatprep.subr.mxu0 0.0
      %1603 = vmatpush1.msra.mxu0 0.0
      %1604 = vmatprep.mubr.f32.mxu0 0.0
      %1605 = vmatmul.mubr.f32.gmra.mrb[0].mxu0 %v1534
      %v1606 = vpop.f32.mrb[0].mxu0
      %v1607 = vadd.f32 0.0, %v1606
      %v1608 = vpop.f32.mrb[0].mxu0
      %v1609 = vadd.f32 0.0, %v1608
      %1610 = vdwg.mxu0
      %v1611 = vadd.f32 %v1529, %v1607
      %v1612 = vadd.f32 %v1530, %v1609
      %1613 = vrot.lane.b32.xlu0 %v1160, 127
      %v1614 = vpop.permute.xlu0 %1613
      %1615 = vrot.lane.b32.xlu0 %v1161, 127
      %v1616 = vpop.permute.xlu0 %1615
      %v1617 = vsel %vm772, %v1614, %v1616
      %v1620 = vsel %vm772, %v1616, 0.0
      %v1621 = vsel %vm503, %v1617, 0.0
      %v1622 = vsel %vm504, %v1620, 0.0
      %s1623 = scalar_lea.vmem %s5, 20
      %v1624 = vld [vmem:[%s1623] sm:$0xf]
      %v1626 = vsel %vm324, %v1624, 0
      %v1629 = vsel %vm328, %v1621, 0
      %v1632 = vsel %vm328, %v1622, 0
      %1634 = vmatprep.subr.mxu0 %v1632
      %1635 = vmatpush1.msra.mxu0 %v1629
      %1636 = vmatprep.subr.mxu0 0.0
      %1637 = vmatpush1.msra.mxu0 0.0
      %1638 = vmatprep.subr.mxu0 0.0
      %1639 = vmatpush1.msra.mxu0 0.0
      %1640 = vmatprep.subr.mxu0 0.0
      %1641 = vmatpush1.msra.mxu0 0.0
      %1642 = vmatprep.subr.mxu0 0.0
      %1643 = vmatpush1.msra.mxu0 0.0
      %1644 = vmatprep.subr.mxu0 0.0
      %1645 = vmatpush1.msra.mxu0 0.0
      %1646 = vmatprep.subr.mxu0 0.0
      %1647 = vmatpush1.msra.mxu0 0.0
      %1648 = vmatprep.subr.mxu0 0.0
      %1649 = vmatpush1.msra.mxu0 0.0
      %1650 = vmatprep.subr.mxu0 0.0
      %1651 = vmatpush1.msra.mxu0 0.0
      %1652 = vmatprep.subr.mxu0 0.0
      %1653 = vmatpush1.msra.mxu0 0.0
      %1654 = vmatprep.subr.mxu0 0.0
      %1655 = vmatpush1.msra.mxu0 0.0
      %1656 = vmatprep.subr.mxu0 0.0
      %1657 = vmatpush1.msra.mxu0 0.0
      %1658 = vmatprep.subr.mxu0 0.0
      %1659 = vmatpush1.msra.mxu0 0.0
      %1660 = vmatprep.subr.mxu0 0.0
      %1661 = vmatpush1.msra.mxu0 0.0
      %1662 = vmatprep.subr.mxu0 0.0
      %1663 = vmatpush1.msra.mxu0 0.0
      %1664 = vmatprep.subr.mxu0 0.0
      %1665 = vmatpush1.msra.mxu0 0.0
      %1666 = vmatprep.subr.mxu0 0.0
      %1667 = vmatpush1.msra.mxu0 0.0
      %1668 = vmatprep.subr.mxu0 0.0
      %1669 = vmatpush1.msra.mxu0 0.0
      %1670 = vmatprep.subr.mxu0 0.0
      %1671 = vmatpush1.msra.mxu0 0.0
      %1672 = vmatprep.subr.mxu0 0.0
      %1673 = vmatpush1.msra.mxu0 0.0
      %1674 = vmatprep.subr.mxu0 0.0
      %1675 = vmatpush1.msra.mxu0 0.0
      %1676 = vmatprep.subr.mxu0 0.0
      %1677 = vmatpush1.msra.mxu0 0.0
      %1678 = vmatprep.subr.mxu0 0.0
      %1679 = vmatpush1.msra.mxu0 0.0
      %1680 = vmatprep.subr.mxu0 0.0
      %1681 = vmatpush1.msra.mxu0 0.0
      %1682 = vmatprep.subr.mxu0 0.0
      %1683 = vmatpush1.msra.mxu0 0.0
      %1684 = vmatprep.subr.mxu0 0.0
      %1685 = vmatpush1.msra.mxu0 0.0
      %1686 = vmatprep.subr.mxu0 0.0
      %1687 = vmatpush1.msra.mxu0 0.0
      %1688 = vmatprep.subr.mxu0 0.0
      %1689 = vmatpush1.msra.mxu0 0.0
      %1690 = vmatprep.subr.mxu0 0.0
      %1691 = vmatpush1.msra.mxu0 0.0
      %1692 = vmatprep.subr.mxu0 0.0
      %1693 = vmatpush1.msra.mxu0 0.0
      %1694 = vmatprep.subr.mxu0 0.0
      %1695 = vmatpush1.msra.mxu0 0.0
      %1696 = vmatprep.subr.mxu0 0.0
      %1697 = vmatpush1.msra.mxu0 0.0
      %1698 = vmatprep.mubr.f32.mxu0 0.0
      %1699 = vmatmul.mubr.f32.gmra.mrb[0].mxu0 %v1626
      %v1700 = vpop.f32.mrb[0].mxu0
      %v1701 = vadd.f32 0.0, %v1700
      %v1702 = vpop.f32.mrb[0].mxu0
      %v1703 = vadd.f32 0.0, %v1702
      %1704 = vdwg.mxu0
      %v1705 = vadd.f32 %v1611, %v1701
      %v1706 = vadd.f32 %v1612, %v1703
      %1707 = vrot.lane.b32.xlu0 %v1160, 113
      %v1708 = vpop.permute.xlu0 %1707
      %1709 = vrot.lane.b32.xlu0 %v1161, 113
      %v1710 = vpop.permute.xlu0 %1709
      %v1711 = vsel %vm867, %v1708, %v1710
      %v1714 = vsel %vm867, %v1710, 0.0
      %v1715 = vsel %vm309, %v1711, 0.0
      %v1716 = vsel %vm310, %v1714, 0.0
      %s1717 = scalar_lea.vmem %s5, 24
      %v1718 = vld [vmem:[%s1717] sm:$0xf]
      %v1720 = vsel %vm324, %v1718, 0
      %v1723 = vsel %vm328, %v1715, 0
      %v1726 = vsel %vm328, %v1716, 0
      %1728 = vmatprep.subr.mxu0 %v1726
      %1729 = vmatpush1.msra.mxu0 %v1723
      %1730 = vmatprep.subr.mxu0 0.0
      %1731 = vmatpush1.msra.mxu0 0.0
      %1732 = vmatprep.subr.mxu0 0.0
      %1733 = vmatpush1.msra.mxu0 0.0
      %1734 = vmatprep.subr.mxu0 0.0
      %1735 = vmatpush1.msra.mxu0 0.0
      %1736 = vmatprep.subr.mxu0 0.0
      %1737 = vmatpush1.msra.mxu0 0.0
      %1738 = vmatprep.subr.mxu0 0.0
      %1739 = vmatpush1.msra.mxu0 0.0
      %1740 = vmatprep.subr.mxu0 0.0
      %1741 = vmatpush1.msra.mxu0 0.0
      %1742 = vmatprep.subr.mxu0 0.0
      %1743 = vmatpush1.msra.mxu0 0.0
      %1744 = vmatprep.subr.mxu0 0.0
      %1745 = vmatpush1.msra.mxu0 0.0
      %1746 = vmatprep.subr.mxu0 0.0
      %1747 = vmatpush1.msra.mxu0 0.0
      %1748 = vmatprep.subr.mxu0 0.0
      %1749 = vmatpush1.msra.mxu0 0.0
      %1750 = vmatprep.subr.mxu0 0.0
      %1751 = vmatpush1.msra.mxu0 0.0
      %1752 = vmatprep.subr.mxu0 0.0
      %1753 = vmatpush1.msra.mxu0 0.0
      %1754 = vmatprep.subr.mxu0 0.0
      %1755 = vmatpush1.msra.mxu0 0.0
      %1756 = vmatprep.subr.mxu0 0.0
      %1757 = vmatpush1.msra.mxu0 0.0
      %1758 = vmatprep.subr.mxu0 0.0
      %1759 = vmatpush1.msra.mxu0 0.0
      %1760 = vmatprep.subr.mxu0 0.0
      %1761 = vmatpush1.msra.mxu0 0.0
      %1762 = vmatprep.subr.mxu0 0.0
      %1763 = vmatpush1.msra.mxu0 0.0
      %1764 = vmatprep.subr.mxu0 0.0
      %1765 = vmatpush1.msra.mxu0 0.0
      %1766 = vmatprep.subr.mxu0 0.0
      %1767 = vmatpush1.msra.mxu0 0.0
      %1768 = vmatprep.subr.mxu0 0.0
      %1769 = vmatpush1.msra.mxu0 0.0
      %1770 = vmatprep.subr.mxu0 0.0
      %1771 = vmatpush1.msra.mxu0 0.0
      %1772 = vmatprep.subr.mxu0 0.0
      %1773 = vmatpush1.msra.mxu0 0.0
      %1774 = vmatprep.subr.mxu0 0.0
      %1775 = vmatpush1.msra.mxu0 0.0
      %1776 = vmatprep.subr.mxu0 0.0
      %1777 = vmatpush1.msra.mxu0 0.0
      %1778 = vmatprep.subr.mxu0 0.0
      %1779 = vmatpush1.msra.mxu0 0.0
      %1780 = vmatprep.subr.mxu0 0.0
      %1781 = vmatpush1.msra.mxu0 0.0
      %1782 = vmatprep.subr.mxu0 0.0
      %1783 = vmatpush1.msra.mxu0 0.0
      %1784 = vmatprep.subr.mxu0 0.0
      %1785 = vmatpush1.msra.mxu0 0.0
      %1786 = vmatprep.subr.mxu0 0.0
      %1787 = vmatpush1.msra.mxu0 0.0
      %1788 = vmatprep.subr.mxu0 0.0
      %1789 = vmatpush1.msra.mxu0 0.0
      %1790 = vmatprep.subr.mxu0 0.0
      %1791 = vmatpush1.msra.mxu0 0.0
      %1792 = vmatprep.mubr.f32.mxu0 0.0
      %1793 = vmatmul.mubr.f32.gmra.mrb[0].mxu0 %v1720
      %v1794 = vpop.f32.mrb[0].mxu0
      %v1795 = vadd.f32 0.0, %v1794
      %v1796 = vpop.f32.mrb[0].mxu0
      %v1797 = vadd.f32 0.0, %v1796
      %1798 = vdwg.mxu0
      %v1799 = vadd.f32 %v1705, %v1795
      %v1800 = vadd.f32 %v1706, %v1797
      %1801 = vrot.lane.b32.xlu0 %v1160, 112
      %v1802 = vpop.permute.xlu0 %1801
      %1803 = vrot.lane.b32.xlu0 %v1161, 112
      %v1804 = vpop.permute.xlu0 %1803
      %v1805 = vsel %vm962, %v1802, %v1804
      %v1807 = vsel %vm962, %v1804, 0.0
      %s1808 = scalar_lea.vmem %s5, 28
      %v1809 = vld [vmem:[%s1808] sm:$0xf]
      %v1811 = vsel %vm324, %v1809, 0
      %v1813 = vsel %vm328, %v1805, 0
      %v1816 = vsel %vm328, %v1807, 0
      %1818 = vmatprep.subr.mxu0 %v1816
      %1819 = vmatpush1.msra.mxu0 %v1813
      %1820 = vmatprep.subr.mxu0 0.0
      %1821 = vmatpush1.msra.mxu0 0.0
      %1822 = vmatprep.subr.mxu0 0.0
      %1823 = vmatpush1.msra.mxu0 0.0
      %1824 = vmatprep.subr.mxu0 0.0
      %1825 = vmatpush1.msra.mxu0 0.0
      %1826 = vmatprep.subr.mxu0 0.0
      %1827 = vmatpush1.msra.mxu0 0.0
      %1828 = vmatprep.subr.mxu0 0.0
      %1829 = vmatpush1.msra.mxu0 0.0
      %1830 = vmatprep.subr.mxu0 0.0
      %1831 = vmatpush1.msra.mxu0 0.0
      %1832 = vmatprep.subr.mxu0 0.0
      %1833 = vmatpush1.msra.mxu0 0.0
      %1834 = vmatprep.subr.mxu0 0.0
      %1835 = vmatpush1.msra.mxu0 0.0
      %1836 = vmatprep.subr.mxu0 0.0
      %1837 = vmatpush1.msra.mxu0 0.0
      %1838 = vmatprep.subr.mxu0 0.0
      %1839 = vmatpush1.msra.mxu0 0.0
      %1840 = vmatprep.subr.mxu0 0.0
      %1841 = vmatpush1.msra.mxu0 0.0
      %1842 = vmatprep.subr.mxu0 0.0
      %1843 = vmatpush1.msra.mxu0 0.0
      %1844 = vmatprep.subr.mxu0 0.0
      %1845 = vmatpush1.msra.mxu0 0.0
      %1846 = vmatprep.subr.mxu0 0.0
      %1847 = vmatpush1.msra.mxu0 0.0
      %1848 = vmatprep.subr.mxu0 0.0
      %1849 = vmatpush1.msra.mxu0 0.0
      %1850 = vmatprep.subr.mxu0 0.0
      %1851 = vmatpush1.msra.mxu0 0.0
      %1852 = vmatprep.subr.mxu0 0.0
      %1853 = vmatpush1.msra.mxu0 0.0
      %1854 = vmatprep.subr.mxu0 0.0
      %1855 = vmatpush1.msra.mxu0 0.0
      %1856 = vmatprep.subr.mxu0 0.0
      %1857 = vmatpush1.msra.mxu0 0.0
      %1858 = vmatprep.subr.mxu0 0.0
      %1859 = vmatpush1.msra.mxu0 0.0
      %1860 = vmatprep.subr.mxu0 0.0
      %1861 = vmatpush1.msra.mxu0 0.0
      %1862 = vmatprep.subr.mxu0 0.0
      %1863 = vmatpush1.msra.mxu0 0.0
      %1864 = vmatprep.subr.mxu0 0.0
      %1865 = vmatpush1.msra.mxu0 0.0
      %1866 = vmatprep.subr.mxu0 0.0
      %1867 = vmatpush1.msra.mxu0 0.0
      %1868 = vmatprep.subr.mxu0 0.0
      %1869 = vmatpush1.msra.mxu0 0.0
      %1870 = vmatprep.subr.mxu0 0.0
      %1871 = vmatpush1.msra.mxu0 0.0
      %1872 = vmatprep.subr.mxu0 0.0
      %1873 = vmatpush1.msra.mxu0 0.0
      %1874 = vmatprep.subr.mxu0 0.0
      %1875 = vmatpush1.msra.mxu0 0.0
      %1876 = vmatprep.subr.mxu0 0.0
      %1877 = vmatpush1.msra.mxu0 0.0
      %1878 = vmatprep.subr.mxu0 0.0
      %1879 = vmatpush1.msra.mxu0 0.0
      %1880 = vmatprep.subr.mxu0 0.0
      %1881 = vmatpush1.msra.mxu0 0.0
      %1882 = vmatprep.mubr.f32.mxu0 0.0
      %1883 = vmatmul.mubr.f32.gmra.mrb[0].mxu0 %v1811
      %v1884 = vpop.f32.mrb[0].mxu0
      %v1885 = vadd.f32 0.0, %v1884
      %v1886 = vpop.f32.mrb[0].mxu0
      %v1887 = vadd.f32 0.0, %v1886
      %1888 = vdwg.mxu0
      %v1889 = vadd.f32 %v1799, %v1885
      %v1890 = vadd.f32 %v1800, %v1887
      %1891 = vrot.lane.b32.xlu0 %v1160, 111
      %v1892 = vpop.permute.xlu0 %1891
      %1893 = vrot.lane.b32.xlu0 %v1161, 111
      %v1894 = vpop.permute.xlu0 %1893
      %v1895 = vsel %vm1053, %v1892, %v1894
      %v1898 = vsel %vm1053, %v1894, 0.0
      %v1899 = vsel %vm503, %v1895, 0.0
      %v1900 = vsel %vm504, %v1898, 0.0
      %s1901 = scalar_lea.vmem %s5, 32
      %v1902 = vld [vmem:[%s1901] sm:$0xf]
      %v1904 = vsel %vm324, %v1902, 0
      %v1907 = vsel %vm328, %v1899, 0
      %v1910 = vsel %vm328, %v1900, 0
      %1912 = vmatprep.subr.mxu0 %v1910
      %1913 = vmatpush1.msra.mxu0 %v1907
      %1914 = vmatprep.subr.mxu0 0.0
      %1915 = vmatpush1.msra.mxu0 0.0
      %1916 = vmatprep.subr.mxu0 0.0
      %1917 = vmatpush1.msra.mxu0 0.0
      %1918 = vmatprep.subr.mxu0 0.0
      %1919 = vmatpush1.msra.mxu0 0.0
      %1920 = vmatprep.subr.mxu0 0.0
      %1921 = vmatpush1.msra.mxu0 0.0
      %1922 = vmatprep.subr.mxu0 0.0
      %1923 = vmatpush1.msra.mxu0 0.0
      %1924 = vmatprep.subr.mxu0 0.0
      %1925 = vmatpush1.msra.mxu0 0.0
      %1926 = vmatprep.subr.mxu0 0.0
      %1927 = vmatpush1.msra.mxu0 0.0
      %1928 = vmatprep.subr.mxu0 0.0
      %1929 = vmatpush1.msra.mxu0 0.0
      %1930 = vmatprep.subr.mxu0 0.0
      %1931 = vmatpush1.msra.mxu0 0.0
      %1932 = vmatprep.subr.mxu0 0.0
      %1933 = vmatpush1.msra.mxu0 0.0
      %1934 = vmatprep.subr.mxu0 0.0
      %1935 = vmatpush1.msra.mxu0 0.0
      %1936 = vmatprep.subr.mxu0 0.0
      %1937 = vmatpush1.msra.mxu0 0.0
      %1938 = vmatprep.subr.mxu0 0.0
      %1939 = vmatpush1.msra.mxu0 0.0
      %1940 = vmatprep.subr.mxu0 0.0
      %1941 = vmatpush1.msra.mxu0 0.0
      %1942 = vmatprep.subr.mxu0 0.0
      %1943 = vmatpush1.msra.mxu0 0.0
      %1944 = vmatprep.subr.mxu0 0.0
      %1945 = vmatpush1.msra.mxu0 0.0
      %1946 = vmatprep.subr.mxu0 0.0
      %1947 = vmatpush1.msra.mxu0 0.0
      %1948 = vmatprep.subr.mxu0 0.0
      %1949 = vmatpush1.msra.mxu0 0.0
      %1950 = vmatprep.subr.mxu0 0.0
      %1951 = vmatpush1.msra.mxu0 0.0
      %1952 = vmatprep.subr.mxu0 0.0
      %1953 = vmatpush1.msra.mxu0 0.0
      %1954 = vmatprep.subr.mxu0 0.0
      %1955 = vmatpush1.msra.mxu0 0.0
      %1956 = vmatprep.subr.mxu0 0.0
      %1957 = vmatpush1.msra.mxu0 0.0
      %1958 = vmatprep.subr.mxu0 0.0
      %1959 = vmatpush1.msra.mxu0 0.0
      %1960 = vmatprep.subr.mxu0 0.0
      %1961 = vmatpush1.msra.mxu0 0.0
      %1962 = vmatprep.subr.mxu0 0.0
      %1963 = vmatpush1.msra.mxu0 0.0
      %1964 = vmatprep.subr.mxu0 0.0
      %1965 = vmatpush1.msra.mxu0 0.0
      %1966 = vmatprep.subr.mxu0 0.0
      %1967 = vmatpush1.msra.mxu0 0.0
      %1968 = vmatprep.subr.mxu0 0.0
      %1969 = vmatpush1.msra.mxu0 0.0
      %1970 = vmatprep.subr.mxu0 0.0
      %1971 = vmatpush1.msra.mxu0 0.0
      %1972 = vmatprep.subr.mxu0 0.0
      %1973 = vmatpush1.msra.mxu0 0.0
      %1974 = vmatprep.subr.mxu0 0.0
      %1975 = vmatpush1.msra.mxu0 0.0
      %1976 = vmatprep.mubr.f32.mxu0 0.0
      %1977 = vmatmul.mubr.f32.gmra.mrb[0].mxu0 %v1904
      %v1978 = vpop.f32.mrb[0].mxu0
      %v1979 = vadd.f32 0.0, %v1978
      %v1980 = vpop.f32.mrb[0].mxu0
      %v1981 = vadd.f32 0.0, %v1980
      %1982 = vdwg.mxu0
      %v1983 = vadd.f32 %v1889, %v1979
      %v1984 = vadd.f32 %v1890, %v1981
      %v1985 = vld [vmem:[%s6] sm:$0xf]
      %1987 = vset.pattern.permute.xlu0 0
      %1988 = vperm.xlu0 %1987, %v1985
      %v1989 = vpop.permute.xlu0 %1988
      %v1991 = vadd.f32 %v1983, %v1989
      %v1992 = vadd.f32 %v1984, %v1989
      %v1994 = vadd.f32 %v1991, %v280
      %v1995 = vadd.f32 %v1992, %v290
      %v1998 = vcombine.low %v1994, %v1995
      %2000 = vst [vmem:[%s278] sm:$0xff] %v1998
      %p2001 = scmp.lt.s32.totalorder %s18, 1
      %s2002 = scalar_select %p2001, %s18, 1
      %s2003 = smul.addr %s2002, 2
      %s2004 = smul.addr %s2003, 4
      %s2005 = scalar_lea.vmem %s7, %s2004
      // Predicated region
      $region49: #{res_block.3} parent=47 // pred_check
        %p2006 = pneg %p188
      $region50: #{res_block.3} parent=47 // pred_check_branch
        %2008 = sbr.rel (%p2006) target = $region52
      $region51: #{res_block.3} parent=47 // pred_region
        _
      $region52: #{res_block.3} parent=47 // pred_fallthru
        _
    $region48: #{res_block.3} parent=5 // pred_fallthru
      _
    %p2009 = scmp.le.s32.totalorder 2, %s13
    // Predicated region
    $region53: #{res_block.3} parent=5 // pred_check
      %p2010 = pneg %p2009
    $region54: #{res_block.3} parent=5 // pred_check_branch
      %2012 = sbr.rel (%p2010) target = $region56
    $region55: #{res_block.3} parent=5 // pred_region
      %s2013 = ssub.s32 %s13, 2
      // Predicated region
      $region57: #{res_block.3} parent=55 // pred_check
        %p2014 = pneg %p194
      $region58: #{res_block.3} parent=55 // pred_check_branch
        %2016 = sbr.rel (%p2014) target = $region60
      $region59: #{res_block.3} parent=55 // pred_region
        %p2017 = scmp.lt.s32.totalorder %s19, 1
        %s2018 = scalar_select %p2017, %s19, 1
        %s2019 = smul.addr %s2018, 2
        %s2020 = smul.addr %s2019, 4
        %s2021 = scalar_lea.vmem %s7, %s2020
      $region60: #{res_block.3} parent=55 // pred_fallthru
        _
    $region56: #{res_block.3} parent=5 // pred_fallthru
      _
  $region6: #{res_block.3} parent=0 // loop_footer
    %s17 = sadd.s32 1, %s13
  $region7: #{res_block.3} parent=0 // loop_footer_branch
    %12 = sbr.rel target = $region3
  $region8: #{res_block.3} parent=0 // loop_exit
    _

</llo_original>
